<compile_context>
chip_gen: v5e
topology: v5e:2x2
jax: 0.10.0
libtpu: 0.0.40
codegen_flags: <defaults>
</compile_context>

<pallas_src>
import jax
import jax.numpy as jnp
from jax import lax
from jax.experimental import pallas as pl
from jax.experimental.pallas import tpu as pltpu

EPS = 1e-5
_VMEM_LIMIT = 32 * 1024 * 1024


def _cparams(*sem):
    return pltpu.CompilerParams(dimension_semantics=sem,
                                vmem_limit_bytes=_VMEM_LIMIT)


def _row_tile(m, target=1024):
    """Largest sublane-aligned divisor of m that is <= target. Never returns a
    whole-array block when m > target (falls back to 8)."""
    assert m % 8 == 0, "N*H*W must be a multiple of 8"
    for d in range(min(m, target), 7, -1):
        if m % d == 0 and d % 8 == 0:
            return d
    return 8


def _batch_tile(n, hw, target_rows=2048):
    """Images per grid step for the 3x3-conv pass (~target_rows rows/step)."""
    cap = max(1, target_rows // hw)
    for d in range(min(n, cap), 0, -1):
        if n % d == 0:
            return d
    return 1


# ---- pass 1 (first block only): per-channel partial sum / sumsq of x -------
def _colstats_kernel(x_ref, s_ref, q_ref):
    x = x_ref[...]
    s_ref[...] = jnp.sum(x, axis=0, keepdims=True).reshape(1, 1, -1)
    q_ref[...] = jnp.sum(x * x, axis=0, keepdims=True).reshape(1, 1, -1)


# ---- pass 2: BN1 + ReLU -> 1x1 conv (MXU), fused partial stats of h1 -------
def _stage1_kernel(x_ref, a1_ref, c1_ref, w1_ref, h1_ref, s_ref, q_ref):
    xh = jnp.maximum(x_ref[...] * a1_ref[...] + c1_ref[...], 0.0)      # f32 BN math
    h = jnp.dot(xh.astype(jnp.bfloat16), w1_ref[...],
                preferred_element_type=jnp.float32)                     # bf16 MXU, f32 acc
    h1_ref[...] = h.astype(h1_ref.dtype)                                # bf16 intermediate
    s_ref[...] = jnp.sum(h, axis=0, keepdims=True).reshape(1, 1, -1)    # stats from f32 acc
    q_ref[...] = jnp.sum(h * h, axis=0, keepdims=True).reshape(1, 1, -1)


# ---- pass 3: BN2 + ReLU -> 3x3 conv as ONE K=9P im2col matmul --------------
def _conv3x3_kernel(h1_ref, a2_ref, c2_ref, w2_ref, h3_ref, s_ref, q_ref,
                    pad_ref, col_ref):
    nb, hh, ww, p = h1_ref.shape

    # Zero the 1-pixel border every step: the grid axis is 'parallel' and the
    # scratch is per-core, so a one-time program_id==0 init would be unsafe.
    pad_ref[:, 0:1, :, :] = jnp.zeros((nb, 1, ww + 2, p), pad_ref.dtype)
    pad_ref[:, hh + 1:hh + 2, :, :] = jnp.zeros((nb, 1, ww + 2, p), pad_ref.dtype)
    pad_ref[:, :, 0:1, :] = jnp.zeros((nb, hh + 2, 1, p), pad_ref.dtype)
    pad_ref[:, :, ww + 1:ww + 2, :] = jnp.zeros((nb, hh + 2, 1, p), pad_ref.dtype)

    a2 = a2_ref[...].reshape(1, 1, 1, p)
    c2 = c2_ref[...].reshape(1, 1, 1, p)
    h2 = jnp.maximum(h1_ref[...].astype(jnp.float32) * a2 + c2, 0.0)    # f32 BN math
    pad_ref[:, 1:hh + 1, 1:ww + 1, :] = h2.astype(pad_ref.dtype)        # bf16 padded image

    m = nb * hh * ww
    for k in range(9):                                                   # build im2col in VMEM
        dy, dx = k // 3, k % 3
        col_ref[:, k * p:(k + 1) * p] = (
            pad_ref[:, dy:dy + hh, dx:dx + ww, :].reshape(m, p))
    acc = jnp.dot(col_ref[...], w2_ref[...],
                  preferred_element_type=jnp.float32)                    # one K=9P MXU matmul
    h3_ref[...] = acc.astype(h3_ref.dtype)                               # bf16 intermediate
    s_ref[...] = jnp.sum(acc, axis=0, keepdims=True).reshape(1, 1, -1)
    q_ref[...] = jnp.sum(acc * acc, axis=0, keepdims=True).reshape(1, 1, -1)


# ---- pass 4: BN3 + ReLU -> 1x1 conv + residual, fused stats of OUTPUT ------
def _stage3_kernel(h3_ref, a3_ref, c3_ref, w3_ref, res_ref, out_ref, s_ref, q_ref):
    h = jnp.maximum(h3_ref[...].astype(jnp.float32) * a3_ref[...] + c3_ref[...], 0.0)
    out = jnp.dot(h.astype(jnp.bfloat16), w3_ref[...],
                  preferred_element_type=jnp.float32) + res_ref[...]
    out_ref[...] = out.astype(out_ref.dtype)
    # Stats of this block's output == next block's BN1 input stats (skips its pass 1).
    s_ref[...] = jnp.sum(out, axis=0, keepdims=True).reshape(1, 1, -1)
    q_ref[...] = jnp.sum(out * out, axis=0, keepdims=True).reshape(1, 1, -1)


def _affine(s, q, g, b, m):
    """Fold train-mode BN (biased variance) into per-channel a*x + c, in f32."""
    mu = s / m
    var = jnp.maximum(q / m - mu * mu, 0.0)
    a = g.reshape(1, -1).astype(jnp.float32) * lax.rsqrt(var + EPS)
    c = b.reshape(1, -1).astype(jnp.float32) - mu * a
    return a, c


def preact_bottleneck_cifar(x_nhwc, params, x_stats=None):
    """PreActBottleneck_cifar forward (stride=1, downsample=None), channels-last.

    x_nhwc : (N, H, W, Cin) float32
    x_stats: optional (sum, sumsq), each (1, Cin) f32 — the fused stats emitted
             by the previous block's pass 4 (skips the stats-only pass 1).
    Returns (out_nhwc (N, H, W, Cout) float32, (sum_out, sumsq_out)).
    """
    g1, b1, w1 = params["g1"], params["b1"], params["w1"]
    g2, b2, w2 = params["g2"], params["b2"], params["w2"]
    g3, b3, w3 = params["g3"], params["b3"], params["w3"]

    N, H, W, Cin = x_nhwc.shape
    P = w1.shape[0]                    # planes (w1: (P, Cin, 1, 1) OIHW)
    Cout = 4 * P                       # expansion = 4
    assert Cin == Cout, "downsample=None requires inplanes == planes * 4"
    M = N * H * W

    x2d = x_nhwc.reshape(M, Cin).astype(jnp.float32)   # free view (channels-last)

    # Weight re-layout (glue): channels-last matmul operands, bf16 for the MXU.
    w1m = jnp.transpose(w1[:, :, 0, 0]).astype(jnp.bfloat16)                       # (Cin, P)
    w2m = jnp.transpose(w2, (2, 3, 1, 0)).reshape(9 * P, P).astype(jnp.bfloat16)   # (9P, P); row = (dy*3+dx)*P + ci
    w3m = jnp.transpose(w3[:, :, 0, 0]).astype(jnp.bfloat16)                       # (P, Cout)

    TM = _row_tile(M)
    G = M // TM
    NB = _batch_tile(N, H * W)
    GN = N // NB

    # ---- pass 1: global per-channel stats of x (only if not fused from prev block) ----
    if x_stats is None:
        s1p, q1p = pl.pallas_call(
            _colstats_kernel,
            grid=(G,),
            in_specs=[pl.BlockSpec((TM, Cin), lambda i: (i, 0))],
            out_specs=[pl.BlockSpec((1, 1, Cin), lambda i: (i, 0, 0)),
                       pl.BlockSpec((1, 1, Cin), lambda i: (i, 0, 0))],
            out_shape=[jax.ShapeDtypeStruct((G, 1, Cin), jnp.float32),
                       jax.ShapeDtypeStruct((G, 1, Cin), jnp.float32)],
            compiler_params=_cparams("parallel"),
        )(x2d)
        s1, q1 = s1p.sum(axis=0), q1p.sum(axis=0)
    else:
        s1, q1 = x_stats
    a1, c1 = _affine(s1, q1, g1, b1, M)

    # ---- pass 2: BN1 + ReLU + conv1 (1x1), fused partial stats of h1 ----
    h1, s2p, q2p = pl.pallas_call(
        _stage1_kernel,
        grid=(G,),
        in_specs=[pl.BlockSpec((TM, Cin), lambda i: (i, 0)),
                  pl.BlockSpec((1, Cin), lambda i: (0, 0)),
                  pl.BlockSpec((1, Cin), lambda i: (0, 0)),
                  pl.BlockSpec((Cin, P), lambda i: (0, 0))],
        out_specs=[pl.BlockSpec((TM, P), lambda i: (i, 0)),
                   pl.BlockSpec((1, 1, P), lambda i: (i, 0, 0)),
                   pl.BlockSpec((1, 1, P), lambda i: (i, 0, 0))],
        out_shape=[jax.ShapeDtypeStruct((M, P), jnp.bfloat16),
                   jax.ShapeDtypeStruct((G, 1, P), jnp.float32),
                   jax.ShapeDtypeStruct((G, 1, P), jnp.float32)],
        compiler_params=_cparams("parallel"),
    )(x2d, a1, c1, w1m)
    a2, c2 = _affine(s2p.sum(axis=0), q2p.sum(axis=0), g2, b2, M)

    # ---- pass 3: BN2 + ReLU + 3x3 conv via in-VMEM im2col, one K=9P matmul ----
    h1_4d = h1.reshape(N, H, W, P)   # free re-view of the same HBM bytes
    h3, s3p, q3p = pl.pallas_call(
        _conv3x3_kernel,
        grid=(GN,),
        in_specs=[pl.BlockSpec((NB, H, W, P), lambda n: (n, 0, 0, 0)),
                  pl.BlockSpec((1, P), lambda n: (0, 0)),
                  pl.BlockSpec((1, P), lambda n: (0, 0)),
                  pl.BlockSpec((9 * P, P), lambda n: (0, 0))],
        out_specs=[pl.BlockSpec((NB * H * W, P), lambda n: (n, 0)),
                   pl.BlockSpec((1, 1, P), lambda n: (n, 0, 0)),
                   pl.BlockSpec((1, 1, P), lambda n: (n, 0, 0))],
        out_shape=[jax.ShapeDtypeStruct((M, P), jnp.bfloat16),
                   jax.ShapeDtypeStruct((GN, 1, P), jnp.float32),
                   jax.ShapeDtypeStruct((GN, 1, P), jnp.float32)],
        scratch_shapes=[pltpu.VMEM((NB, H + 2, W + 2, P), jnp.bfloat16),
                        pltpu.VMEM((NB * H * W, 9 * P), jnp.bfloat16)],
        compiler_params=_cparams("parallel"),
    )(h1_4d, a2, c2, w2m)
    a3, c3 = _affine(s3p.sum(axis=0), q3p.sum(axis=0), g3, b3, M)

    # ---- pass 4: BN3 + ReLU + conv3 (1x1) + residual, fused stats of output ----
    out2d, sop, qop = pl.pallas_call(
        _stage3_kernel,
        grid=(G,),
        in_specs=[pl.BlockSpec((TM, P), lambda i: (i, 0)),
                  pl.BlockSpec((1, P), lambda i: (0, 0)),
                  pl.BlockSpec((1, P), lambda i: (0, 0)),
                  pl.BlockSpec((P, Cout), lambda i: (0, 0)),
                  pl.BlockSpec((TM, Cout), lambda i: (i, 0))],
        out_specs=[pl.BlockSpec((TM, Cout), lambda i: (i, 0)),
                   pl.BlockSpec((1, 1, Cout), lambda i: (i, 0, 0)),
                   pl.BlockSpec((1, 1, Cout), lambda i: (i, 0, 0))],
        out_shape=[jax.ShapeDtypeStruct((M, Cout), jnp.float32),
                   jax.ShapeDtypeStruct((G, 1, Cout), jnp.float32),
                   jax.ShapeDtypeStruct((G, 1, Cout), jnp.float32)],
        compiler_params=_cparams("parallel"),
    )(h3, a3, c3, w3m, x2d)

    out_stats = (sop.sum(axis=0), qop.sum(axis=0))
    return out2d.reshape(N, H, W, Cout), out_stats


def block_stack(x_nhwc, blocks_params):
    """A sequence of stride-1 bottleneck blocks; pass-4 stats feed the next
    block's BN1, so the stats-only pass runs exactly once."""
    h, stats = x_nhwc, None
    for p in blocks_params:
        h, stats = preact_bottleneck_cifar(h, p, x_stats=stats)
    return h


# ----------------------- pure-JAX reference (NCHW) --------------------------
def _bn_train(x, g, b):
    mu = jnp.mean(x, axis=(0, 2, 3), keepdims=True)
    var = jnp.mean((x - mu) ** 2, axis=(0, 2, 3), keepdims=True)
    return (x - mu) / jnp.sqrt(var + EPS) * g.reshape(1, -1, 1, 1) + b.reshape(1, -1, 1, 1)


def reference_block(x, p):
    h = jax.nn.relu(_bn_train(x, p["g1"], p["b1"]))
    h = lax.conv_general_dilated(h, p["w1"], (1, 1), "VALID")
    h = jax.nn.relu(_bn_train(h, p["g2"], p["b2"]))
    h = lax.conv_general_dilated(h, p["w2"], (1, 1), ((1, 1), (1, 1)))
    h = jax.nn.relu(_bn_train(h, p["g3"], p["b3"]))
    h = lax.conv_general_dilated(h, p["w3"], (1, 1), "VALID")
    return h + x


def _make_block_params(key, inplanes, planes):
    ks = jax.random.split(key, 9)
    return {
        "g1": 1.0 + 0.1 * jax.random.normal(ks[0], (inplanes,), jnp.float32),
        "b1": 0.1 * jax.random.normal(ks[1], (inplanes,), jnp.float32),
        "w1": 0.1 * jax.random.normal(ks[2], (planes, inplanes, 1, 1), jnp.float32),
        "g2": 1.0 + 0.1 * jax.random.normal(ks[3], (planes,), jnp.float32),
        "b2": 0.1 * jax.random.normal(ks[4], (planes,), jnp.float32),
        "w2": 0.1 * jax.random.normal(ks[5], (planes, planes, 3, 3), jnp.float32),
        "g3": 1.0 + 0.1 * jax.random.normal(ks[6], (planes,), jnp.float32),
        "b3": 0.1 * jax.random.normal(ks[7], (planes,), jnp.float32),
        "w3": 0.1 * jax.random.normal(ks[8], (planes * 4, planes, 1, 1), jnp.float32),
    }


if __name__ == "__main__":
    N, H, W = 2, 8, 8
    planes = 16
    inplanes = planes * 4            # downsample=None => residual must match

    key = jax.random.PRNGKey(0)
    k0, k1, kx = jax.random.split(key, 3)
    params = [_make_block_params(k0, inplanes, planes),
              _make_block_params(k1, inplanes, planes)]
    x_nchw = jax.random.normal(kx, (N, inplanes, H, W), jnp.float32)

    # Model-boundary layout change only: block kernels run channels-last.
    x_nhwc = jnp.transpose(x_nchw, (0, 2, 3, 1))

    fwd = jax.jit(lambda xx: block_stack(xx, params))
    out_nhwc = jax.block_until_ready(fwd(x_nhwc))
    out = jnp.transpose(out_nhwc, (0, 3, 1, 2))

    ref = jax.block_until_ready(
        reference_block(reference_block(x_nchw, params[0]), params[1]))

    assert out.shape == ref.shape == (N, inplanes, H, W)
    # bf16 MXU operands + bf16 h1/h3 intermediates (f32 accumulation / BN math)
    # over two chained blocks => slightly loose tolerance.
    err = jnp.max(jnp.abs(out - ref))
    if not jnp.allclose(out, ref, atol=5e-2, rtol=5e-2):
        raise AssertionError(f"mismatch vs reference: max abs err = {err}")
    print("KERNEL_OK")
</pallas_src>

<mosaic_0001>
module attributes {stable_mosaic.version = 11 : i64} {
  func.func @_stage1_kernel(%arg0: i32, %arg1: memref<128x64xf32, #tpu.memory_space<vmem>>, %arg2: memref<1x64xf32, #tpu.memory_space<vmem>>, %arg3: memref<1x64xf32, #tpu.memory_space<vmem>>, %arg4: memref<64x16xbf16, #tpu.memory_space<vmem>>, %arg5: memref<128x16xbf16, #tpu.memory_space<vmem>>, %arg6: memref<1x1x16xf32, #tpu.memory_space<vmem>>, %arg7: memref<1x1x16xf32, #tpu.memory_space<vmem>>) attributes {dimension_semantics = [#tpu.dimension_semantics<parallel>], iteration_bounds = array<i64: 1>, scalar_prefetch = 0 : i64, scratch_operands = 0 : i64, tpu.core_type = #tpu.core_type<tc>, window_params = [{transform_indices = @transform_0, window_bounds = array<i64: 128, 64>}, {pipeline_mode = #tpu.pipeline_mode<synchronous>, transform_indices = @transform_1, window_bounds = array<i64: 1, 64>}, {pipeline_mode = #tpu.pipeline_mode<synchronous>, transform_indices = @transform_2, window_bounds = array<i64: 1, 64>}, {pipeline_mode = #tpu.pipeline_mode<synchronous>, transform_indices = @transform_3, window_bounds = array<i64: 64, 16>}, {transform_indices = @transform_4, window_bounds = array<i64: 128, 16>}, {transform_indices = @transform_5, window_bounds = array<i64: 1, 1, 16>}, {transform_indices = @transform_6, window_bounds = array<i64: 1, 1, 16>}]} {
    %c0 = arith.constant 0 : index
    %c0_0 = arith.constant 0 : index
    %0 = vector.load %arg1[%c0, %c0_0] : memref<128x64xf32, #tpu.memory_space<vmem>>, vector<128x64xf32>
    %c0_1 = arith.constant 0 : index
    %c0_2 = arith.constant 0 : index
    %1 = vector.load %arg2[%c0_1, %c0_2] : memref<1x64xf32, #tpu.memory_space<vmem>>, vector<1x64xf32>
    %2 = vector.broadcast %1 : vector<1x64xf32> to vector<128x64xf32>
    %3 = arith.mulf %0, %2 : vector<128x64xf32>
    %c0_3 = arith.constant 0 : index
    %c0_4 = arith.constant 0 : index
    %4 = vector.load %arg3[%c0_3, %c0_4] : memref<1x64xf32, #tpu.memory_space<vmem>>, vector<1x64xf32>
    %5 = vector.broadcast %4 : vector<1x64xf32> to vector<128x64xf32>
    %6 = arith.addf %3, %5 : vector<128x64xf32>
    %cst = arith.constant 0.000000e+00 : f32
    %7 = vector.broadcast %cst : f32 to vector<128x64xf32>
    %8 = arith.maximumf %6, %7 : vector<128x64xf32>
    %9 = arith.truncf %8 : vector<128x64xf32> to vector<128x64xbf16>
    %c0_5 = arith.constant 0 : index
    %c0_6 = arith.constant 0 : index
    %10 = vector.load %arg4[%c0_5, %c0_6] : memref<64x16xbf16, #tpu.memory_space<vmem>>, vector<64x16xbf16>
    %cst_7 = arith.constant dense<0.000000e+00> : vector<128x16xf32>
    %11 = tpu.matmul %9, %10, %cst_7 {dimension_numbers = #tpu.dot_dimension_numbers<[1], [0], [0], [1], [0, 0, 1, 1], [], []>} : vector<128x64xbf16>, vector<64x16xbf16>, vector<128x16xf32> -> vector<128x16xf32>
    %12 = arith.truncf %11 : vector<128x16xf32> to vector<128x16xbf16>
    %c0_8 = arith.constant 0 : index
    %c0_9 = arith.constant 0 : index
    %13 = vector.load %arg5[%c0_8, %c0_9] : memref<128x16xbf16, #tpu.memory_space<vmem>>, vector<128x16xbf16>
    tpu.vector_store %arg5[%c0_8, %c0_9], %12 {strides = array<i32>} : memref<128x16xbf16, #tpu.memory_space<vmem>>, vector<128x16xbf16>,
    %cst_10 = arith.constant dense<0.000000e+00> : vector<16xf32>
    %14 = vector.multi_reduction <add>, %11, %cst_10 [0] : vector<128x16xf32> to vector<16xf32>
    %15 = vector.shape_cast %14 : vector<16xf32> to vector<1x16xf32>
    %16 = vector.shape_cast %15 : vector<1x16xf32> to vector<1x1x16xf32>
    %c0_11 = arith.constant 0 : index
    %c0_12 = arith.constant 0 : index
    %c0_13 = arith.constant 0 : index
    %17 = vector.load %arg6[%c0_11, %c0_12, %c0_13] : memref<1x1x16xf32, #tpu.memory_space<vmem>>, vector<1x1x16xf32>
    tpu.vector_store %arg6[%c0_11, %c0_12, %c0_13], %16 {strides = array<i32>} : memref<1x1x16xf32, #tpu.memory_space<vmem>>, vector<1x1x16xf32>,
    %18 = arith.mulf %11, %11 : vector<128x16xf32>
    %cst_14 = arith.constant dense<0.000000e+00> : vector<16xf32>
    %19 = vector.multi_reduction <add>, %18, %cst_14 [0] : vector<128x16xf32> to vector<16xf32>
    %20 = vector.shape_cast %19 : vector<16xf32> to vector<1x16xf32>
    %21 = vector.shape_cast %20 : vector<1x16xf32> to vector<1x1x16xf32>
    %c0_15 = arith.constant 0 : index
    %c0_16 = arith.constant 0 : index
    %c0_17 = arith.constant 0 : index
    %22 = vector.load %arg7[%c0_15, %c0_16, %c0_17] : memref<1x1x16xf32, #tpu.memory_space<vmem>>, vector<1x1x16xf32>
    tpu.vector_store %arg7[%c0_15, %c0_16, %c0_17], %21 {strides = array<i32>} : memref<1x1x16xf32, #tpu.memory_space<vmem>>, vector<1x1x16xf32>,
    return
  }
  func.func @transform_0(%arg0: i32) -> (i32, i32) {
    %c0_i32 = arith.constant 0 : i32
    %c0_i32_0 = arith.constant 0 : i32
    return %arg0, %c0_i32 : i32, i32
  }
  func.func @transform_1(%arg0: i32) -> (i32, i32) {
    %c0_i32 = arith.constant 0 : i32
    %c0_i32_0 = arith.constant 0 : i32
    %c0_i32_1 = arith.constant 0 : i32
    return %c0_i32, %c0_i32_0 : i32, i32
  }
  func.func @transform_2(%arg0: i32) -> (i32, i32) {
    %c0_i32 = arith.constant 0 : i32
    %c0_i32_0 = arith.constant 0 : i32
    %c0_i32_1 = arith.constant 0 : i32
    return %c0_i32, %c0_i32_0 : i32, i32
  }
  func.func @transform_3(%arg0: i32) -> (i32, i32) {
    %c0_i32 = arith.constant 0 : i32
    %c0_i32_0 = arith.constant 0 : i32
    %c0_i32_1 = arith.constant 0 : i32
    return %c0_i32, %c0_i32_0 : i32, i32
  }
  func.func @transform_4(%arg0: i32) -> (i32, i32) {
    %c0_i32 = arith.constant 0 : i32
    %c0_i32_0 = arith.constant 0 : i32
    return %arg0, %c0_i32 : i32, i32
  }
  func.func @transform_5(%arg0: i32) -> (i32, i32, i32) {
    %c0_i32 = arith.constant 0 : i32
    %c0_i32_0 = arith.constant 0 : i32
    %c0_i32_1 = arith.constant 0 : i32
    return %arg0, %c0_i32, %c0_i32_0 : i32, i32, i32
  }
  func.func @transform_6(%arg0: i32) -> (i32, i32, i32) {
    %c0_i32 = arith.constant 0 : i32
    %c0_i32_0 = arith.constant 0 : i32
    %c0_i32_1 = arith.constant 0 : i32
    return %arg0, %c0_i32, %c0_i32_0 : i32, i32, i32
  }
}

module attributes {stable_mosaic.version = 11 : i64} {
  func.func @_colstats_kernel(%arg0: i32, %arg1: memref<128x64xf32, #tpu.memory_space<vmem>>, %arg2: memref<1x1x64xf32, #tpu.memory_space<vmem>>, %arg3: memref<1x1x64xf32, #tpu.memory_space<vmem>>) attributes {dimension_semantics = [#tpu.dimension_semantics<parallel>], iteration_bounds = array<i64: 1>, scalar_prefetch = 0 : i64, scratch_operands = 0 : i64, tpu.core_type = #tpu.core_type<tc>, window_params = [{transform_indices = @transform_0, window_bounds = array<i64: 128, 64>}, {transform_indices = @transform_1, window_bounds = array<i64: 1, 1, 64>}, {transform_indices = @transform_2, window_bounds = array<i64: 1, 1, 64>}]} {
    %c0 = arith.constant 0 : index
    %c0_0 = arith.constant 0 : index
    %0 = vector.load %arg1[%c0, %c0_0] : memref<128x64xf32, #tpu.memory_space<vmem>>, vector<128x64xf32>
    %cst = arith.constant dense<0.000000e+00> : vector<64xf32>
    %1 = vector.multi_reduction <add>, %0, %cst [0] : vector<128x64xf32> to vector<64xf32>
    %2 = vector.shape_cast %1 : vector<64xf32> to vector<1x64xf32>
    %3 = vector.shape_cast %2 : vector<1x64xf32> to vector<1x1x64xf32>
    %c0_1 = arith.constant 0 : index
    %c0_2 = arith.constant 0 : index
    %c0_3 = arith.constant 0 : index
    %4 = vector.load %arg2[%c0_1, %c0_2, %c0_3] : memref<1x1x64xf32, #tpu.memory_space<vmem>>, vector<1x1x64xf32>
    tpu.vector_store %arg2[%c0_1, %c0_2, %c0_3], %3 {strides = array<i32>} : memref<1x1x64xf32, #tpu.memory_space<vmem>>, vector<1x1x64xf32>,
    %5 = arith.mulf %0, %0 : vector<128x64xf32>
    %cst_4 = arith.constant dense<0.000000e+00> : vector<64xf32>
    %6 = vector.multi_reduction <add>, %5, %cst_4 [0] : vector<128x64xf32> to vector<64xf32>
    %7 = vector.shape_cast %6 : vector<64xf32> to vector<1x64xf32>
    %8 = vector.shape_cast %7 : vector<1x64xf32> to vector<1x1x64xf32>
    %c0_5 = arith.constant 0 : index
    %c0_6 = arith.constant 0 : index
    %c0_7 = arith.constant 0 : index
    %9 = vector.load %arg3[%c0_5, %c0_6, %c0_7] : memref<1x1x64xf32, #tpu.memory_space<vmem>>, vector<1x1x64xf32>
    tpu.vector_store %arg3[%c0_5, %c0_6, %c0_7], %8 {strides = array<i32>} : memref<1x1x64xf32, #tpu.memory_space<vmem>>, vector<1x1x64xf32>,
    return
  }
  func.func @transform_0(%arg0: i32) -> (i32, i32) {
    %c0_i32 = arith.constant 0 : i32
    %c0_i32_0 = arith.constant 0 : i32
    return %arg0, %c0_i32 : i32, i32
  }
  func.func @transform_1(%arg0: i32) -> (i32, i32, i32) {
    %c0_i32 = arith.constant 0 : i32
    %c0_i32_0 = arith.constant 0 : i32
    %c0_i32_1 = arith.constant 0 : i32
    return %arg0, %c0_i32, %c0_i32_0 : i32, i32, i32
  }
  func.func @transform_2(%arg0: i32) -> (i32, i32, i32) {
    %c0_i32 = arith.constant 0 : i32
    %c0_i32_0 = arith.constant 0 : i32
    %c0_i32_1 = arith.constant 0 : i32
    return %arg0, %c0_i32, %c0_i32_0 : i32, i32, i32
  }
}

module attributes {stable_mosaic.version = 11 : i64} {
  func.func @_conv3x3_kernel(%arg0: i32, %arg1: memref<2x8x8x16xbf16, #tpu.memory_space<vmem>>, %arg2: memref<1x16xf32, #tpu.memory_space<vmem>>, %arg3: memref<1x16xf32, #tpu.memory_space<vmem>>, %arg4: memref<144x16xbf16, #tpu.memory_space<vmem>>, %arg5: memref<128x16xbf16, #tpu.memory_space<vmem>>, %arg6: memref<1x1x16xf32, #tpu.memory_space<vmem>>, %arg7: memref<1x1x16xf32, #tpu.memory_space<vmem>>, %arg8: memref<2x10x10x16xbf16, #tpu.memory_space<vmem>>, %arg9: memref<128x144xbf16, #tpu.memory_space<vmem>>) attributes {dimension_semantics = [#tpu.dimension_semantics<parallel>], iteration_bounds = array<i64: 1>, scalar_prefetch = 0 : i64, scratch_operands = 2 : i64, tpu.core_type = #tpu.core_type<tc>, window_params = [{transform_indices = @transform_0, window_bounds = array<i64: 2, 8, 8, 16>}, {pipeline_mode = #tpu.pipeline_mode<synchronous>, transform_indices = @transform_1, window_bounds = array<i64: 1, 16>}, {pipeline_mode = #tpu.pipeline_mode<synchronous>, transform_indices = @transform_2, window_bounds = array<i64: 1, 16>}, {pipeline_mode = #tpu.pipeline_mode<synchronous>, transform_indices = @transform_3, window_bounds = array<i64: 144, 16>}, {transform_indices = @transform_4, window_bounds = array<i64: 128, 16>}, {transform_indices = @transform_5, window_bounds = array<i64: 1, 1, 16>}, {transform_indices = @transform_6, window_bounds = array<i64: 1, 1, 16>}]} {
    %cst = arith.constant 0.000000e+00 : bf16
    %0 = vector.broadcast %cst : bf16 to vector<2x1x10x16xbf16>
    %c0 = arith.constant 0 : index
    %c0_0 = arith.constant 0 : index
    %c0_1 = arith.constant 0 : index
    %c0_2 = arith.constant 0 : index
    %1 = vector.load %arg8[%c0, %c0_0, %c0_1, %c0_2] : memref<2x10x10x16xbf16, #tpu.memory_space<vmem>>, vector<2x1x10x16xbf16>
    tpu.vector_store %arg8[%c0, %c0_0, %c0_1, %c0_2], %0 {strides = array<i32>} : memref<2x10x10x16xbf16, #tpu.memory_space<vmem>>, vector<2x1x10x16xbf16>,
    %cst_3 = arith.constant 0.000000e+00 : bf16
    %2 = vector.broadcast %cst_3 : bf16 to vector<2x1x10x16xbf16>
    %c0_4 = arith.constant 0 : index
    %c9 = arith.constant 9 : index
    %c0_5 = arith.constant 0 : index
    %c0_6 = arith.constant 0 : index
    %3 = vector.load %arg8[%c0_4, %c9, %c0_5, %c0_6] : memref<2x10x10x16xbf16, #tpu.memory_space<vmem>>, vector<2x1x10x16xbf16>
    tpu.vector_store %arg8[%c0_4, %c9, %c0_5, %c0_6], %2 {strides = array<i32>} : memref<2x10x10x16xbf16, #tpu.memory_space<vmem>>, vector<2x1x10x16xbf16>,
    %cst_7 = arith.constant 0.000000e+00 : bf16
    %4 = vector.broadcast %cst_7 : bf16 to vector<2x10x1x16xbf16>
    %c0_8 = arith.constant 0 : index
    %c0_9 = arith.constant 0 : index
    %c0_10 = arith.constant 0 : index
    %c0_11 = arith.constant 0 : index
    %5 = vector.load %arg8[%c0_8, %c0_9, %c0_10, %c0_11] : memref<2x10x10x16xbf16, #tpu.memory_space<vmem>>, vector<2x10x1x16xbf16>
    tpu.vector_store %arg8[%c0_8, %c0_9, %c0_10, %c0_11], %4 {strides = array<i32>} : memref<2x10x10x16xbf16, #tpu.memory_space<vmem>>, vector<2x10x1x16xbf16>,
    %cst_12 = arith.constant 0.000000e+00 : bf16
    %6 = vector.broadcast %cst_12 : bf16 to vector<2x10x1x16xbf16>
    %c0_13 = arith.constant 0 : index
    %c0_14 = arith.constant 0 : index
    %c9_15 = arith.constant 9 : index
    %c0_16 = arith.constant 0 : index
    %7 = vector.load %arg8[%c0_13, %c0_14, %c9_15, %c0_16] : memref<2x10x10x16xbf16, #tpu.memory_space<vmem>>, vector<2x10x1x16xbf16>
    tpu.vector_store %arg8[%c0_13, %c0_14, %c9_15, %c0_16], %6 {strides = array<i32>} : memref<2x10x10x16xbf16, #tpu.memory_space<vmem>>, vector<2x10x1x16xbf16>,
    %c0_17 = arith.constant 0 : index
    %c0_18 = arith.constant 0 : index
    %8 = vector.load %arg2[%c0_17, %c0_18] : memref<1x16xf32, #tpu.memory_space<vmem>>, vector<1x16xf32>
    %9 = vector.shape_cast %8 : vector<1x16xf32> to vector<1x1x1x16xf32>
    %c0_19 = arith.constant 0 : index
    %c0_20 = arith.constant 0 : index
    %10 = vector.load %arg3[%c0_19, %c0_20] : memref<1x16xf32, #tpu.memory_space<vmem>>, vector<1x16xf32>
    %11 = vector.shape_cast %10 : vector<1x16xf32> to vector<1x1x1x16xf32>
    %c0_21 = arith.constant 0 : index
    %c0_22 = arith.constant 0 : index
    %c0_23 = arith.constant 0 : index
    %c0_24 = arith.constant 0 : index
    %12 = vector.load %arg1[%c0_21, %c0_22, %c0_23, %c0_24] : memref<2x8x8x16xbf16, #tpu.memory_space<vmem>>, vector<2x8x8x16xbf16>
    %13 = arith.extf %12 : vector<2x8x8x16xbf16> to vector<2x8x8x16xf32>
    %14 = vector.broadcast %9 : vector<1x1x1x16xf32> to vector<2x8x8x16xf32>
    %15 = arith.mulf %13, %14 : vector<2x8x8x16xf32>
    %16 = vector.broadcast %11 : vector<1x1x1x16xf32> to vector<2x8x8x16xf32>
    %17 = arith.addf %15, %16 : vector<2x8x8x16xf32>
    %cst_25 = arith.constant 0.000000e+00 : f32
    %18 = vector.broadcast %cst_25 : f32 to vector<2x8x8x16xf32>
    %19 = arith.maximumf %17, %18 : vector<2x8x8x16xf32>
    %20 = arith.truncf %19 : vector<2x8x8x16xf32> to vector<2x8x8x16xbf16>
    %c0_26 = arith.constant 0 : index
    %c1 = arith.constant 1 : index
    %c1_27 = arith.constant 1 : index
    %c0_28 = arith.constant 0 : index
    %21 = vector.load %arg8[%c0_26, %c1, %c1_27, %c0_28] : memref<2x10x10x16xbf16, #tpu.memory_space<vmem>>, vector<2x8x8x16xbf16>
    tpu.vector_store %arg8[%c0_26, %c1, %c1_27, %c0_28], %20 {strides = array<i32>} : memref<2x10x10x16xbf16, #tpu.memory_space<vmem>>, vector<2x8x8x16xbf16>,
    %c0_29 = arith.constant 0 : index
    %c0_30 = arith.constant 0 : index
    %c0_31 = arith.constant 0 : index
    %c0_32 = arith.constant 0 : index
    %22 = vector.load %arg8[%c0_29, %c0_30, %c0_31, %c0_32] : memref<2x10x10x16xbf16, #tpu.memory_space<vmem>>, vector<2x8x8x16xbf16>
    %23 = vector.shape_cast %22 : vector<2x8x8x16xbf16> to vector<128x16xbf16>
    %c0_33 = arith.constant 0 : index
    %c0_34 = arith.constant 0 : index
    %24 = vector.load %arg9[%c0_33, %c0_34] : memref<128x144xbf16, #tpu.memory_space<vmem>>, vector<128x16xbf16>
    tpu.vector_store %arg9[%c0_33, %c0_34], %23 {strides = array<i32>} : memref<128x144xbf16, #tpu.memory_space<vmem>>, vector<128x16xbf16>,
    %c0_35 = arith.constant 0 : index
    %c0_36 = arith.constant 0 : index
    %c1_37 = arith.constant 1 : index
    %c0_38 = arith.constant 0 : index
    %25 = vector.load %arg8[%c0_35, %c0_36, %c1_37, %c0_38] : memref<2x10x10x16xbf16, #tpu.memory_space<vmem>>, vector<2x8x8x16xbf16>
    %26 = vector.shape_cast %25 : vector<2x8x8x16xbf16> to vector<128x16xbf16>
    %c0_39 = arith.constant 0 : index
    %c16 = arith.constant 16 : index
    %27 = vector.load %arg9[%c0_39, %c16] : memref<128x144xbf16, #tpu.memory_space<vmem>>, vector<128x16xbf16>
    tpu.vector_store %arg9[%c0_39, %c16], %26 {strides = array<i32>} : memref<128x144xbf16, #tpu.memory_space<vmem>>, vector<128x16xbf16>,
    %c0_40 = arith.constant 0 : index
    %c0_41 = arith.constant 0 : index
    %c2 = arith.constant 2 : index
    %c0_42 = arith.constant 0 : index
    %28 = vector.load %arg8[%c0_40, %c0_41, %c2, %c0_42] : memref<2x10x10x16xbf16, #tpu.memory_space<vmem>>, vector<2x8x8x16xbf16>
    %29 = vector.shape_cast %28 : vector<2x8x8x16xbf16> to vector<128x16xbf16>
    %c0_43 = arith.constant 0 : index
    %c32 = arith.constant 32 : index
    %30 = vector.load %arg9[%c0_43, %c32] : memref<128x144xbf16, #tpu.memory_space<vmem>>, vector<128x16xbf16>
    tpu.vector_store %arg9[%c0_43, %c32], %29 {strides = array<i32>} : memref<128x144xbf16, #tpu.memory_space<vmem>>, vector<128x16xbf16>,
    %c0_44 = arith.constant 0 : index
    %c1_45 = arith.constant 1 : index
    %c0_46 = arith.constant 0 : index
    %c0_47 = arith.constant 0 : index
    %31 = vector.load %arg8[%c0_44, %c1_45, %c0_46, %c0_47] : memref<2x10x10x16xbf16, #tpu.memory_space<vmem>>, vector<2x8x8x16xbf16>
    %32 = vector.shape_cast %31 : vector<2x8x8x16xbf16> to vector<128x16xbf16>
    %c0_48 = arith.constant 0 : index
    %c48 = arith.constant 48 : index
    %33 = vector.load %arg9[%c0_48, %c48] : memref<128x144xbf16, #tpu.memory_space<vmem>>, vector<128x16xbf16>
    tpu.vector_store %arg9[%c0_48, %c48], %32 {strides = array<i32>} : memref<128x144xbf16, #tpu.memory_space<vmem>>, vector<128x16xbf16>,
    %c0_49 = arith.constant 0 : index
    %c1_50 = arith.constant 1 : index
    %c1_51 = arith.constant 1 : index
    %c0_52 = arith.constant 0 : index
    %34 = vector.load %arg8[%c0_49, %c1_50, %c1_51, %c0_52] : memref<2x10x10x16xbf16, #tpu.memory_space<vmem>>, vector<2x8x8x16xbf16>
    %35 = vector.shape_cast %34 : vector<2x8x8x16xbf16> to vector<128x16xbf16>
    %c0_53 = arith.constant 0 : index
    %c64 = arith.constant 64 : index
    %36 = vector.load %arg9[%c0_53, %c64] : memref<128x144xbf16, #tpu.memory_space<vmem>>, vector<128x16xbf16>
    tpu.vector_store %arg9[%c0_53, %c64], %35 {strides = array<i32>} : memref<128x144xbf16, #tpu.memory_space<vmem>>, vector<128x16xbf16>,
    %c0_54 = arith.constant 0 : index
    %c1_55 = arith.constant 1 : index
    %c2_56 = arith.constant 2 : index
    %c0_57 = arith.constant 0 : index
    %37 = vector.load %arg8[%c0_54, %c1_55, %c2_56, %c0_57] : memref<2x10x10x16xbf16, #tpu.memory_space<vmem>>, vector<2x8x8x16xbf16>
    %38 = vector.shape_cast %37 : vector<2x8x8x16xbf16> to vector<128x16xbf16>
    %c0_58 = arith.constant 0 : index
    %c80 = arith.constant 80 : index
    %39 = vector.load %arg9[%c0_58, %c80] : memref<128x144xbf16, #tpu.memory_space<vmem>>, vector<128x16xbf16>
    tpu.vector_store %arg9[%c0_58, %c80], %38 {strides = array<i32>} : memref<128x144xbf16, #tpu.memory_space<vmem>>, vector<128x16xbf16>,
    %c0_59 = arith.constant 0 : index
    %c2_60 = arith.constant 2 : index
    %c0_61 = arith.constant 0 : index
    %c0_62 = arith.constant 0 : index
    %40 = vector.load %arg8[%c0_59, %c2_60, %c0_61, %c0_62] : memref<2x10x10x16xbf16, #tpu.memory_space<vmem>>, vector<2x8x8x16xbf16>
    %41 = vector.shape_cast %40 : vector<2x8x8x16xbf16> to vector<128x16xbf16>
    %c0_63 = arith.constant 0 : index
    %c96 = arith.constant 96 : index
    %42 = vector.load %arg9[%c0_63, %c96] : memref<128x144xbf16, #tpu.memory_space<vmem>>, vector<128x16xbf16>
    tpu.vector_store %arg9[%c0_63, %c96], %41 {strides = array<i32>} : memref<128x144xbf16, #tpu.memory_space<vmem>>, vector<128x16xbf16>,
    %c0_64 = arith.constant 0 : index
    %c2_65 = arith.constant 2 : index
    %c1_66 = arith.constant 1 : index
    %c0_67 = arith.constant 0 : index
    %43 = vector.load %arg8[%c0_64, %c2_65, %c1_66, %c0_67] : memref<2x10x10x16xbf16, #tpu.memory_space<vmem>>, vector<2x8x8x16xbf16>
    %44 = vector.shape_cast %43 : vector<2x8x8x16xbf16> to vector<128x16xbf16>
    %c0_68 = arith.constant 0 : index
    %c112 = arith.constant 112 : index
    %45 = vector.load %arg9[%c0_68, %c112] : memref<128x144xbf16, #tpu.memory_space<vmem>>, vector<128x16xbf16>
    tpu.vector_store %arg9[%c0_68, %c112], %44 {strides = array<i32>} : memref<128x144xbf16, #tpu.memory_space<vmem>>, vector<128x16xbf16>,
    %c0_69 = arith.constant 0 : index
    %c2_70 = arith.constant 2 : index
    %c2_71 = arith.constant 2 : index
    %c0_72 = arith.constant 0 : index
    %46 = vector.load %arg8[%c0_69, %c2_70, %c2_71, %c0_72] : memref<2x10x10x16xbf16, #tpu.memory_space<vmem>>, vector<2x8x8x16xbf16>
    %47 = vector.shape_cast %46 : vector<2x8x8x16xbf16> to vector<128x16xbf16>
    %c0_73 = arith.constant 0 : index
    %c128 = arith.constant 128 : index
    %48 = vector.load %arg9[%c0_73, %c128] : memref<128x144xbf16, #tpu.memory_space<vmem>>, vector<128x16xbf16>
    tpu.vector_store %arg9[%c0_73, %c128], %47 {strides = array<i32>} : memref<128x144xbf16, #tpu.memory_space<vmem>>, vector<128x16xbf16>,
    %c0_74 = arith.constant 0 : index
    %c0_75 = arith.constant 0 : index
    %49 = vector.load %arg9[%c0_74, %c0_75] : memref<128x144xbf16, #tpu.memory_space<vmem>>, vector<128x144xbf16>
    %c0_76 = arith.constant 0 : index
    %c0_77 = arith.constant 0 : index
    %50 = vector.load %arg4[%c0_76, %c0_77] : memref<144x16xbf16, #tpu.memory_space<vmem>>, vector<144x16xbf16>
    %cst_78 = arith.constant dense<0.000000e+00> : vector<128x16xf32>
    %51 = tpu.matmul %49, %50, %cst_78 {dimension_numbers = #tpu.dot_dimension_numbers<[1], [0], [0], [1], [0, 0, 1, 1], [], []>} : vector<128x144xbf16>, vector<144x16xbf16>, vector<128x16xf32> -> vector<128x16xf32>
    %52 = arith.truncf %51 : vector<128x16xf32> to vector<128x16xbf16>
    %c0_79 = arith.constant 0 : index
    %c0_80 = arith.constant 0 : index
    %53 = vector.load %arg5[%c0_79, %c0_80] : memref<128x16xbf16, #tpu.memory_space<vmem>>, vector<128x16xbf16>
    tpu.vector_store %arg5[%c0_79, %c0_80], %52 {strides = array<i32>} : memref<128x16xbf16, #tpu.memory_space<vmem>>, vector<128x16xbf16>,
    %cst_81 = arith.constant dense<0.000000e+00> : vector<16xf32>
    %54 = vector.multi_reduction <add>, %51, %cst_81 [0] : vector<128x16xf32> to vector<16xf32>
    %55 = vector.shape_cast %54 : vector<16xf32> to vector<1x16xf32>
    %56 = vector.shape_cast %55 : vector<1x16xf32> to vector<1x1x16xf32>
    %c0_82 = arith.constant 0 : index
    %c0_83 = arith.constant 0 : index
    %c0_84 = arith.constant 0 : index
    %57 = vector.load %arg6[%c0_82, %c0_83, %c0_84] : memref<1x1x16xf32, #tpu.memory_space<vmem>>, vector<1x1x16xf32>
    tpu.vector_store %arg6[%c0_82, %c0_83, %c0_84], %56 {strides = array<i32>} : memref<1x1x16xf32, #tpu.memory_space<vmem>>, vector<1x1x16xf32>,
    %58 = arith.mulf %51, %51 : vector<128x16xf32>
    %cst_85 = arith.constant dense<0.000000e+00> : vector<16xf32>
    %59 = vector.multi_reduction <add>, %58, %cst_85 [0] : vector<128x16xf32> to vector<16xf32>
    %60 = vector.shape_cast %59 : vector<16xf32> to vector<1x16xf32>
    %61 = vector.shape_cast %60 : vector<1x16xf32> to vector<1x1x16xf32>
    %c0_86 = arith.constant 0 : index
    %c0_87 = arith.constant 0 : index
    %c0_88 = arith.constant 0 : index
    %62 = vector.load %arg7[%c0_86, %c0_87, %c0_88] : memref<1x1x16xf32, #tpu.memory_space<vmem>>, vector<1x1x16xf32>
    tpu.vector_store %arg7[%c0_86, %c0_87, %c0_88], %61 {strides = array<i32>} : memref<1x1x16xf32, #tpu.memory_space<vmem>>, vector<1x1x16xf32>,
    return
  }
  func.func @transform_0(%arg0: i32) -> (i32, i32, i32, i32) {
    %c0_i32 = arith.constant 0 : i32
    %c0_i32_0 = arith.constant 0 : i32
    %c0_i32_1 = arith.constant 0 : i32
    %c0_i32_2 = arith.constant 0 : i32
    return %arg0, %c0_i32, %c0_i32_0, %c0_i32_1 : i32, i32, i32, i32
  }
  func.func @transform_1(%arg0: i32) -> (i32, i32) {
    %c0_i32 = arith.constant 0 : i32
    %c0_i32_0 = arith.constant 0 : i32
    %c0_i32_1 = arith.constant 0 : i32
    return %c0_i32, %c0_i32_0 : i32, i32
  }
  func.func @transform_2(%arg0: i32) -> (i32, i32) {
    %c0_i32 = arith.constant 0 : i32
    %c0_i32_0 = arith.constant 0 : i32
    %c0_i32_1 = arith.constant 0 : i32
    return %c0_i32, %c0_i32_0 : i32, i32
  }
  func.func @transform_3(%arg0: i32) -> (i32, i32) {
    %c0_i32 = arith.constant 0 : i32
    %c0_i32_0 = arith.constant 0 : i32
    %c0_i32_1 = arith.constant 0 : i32
    return %c0_i32, %c0_i32_0 : i32, i32
  }
  func.func @transform_4(%arg0: i32) -> (i32, i32) {
    %c0_i32 = arith.constant 0 : i32
    %c0_i32_0 = arith.constant 0 : i32
    return %arg0, %c0_i32 : i32, i32
  }
  func.func @transform_5(%arg0: i32) -> (i32, i32, i32) {
    %c0_i32 = arith.constant 0 : i32
    %c0_i32_0 = arith.constant 0 : i32
    %c0_i32_1 = arith.constant 0 : i32
    return %arg0, %c0_i32, %c0_i32_0 : i32, i32, i32
  }
  func.func @transform_6(%arg0: i32) -> (i32, i32, i32) {
    %c0_i32 = arith.constant 0 : i32
    %c0_i32_0 = arith.constant 0 : i32
    %c0_i32_1 = arith.constant 0 : i32
    return %arg0, %c0_i32, %c0_i32_0 : i32, i32, i32
  }
}

module attributes {stable_mosaic.version = 11 : i64} {
  func.func @_stage3_kernel(%arg0: i32, %arg1: memref<128x16xbf16, #tpu.memory_space<vmem>>, %arg2: memref<1x16xf32, #tpu.memory_space<vmem>>, %arg3: memref<1x16xf32, #tpu.memory_space<vmem>>, %arg4: memref<16x64xbf16, #tpu.memory_space<vmem>>, %arg5: memref<128x64xf32, #tpu.memory_space<vmem>>, %arg6: memref<128x64xf32, #tpu.memory_space<vmem>>, %arg7: memref<1x1x64xf32, #tpu.memory_space<vmem>>, %arg8: memref<1x1x64xf32, #tpu.memory_space<vmem>>) attributes {dimension_semantics = [#tpu.dimension_semantics<parallel>], iteration_bounds = array<i64: 1>, scalar_prefetch = 0 : i64, scratch_operands = 0 : i64, tpu.core_type = #tpu.core_type<tc>, window_params = [{transform_indices = @transform_0, window_bounds = array<i64: 128, 16>}, {pipeline_mode = #tpu.pipeline_mode<synchronous>, transform_indices = @transform_1, window_bounds = array<i64: 1, 16>}, {pipeline_mode = #tpu.pipeline_mode<synchronous>, transform_indices = @transform_2, window_bounds = array<i64: 1, 16>}, {pipeline_mode = #tpu.pipeline_mode<synchronous>, transform_indices = @transform_3, window_bounds = array<i64: 16, 64>}, {transform_indices = @transform_4, window_bounds = array<i64: 128, 64>}, {transform_indices = @transform_5, window_bounds = array<i64: 128, 64>}, {transform_indices = @transform_6, window_bounds = array<i64: 1, 1, 64>}, {transform_indices = @transform_7, window_bounds = array<i64: 1, 1, 64>}]} {
    %c0 = arith.constant 0 : index
    %c0_0 = arith.constant 0 : index
    %0 = vector.load %arg1[%c0, %c0_0] : memref<128x16xbf16, #tpu.memory_space<vmem>>, vector<128x16xbf16>
    %1 = arith.extf %0 : vector<128x16xbf16> to vector<128x16xf32>
    %c0_1 = arith.constant 0 : index
    %c0_2 = arith.constant 0 : index
    %2 = vector.load %arg2[%c0_1, %c0_2] : memref<1x16xf32, #tpu.memory_space<vmem>>, vector<1x16xf32>
    %3 = vector.broadcast %2 : vector<1x16xf32> to vector<128x16xf32>
    %4 = arith.mulf %1, %3 : vector<128x16xf32>
    %c0_3 = arith.constant 0 : index
    %c0_4 = arith.constant 0 : index
    %5 = vector.load %arg3[%c0_3, %c0_4] : memref<1x16xf32, #tpu.memory_space<vmem>>, vector<1x16xf32>
    %6 = vector.broadcast %5 : vector<1x16xf32> to vector<128x16xf32>
    %7 = arith.addf %4, %6 : vector<128x16xf32>
    %cst = arith.constant 0.000000e+00 : f32
    %8 = vector.broadcast %cst : f32 to vector<128x16xf32>
    %9 = arith.maximumf %7, %8 : vector<128x16xf32>
    %10 = arith.truncf %9 : vector<128x16xf32> to vector<128x16xbf16>
    %c0_5 = arith.constant 0 : index
    %c0_6 = arith.constant 0 : index
    %11 = vector.load %arg4[%c0_5, %c0_6] : memref<16x64xbf16, #tpu.memory_space<vmem>>, vector<16x64xbf16>
    %cst_7 = arith.constant dense<0.000000e+00> : vector<128x64xf32>
    %12 = tpu.matmul %10, %11, %cst_7 {dimension_numbers = #tpu.dot_dimension_numbers<[1], [0], [0], [1], [0, 0, 1, 1], [], []>} : vector<128x16xbf16>, vector<16x64xbf16>, vector<128x64xf32> -> vector<128x64xf32>
    %c0_8 = arith.constant 0 : index
    %c0_9 = arith.constant 0 : index
    %13 = vector.load %arg5[%c0_8, %c0_9] : memref<128x64xf32, #tpu.memory_space<vmem>>, vector<128x64xf32>
    %14 = arith.addf %12, %13 : vector<128x64xf32>
    %c0_10 = arith.constant 0 : index
    %c0_11 = arith.constant 0 : index
    %15 = vector.load %arg6[%c0_10, %c0_11] : memref<128x64xf32, #tpu.memory_space<vmem>>, vector<128x64xf32>
    tpu.vector_store %arg6[%c0_10, %c0_11], %14 {strides = array<i32>} : memref<128x64xf32, #tpu.memory_space<vmem>>, vector<128x64xf32>,
    %cst_12 = arith.constant dense<0.000000e+00> : vector<64xf32>
    %16 = vector.multi_reduction <add>, %14, %cst_12 [0] : vector<128x64xf32> to vector<64xf32>
    %17 = vector.shape_cast %16 : vector<64xf32> to vector<1x64xf32>
    %18 = vector.shape_cast %17 : vector<1x64xf32> to vector<1x1x64xf32>
    %c0_13 = arith.constant 0 : index
    %c0_14 = arith.constant 0 : index
    %c0_15 = arith.constant 0 : index
    %19 = vector.load %arg7[%c0_13, %c0_14, %c0_15] : memref<1x1x64xf32, #tpu.memory_space<vmem>>, vector<1x1x64xf32>
    tpu.vector_store %arg7[%c0_13, %c0_14, %c0_15], %18 {strides = array<i32>} : memref<1x1x64xf32, #tpu.memory_space<vmem>>, vector<1x1x64xf32>,
    %20 = arith.mulf %14, %14 : vector<128x64xf32>
    %cst_16 = arith.constant dense<0.000000e+00> : vector<64xf32>
    %21 = vector.multi_reduction <add>, %20, %cst_16 [0] : vector<128x64xf32> to vector<64xf32>
    %22 = vector.shape_cast %21 : vector<64xf32> to vector<1x64xf32>
    %23 = vector.shape_cast %22 : vector<1x64xf32> to vector<1x1x64xf32>
    %c0_17 = arith.constant 0 : index
    %c0_18 = arith.constant 0 : index
    %c0_19 = arith.constant 0 : index
    %24 = vector.load %arg8[%c0_17, %c0_18, %c0_19] : memref<1x1x64xf32, #tpu.memory_space<vmem>>, vector<1x1x64xf32>
    tpu.vector_store %arg8[%c0_17, %c0_18, %c0_19], %23 {strides = array<i32>} : memref<1x1x64xf32, #tpu.memory_space<vmem>>, vector<1x1x64xf32>,
    return
  }
  func.func @transform_0(%arg0: i32) -> (i32, i32) {
    %c0_i32 = arith.constant 0 : i32
    %c0_i32_0 = arith.constant 0 : i32
    return %arg0, %c0_i32 : i32, i32
  }
  func.func @transform_1(%arg0: i32) -> (i32, i32) {
    %c0_i32 = arith.constant 0 : i32
    %c0_i32_0 = arith.constant 0 : i32
    %c0_i32_1 = arith.constant 0 : i32
    return %c0_i32, %c0_i32_0 : i32, i32
  }
  func.func @transform_2(%arg0: i32) -> (i32, i32) {
    %c0_i32 = arith.constant 0 : i32
    %c0_i32_0 = arith.constant 0 : i32
    %c0_i32_1 = arith.constant 0 : i32
    return %c0_i32, %c0_i32_0 : i32, i32
  }
  func.func @transform_3(%arg0: i32) -> (i32, i32) {
    %c0_i32 = arith.constant 0 : i32
    %c0_i32_0 = arith.constant 0 : i32
    %c0_i32_1 = arith.constant 0 : i32
    return %c0_i32, %c0_i32_0 : i32, i32
  }
  func.func @transform_4(%arg0: i32) -> (i32, i32) {
    %c0_i32 = arith.constant 0 : i32
    %c0_i32_0 = arith.constant 0 : i32
    return %arg0, %c0_i32 : i32, i32
  }
  func.func @transform_5(%arg0: i32) -> (i32, i32) {
    %c0_i32 = arith.constant 0 : i32
    %c0_i32_0 = arith.constant 0 : i32
    return %arg0, %c0_i32 : i32, i32
  }
  func.func @transform_6(%arg0: i32) -> (i32, i32, i32) {
    %c0_i32 = arith.constant 0 : i32
    %c0_i32_0 = arith.constant 0 : i32
    %c0_i32_1 = arith.constant 0 : i32
    return %arg0, %c0_i32, %c0_i32_0 : i32, i32, i32
  }
  func.func @transform_7(%arg0: i32) -> (i32, i32, i32) {
    %c0_i32 = arith.constant 0 : i32
    %c0_i32_0 = arith.constant 0 : i32
    %c0_i32_1 = arith.constant 0 : i32
    return %arg0, %c0_i32, %c0_i32_0 : i32, i32, i32
  }
}

module attributes {stable_mosaic.version = 11 : i64} {
  func.func @_stage1_kernel(%arg0: i32, %arg1: memref<128x64xf32, #tpu.memory_space<vmem>>, %arg2: memref<1x64xf32, #tpu.memory_space<vmem>>, %arg3: memref<1x64xf32, #tpu.memory_space<vmem>>, %arg4: memref<64x16xbf16, #tpu.memory_space<vmem>>, %arg5: memref<128x16xbf16, #tpu.memory_space<vmem>>, %arg6: memref<1x1x16xf32, #tpu.memory_space<vmem>>, %arg7: memref<1x1x16xf32, #tpu.memory_space<vmem>>) attributes {dimension_semantics = [#tpu.dimension_semantics<parallel>], iteration_bounds = array<i64: 1>, scalar_prefetch = 0 : i64, scratch_operands = 0 : i64, tpu.core_type = #tpu.core_type<tc>, window_params = [{transform_indices = @transform_0, window_bounds = array<i64: 128, 64>}, {pipeline_mode = #tpu.pipeline_mode<synchronous>, transform_indices = @transform_1, window_bounds = array<i64: 1, 64>}, {pipeline_mode = #tpu.pipeline_mode<synchronous>, transform_indices = @transform_2, window_bounds = array<i64: 1, 64>}, {pipeline_mode = #tpu.pipeline_mode<synchronous>, transform_indices = @transform_3, window_bounds = array<i64: 64, 16>}, {transform_indices = @transform_4, window_bounds = array<i64: 128, 16>}, {transform_indices = @transform_5, window_bounds = array<i64: 1, 1, 16>}, {transform_indices = @transform_6, window_bounds = array<i64: 1, 1, 16>}]} {
    %c0 = arith.constant 0 : index
    %c0_0 = arith.constant 0 : index
    %0 = vector.load %arg1[%c0, %c0_0] : memref<128x64xf32, #tpu.memory_space<vmem>>, vector<128x64xf32>
    %c0_1 = arith.constant 0 : index
    %c0_2 = arith.constant 0 : index
    %1 = vector.load %arg2[%c0_1, %c0_2] : memref<1x64xf32, #tpu.memory_space<vmem>>, vector<1x64xf32>
    %2 = vector.broadcast %1 : vector<1x64xf32> to vector<128x64xf32>
    %3 = arith.mulf %0, %2 : vector<128x64xf32>
    %c0_3 = arith.constant 0 : index
    %c0_4 = arith.constant 0 : index
    %4 = vector.load %arg3[%c0_3, %c0_4] : memref<1x64xf32, #tpu.memory_space<vmem>>, vector<1x64xf32>
    %5 = vector.broadcast %4 : vector<1x64xf32> to vector<128x64xf32>
    %6 = arith.addf %3, %5 : vector<128x64xf32>
    %cst = arith.constant 0.000000e+00 : f32
    %7 = vector.broadcast %cst : f32 to vector<128x64xf32>
    %8 = arith.maximumf %6, %7 : vector<128x64xf32>
    %9 = arith.truncf %8 : vector<128x64xf32> to vector<128x64xbf16>
    %c0_5 = arith.constant 0 : index
    %c0_6 = arith.constant 0 : index
    %10 = vector.load %arg4[%c0_5, %c0_6] : memref<64x16xbf16, #tpu.memory_space<vmem>>, vector<64x16xbf16>
    %cst_7 = arith.constant dense<0.000000e+00> : vector<128x16xf32>
    %11 = tpu.matmul %9, %10, %cst_7 {dimension_numbers = #tpu.dot_dimension_numbers<[1], [0], [0], [1], [0, 0, 1, 1], [], []>} : vector<128x64xbf16>, vector<64x16xbf16>, vector<128x16xf32> -> vector<128x16xf32>
    %12 = arith.truncf %11 : vector<128x16xf32> to vector<128x16xbf16>
    %c0_8 = arith.constant 0 : index
    %c0_9 = arith.constant 0 : index
    %13 = vector.load %arg5[%c0_8, %c0_9] : memref<128x16xbf16, #tpu.memory_space<vmem>>, vector<128x16xbf16>
    tpu.vector_store %arg5[%c0_8, %c0_9], %12 {strides = array<i32>} : memref<128x16xbf16, #tpu.memory_space<vmem>>, vector<128x16xbf16>,
    %cst_10 = arith.constant dense<0.000000e+00> : vector<16xf32>
    %14 = vector.multi_reduction <add>, %11, %cst_10 [0] : vector<128x16xf32> to vector<16xf32>
    %15 = vector.shape_cast %14 : vector<16xf32> to vector<1x16xf32>
    %16 = vector.shape_cast %15 : vector<1x16xf32> to vector<1x1x16xf32>
    %c0_11 = arith.constant 0 : index
    %c0_12 = arith.constant 0 : index
    %c0_13 = arith.constant 0 : index
    %17 = vector.load %arg6[%c0_11, %c0_12, %c0_13] : memref<1x1x16xf32, #tpu.memory_space<vmem>>, vector<1x1x16xf32>
    tpu.vector_store %arg6[%c0_11, %c0_12, %c0_13], %16 {strides = array<i32>} : memref<1x1x16xf32, #tpu.memory_space<vmem>>, vector<1x1x16xf32>,
    %18 = arith.mulf %11, %11 : vector<128x16xf32>
    %cst_14 = arith.constant dense<0.000000e+00> : vector<16xf32>
    %19 = vector.multi_reduction <add>, %18, %cst_14 [0] : vector<128x16xf32> to vector<16xf32>
    %20 = vector.shape_cast %19 : vector<16xf32> to vector<1x16xf32>
    %21 = vector.shape_cast %20 : vector<1x16xf32> to vector<1x1x16xf32>
    %c0_15 = arith.constant 0 : index
    %c0_16 = arith.constant 0 : index
    %c0_17 = arith.constant 0 : index
    %22 = vector.load %arg7[%c0_15, %c0_16, %c0_17] : memref<1x1x16xf32, #tpu.memory_space<vmem>>, vector<1x1x16xf32>
    tpu.vector_store %arg7[%c0_15, %c0_16, %c0_17], %21 {strides = array<i32>} : memref<1x1x16xf32, #tpu.memory_space<vmem>>, vector<1x1x16xf32>,
    return
  }
  func.func @transform_0(%arg0: i32) -> (i32, i32) {
    %c0_i32 = arith.constant 0 : i32
    %c0_i32_0 = arith.constant 0 : i32
    return %arg0, %c0_i32 : i32, i32
  }
  func.func @transform_1(%arg0: i32) -> (i32, i32) {
    %c0_i32 = arith.constant 0 : i32
    %c0_i32_0 = arith.constant 0 : i32
    %c0_i32_1 = arith.constant 0 : i32
    return %c0_i32, %c0_i32_0 : i32, i32
  }
  func.func @transform_2(%arg0: i32) -> (i32, i32) {
    %c0_i32 = arith.constant 0 : i32
    %c0_i32_0 = arith.constant 0 : i32
    %c0_i32_1 = arith.constant 0 : i32
    return %c0_i32, %c0_i32_0 : i32, i32
  }
  func.func @transform_3(%arg0: i32) -> (i32, i32) {
    %c0_i32 = arith.constant 0 : i32
    %c0_i32_0 = arith.constant 0 : i32
    %c0_i32_1 = arith.constant 0 : i32
    return %c0_i32, %c0_i32_0 : i32, i32
  }
  func.func @transform_4(%arg0: i32) -> (i32, i32) {
    %c0_i32 = arith.constant 0 : i32
    %c0_i32_0 = arith.constant 0 : i32
    return %arg0, %c0_i32 : i32, i32
  }
  func.func @transform_5(%arg0: i32) -> (i32, i32, i32) {
    %c0_i32 = arith.constant 0 : i32
    %c0_i32_0 = arith.constant 0 : i32
    %c0_i32_1 = arith.constant 0 : i32
    return %arg0, %c0_i32, %c0_i32_0 : i32, i32, i32
  }
  func.func @transform_6(%arg0: i32) -> (i32, i32, i32) {
    %c0_i32 = arith.constant 0 : i32
    %c0_i32_0 = arith.constant 0 : i32
    %c0_i32_1 = arith.constant 0 : i32
    return %arg0, %c0_i32, %c0_i32_0 : i32, i32, i32
  }
}

module attributes {stable_mosaic.version = 11 : i64} {
  func.func @_stage3_kernel(%arg0: i32, %arg1: memref<128x16xbf16, #tpu.memory_space<vmem>>, %arg2: memref<1x16xf32, #tpu.memory_space<vmem>>, %arg3: memref<1x16xf32, #tpu.memory_space<vmem>>, %arg4: memref<16x64xbf16, #tpu.memory_space<vmem>>, %arg5: memref<128x64xf32, #tpu.memory_space<vmem>>, %arg6: memref<128x64xf32, #tpu.memory_space<vmem>>, %arg7: memref<1x1x64xf32, #tpu.memory_space<vmem>>, %arg8: memref<1x1x64xf32, #tpu.memory_space<vmem>>) attributes {dimension_semantics = [#tpu.dimension_semantics<parallel>], iteration_bounds = array<i64: 1>, scalar_prefetch = 0 : i64, scratch_operands = 0 : i64, tpu.core_type = #tpu.core_type<tc>, window_params = [{transform_indices = @transform_0, window_bounds = array<i64: 128, 16>}, {pipeline_mode = #tpu.pipeline_mode<synchronous>, transform_indices = @transform_1, window_bounds = array<i64: 1, 16>}, {pipeline_mode = #tpu.pipeline_mode<synchronous>, transform_indices = @transform_2, window_bounds = array<i64: 1, 16>}, {pipeline_mode = #tpu.pipeline_mode<synchronous>, transform_indices = @transform_3, window_bounds = array<i64: 16, 64>}, {transform_indices = @transform_4, window_bounds = array<i64: 128, 64>}, {transform_indices = @transform_5, window_bounds = array<i64: 128, 64>}, {transform_indices = @transform_6, window_bounds = array<i64: 1, 1, 64>}, {transform_indices = @transform_7, window_bounds = array<i64: 1, 1, 64>}]} {
    %c0 = arith.constant 0 : index
    %c0_0 = arith.constant 0 : index
    %0 = vector.load %arg1[%c0, %c0_0] : memref<128x16xbf16, #tpu.memory_space<vmem>>, vector<128x16xbf16>
    %1 = arith.extf %0 : vector<128x16xbf16> to vector<128x16xf32>
    %c0_1 = arith.constant 0 : index
    %c0_2 = arith.constant 0 : index
    %2 = vector.load %arg2[%c0_1, %c0_2] : memref<1x16xf32, #tpu.memory_space<vmem>>, vector<1x16xf32>
    %3 = vector.broadcast %2 : vector<1x16xf32> to vector<128x16xf32>
    %4 = arith.mulf %1, %3 : vector<128x16xf32>
    %c0_3 = arith.constant 0 : index
    %c0_4 = arith.constant 0 : index
    %5 = vector.load %arg3[%c0_3, %c0_4] : memref<1x16xf32, #tpu.memory_space<vmem>>, vector<1x16xf32>
    %6 = vector.broadcast %5 : vector<1x16xf32> to vector<128x16xf32>
    %7 = arith.addf %4, %6 : vector<128x16xf32>
    %cst = arith.constant 0.000000e+00 : f32
    %8 = vector.broadcast %cst : f32 to vector<128x16xf32>
    %9 = arith.maximumf %7, %8 : vector<128x16xf32>
    %10 = arith.truncf %9 : vector<128x16xf32> to vector<128x16xbf16>
    %c0_5 = arith.constant 0 : index
    %c0_6 = arith.constant 0 : index
    %11 = vector.load %arg4[%c0_5, %c0_6] : memref<16x64xbf16, #tpu.memory_space<vmem>>, vector<16x64xbf16>
    %cst_7 = arith.constant dense<0.000000e+00> : vector<128x64xf32>
    %12 = tpu.matmul %10, %11, %cst_7 {dimension_numbers = #tpu.dot_dimension_numbers<[1], [0], [0], [1], [0, 0, 1, 1], [], []>} : vector<128x16xbf16>, vector<16x64xbf16>, vector<128x64xf32> -> vector<128x64xf32>
    %c0_8 = arith.constant 0 : index
    %c0_9 = arith.constant 0 : index
    %13 = vector.load %arg5[%c0_8, %c0_9] : memref<128x64xf32, #tpu.memory_space<vmem>>, vector<128x64xf32>
    %14 = arith.addf %12, %13 : vector<128x64xf32>
    %c0_10 = arith.constant 0 : index
    %c0_11 = arith.constant 0 : index
    %15 = vector.load %arg6[%c0_10, %c0_11] : memref<128x64xf32, #tpu.memory_space<vmem>>, vector<128x64xf32>
    tpu.vector_store %arg6[%c0_10, %c0_11], %14 {strides = array<i32>} : memref<128x64xf32, #tpu.memory_space<vmem>>, vector<128x64xf32>,
    %cst_12 = arith.constant dense<0.000000e+00> : vector<64xf32>
    %16 = vector.multi_reduction <add>, %14, %cst_12 [0] : vector<128x64xf32> to vector<64xf32>
    %17 = vector.shape_cast %16 : vector<64xf32> to vector<1x64xf32>
    %18 = vector.shape_cast %17 : vector<1x64xf32> to vector<1x1x64xf32>
    %c0_13 = arith.constant 0 : index
    %c0_14 = arith.constant 0 : index
    %c0_15 = arith.constant 0 : index
    %19 = vector.load %arg7[%c0_13, %c0_14, %c0_15] : memref<1x1x64xf32, #tpu.memory_space<vmem>>, vector<1x1x64xf32>
    tpu.vector_store %arg7[%c0_13, %c0_14, %c0_15], %18 {strides = array<i32>} : memref<1x1x64xf32, #tpu.memory_space<vmem>>, vector<1x1x64xf32>,
    %20 = arith.mulf %14, %14 : vector<128x64xf32>
    %cst_16 = arith.constant dense<0.000000e+00> : vector<64xf32>
    %21 = vector.multi_reduction <add>, %20, %cst_16 [0] : vector<128x64xf32> to vector<64xf32>
    %22 = vector.shape_cast %21 : vector<64xf32> to vector<1x64xf32>
    %23 = vector.shape_cast %22 : vector<1x64xf32> to vector<1x1x64xf32>
    %c0_17 = arith.constant 0 : index
    %c0_18 = arith.constant 0 : index
    %c0_19 = arith.constant 0 : index
    %24 = vector.load %arg8[%c0_17, %c0_18, %c0_19] : memref<1x1x64xf32, #tpu.memory_space<vmem>>, vector<1x1x64xf32>
    tpu.vector_store %arg8[%c0_17, %c0_18, %c0_19], %23 {strides = array<i32>} : memref<1x1x64xf32, #tpu.memory_space<vmem>>, vector<1x1x64xf32>,
    return
  }
  func.func @transform_0(%arg0: i32) -> (i32, i32) {
    %c0_i32 = arith.constant 0 : i32
    %c0_i32_0 = arith.constant 0 : i32
    return %arg0, %c0_i32 : i32, i32
  }
  func.func @transform_1(%arg0: i32) -> (i32, i32) {
    %c0_i32 = arith.constant 0 : i32
    %c0_i32_0 = arith.constant 0 : i32
    %c0_i32_1 = arith.constant 0 : i32
    return %c0_i32, %c0_i32_0 : i32, i32
  }
  func.func @transform_2(%arg0: i32) -> (i32, i32) {
    %c0_i32 = arith.constant 0 : i32
    %c0_i32_0 = arith.constant 0 : i32
    %c0_i32_1 = arith.constant 0 : i32
    return %c0_i32, %c0_i32_0 : i32, i32
  }
  func.func @transform_3(%arg0: i32) -> (i32, i32) {
    %c0_i32 = arith.constant 0 : i32
    %c0_i32_0 = arith.constant 0 : i32
    %c0_i32_1 = arith.constant 0 : i32
    return %c0_i32, %c0_i32_0 : i32, i32
  }
  func.func @transform_4(%arg0: i32) -> (i32, i32) {
    %c0_i32 = arith.constant 0 : i32
    %c0_i32_0 = arith.constant 0 : i32
    return %arg0, %c0_i32 : i32, i32
  }
  func.func @transform_5(%arg0: i32) -> (i32, i32) {
    %c0_i32 = arith.constant 0 : i32
    %c0_i32_0 = arith.constant 0 : i32
    return %arg0, %c0_i32 : i32, i32
  }
  func.func @transform_6(%arg0: i32) -> (i32, i32, i32) {
    %c0_i32 = arith.constant 0 : i32
    %c0_i32_0 = arith.constant 0 : i32
    %c0_i32_1 = arith.constant 0 : i32
    return %arg0, %c0_i32, %c0_i32_0 : i32, i32, i32
  }
  func.func @transform_7(%arg0: i32) -> (i32, i32, i32) {
    %c0_i32 = arith.constant 0 : i32
    %c0_i32_0 = arith.constant 0 : i32
    %c0_i32_1 = arith.constant 0 : i32
    return %arg0, %c0_i32, %c0_i32_0 : i32, i32, i32
  }
}

</mosaic_0001>

<llo_original>
// kernel: _lambda_.7
$region0: #{_lambda_.7}
  #allocation0 [shape = 'u32[]', space=smem, size = 0x4, offset = 0x4, fixed_abs, tag = 'smem constant byte address 0x4 - core index']
  #allocation1 [shape = 'u32[72,128]{1,0:T(1,128)}', space=vmem, size = 0x9000, scoped, tag = 'internal scratch']
  %s0 = inlined_call_operand.hbm [shape: f32[128,64], index: 0, kind: input, shape index: {}]
  %s1 = inlined_call_operand.vmem [shape: f32[1,1,64], index: 1, kind: output, shape index: {0}]
  %s2 = inlined_call_operand.vmem [shape: f32[1,1,64], index: 2, kind: output, shape index: {1}]
  %3 = xla_tuple %s1, %s2
  %s4 = sld [smem:[#allocation0]]
  $region26: #{_lambda_.7} parent=0
    _
  %s6 = ssub.s32 1, %s4
  %s7 = scalar_select 0, %s6, %s4
  $region1: #{_lambda_.7} parent=0
    #allocation2 [shape = 'u8[65536]{0}', space=vmem, size = 0x10000, scoped, tag = 'input window, operand 0, single buffered']
    #allocation3 [shape = 's32[1]{0}', space=sflag, size = 0x4, scoped, tag = 'scoped memory for _lambda_.7']
    %8 = vsyncpa [#allocation3], 0
    // Predicated region
    $region2: #{_lambda_.7} parent=1 // pred_check
      _
    $region3: #{_lambda_.7} parent=1 // pred_check_branch
      %10 = sbr.rel (0) target = $region5
    $region4: #{_lambda_.7} parent=1 // pred_region
      %12 = vsyncadd [#allocation3], 0
      %s13 = sshll.u32 %s0, 4
      %s14 = int_to_ptr.hbm [resolvable:$true] %s13
      %s15 = sshll.u32 [#allocation2], 4
      %s16 = int_to_ptr.vmem [resolvable:$true] %s15
      %21 = dma.hbm_to_vmem [thread:$0]  %s14, 2048, %s16, [#allocation3], 128, 128, 8
    $region5: #{_lambda_.7} parent=1 // pred_fallthru
      _
    // Predicated region
    $region6: #{_lambda_.7} parent=1 // pred_check
      _
    $region7: #{_lambda_.7} parent=1 // pred_check_branch
      %23 = sbr.rel (0) target = $region9
    $region8: #{_lambda_.7} parent=1 // pred_region
      %25 = dma.done [#allocation3], 2048
    $region9: #{_lambda_.7} parent=1 // pred_fallthru
      _
    %v26 = vld [vmem:[#allocation2] sm:$0xff]
    %v27 = vld [vmem:[#allocation2 + $0x8] sm:$0xff]
    %v28 = vld [vmem:[#allocation2 + $0x10] sm:$0xff]
    %v29 = vld [vmem:[#allocation2 + $0x18] sm:$0xff]
    %v30 = vld [vmem:[#allocation2 + $0x20] sm:$0xff]
    %v31 = vld [vmem:[#allocation2 + $0x28] sm:$0xff]
    %v32 = vld [vmem:[#allocation2 + $0x30] sm:$0xff]
    %v33 = vld [vmem:[#allocation2 + $0x38] sm:$0xff]
    %v34 = vld [vmem:[#allocation2 + $0x40] sm:$0xff]
    %v35 = vld [vmem:[#allocation2 + $0x48] sm:$0xff]
    %v36 = vld [vmem:[#allocation2 + $0x50] sm:$0xff]
    %v37 = vld [vmem:[#allocation2 + $0x58] sm:$0xff]
    %v38 = vld [vmem:[#allocation2 + $0x60] sm:$0xff]
    %v39 = vld [vmem:[#allocation2 + $0x68] sm:$0xff]
    %v40 = vld [vmem:[#allocation2 + $0x70] sm:$0xff]
    %v41 = vld [vmem:[#allocation2 + $0x78] sm:$0xff]
    %vm42 = vcmask 523264
    %v43 = vsel %vm42, %v26, 0.0
    %v44 = vsel %vm42, %v27, 0.0
    %v45 = vadd.f32 %v43, %v44
    %v46 = vsel %vm42, %v28, 0.0
    %v47 = vadd.f32 %v45, %v46
    %v48 = vsel %vm42, %v29, 0.0
    %v49 = vadd.f32 %v47, %v48
    %v50 = vsel %vm42, %v30, 0.0
    %v51 = vadd.f32 %v49, %v50
    %v52 = vsel %vm42, %v31, 0.0
    %v53 = vadd.f32 %v51, %v52
    %v54 = vsel %vm42, %v32, 0.0
    %v55 = vadd.f32 %v53, %v54
    %v56 = vsel %vm42, %v33, 0.0
    %v57 = vadd.f32 %v55, %v56
    %v58 = vsel %vm42, %v34, 0.0
    %v59 = vadd.f32 %v57, %v58
    %v60 = vsel %vm42, %v35, 0.0
    %v61 = vadd.f32 %v59, %v60
    %v62 = vsel %vm42, %v36, 0.0
    %v63 = vadd.f32 %v61, %v62
    %v64 = vsel %vm42, %v37, 0.0
    %v65 = vadd.f32 %v63, %v64
    %v66 = vsel %vm42, %v38, 0.0
    %v67 = vadd.f32 %v65, %v66
    %v68 = vsel %vm42, %v39, 0.0
    %v69 = vadd.f32 %v67, %v68
    %v70 = vsel %vm42, %v40, 0.0
    %v71 = vadd.f32 %v69, %v70
    %v72 = vsel %vm42, %v41, 0.0
    %v73 = vadd.f32 %v71, %v72
    %v74 = vrot.slane %v73, 4
    %v75 = vadd.f32 %v73, %v74
    %v76 = vrot.slane %v75, 2
    %v77 = vadd.f32 %v75, %v76
    %v78 = vrot.slane %v77, 1
    %v79 = vadd.f32 %v77, %v78
    %vm80 = vcmask 516096
    %81 = vst.msk [vmem:[%s1] sm:$0x1] %vm80, %v79
    %v82 = vmul.f32 %v26, %v26
    %v83 = vmul.f32 %v27, %v27
    %v84 = vmul.f32 %v28, %v28
    %v85 = vmul.f32 %v29, %v29
    %v86 = vmul.f32 %v30, %v30
    %v87 = vmul.f32 %v31, %v31
    %v88 = vmul.f32 %v32, %v32
    %v89 = vmul.f32 %v33, %v33
    %v90 = vmul.f32 %v34, %v34
    %v91 = vmul.f32 %v35, %v35
    %v92 = vmul.f32 %v36, %v36
    %v93 = vmul.f32 %v37, %v37
    %v94 = vmul.f32 %v38, %v38
    %v95 = vmul.f32 %v39, %v39
    %v96 = vmul.f32 %v40, %v40
    %v97 = vmul.f32 %v41, %v41
    %v98 = vsel %vm42, %v82, 0.0
    %v99 = vsel %vm42, %v83, 0.0
    %v100 = vadd.f32 %v98, %v99
    %v101 = vsel %vm42, %v84, 0.0
    %v102 = vadd.f32 %v100, %v101
    %v103 = vsel %vm42, %v85, 0.0
    %v104 = vadd.f32 %v102, %v103
    %v105 = vsel %vm42, %v86, 0.0
    %v106 = vadd.f32 %v104, %v105
    %v107 = vsel %vm42, %v87, 0.0
    %v108 = vadd.f32 %v106, %v107
    %v109 = vsel %vm42, %v88, 0.0
    %v110 = vadd.f32 %v108, %v109
    %v111 = vsel %vm42, %v89, 0.0
    %v112 = vadd.f32 %v110, %v111
    %v113 = vsel %vm42, %v90, 0.0
    %v114 = vadd.f32 %v112, %v113
    %v115 = vsel %vm42, %v91, 0.0
    %v116 = vadd.f32 %v114, %v115
    %v117 = vsel %vm42, %v92, 0.0
    %v118 = vadd.f32 %v116, %v117
    %v119 = vsel %vm42, %v93, 0.0
    %v120 = vadd.f32 %v118, %v119
    %v121 = vsel %vm42, %v94, 0.0
    %v122 = vadd.f32 %v120, %v121
    %v123 = vsel %vm42, %v95, 0.0
    %v124 = vadd.f32 %v122, %v123
    %v125 = vsel %vm42, %v96, 0.0
    %v126 = vadd.f32 %v124, %v125
    %v127 = vsel %vm42, %v97, 0.0
    %v128 = vadd.f32 %v126, %v127
    %v129 = vrot.slane %v128, 4
    %v130 = vadd.f32 %v128, %v129
    %v131 = vrot.slane %v130, 2
    %v132 = vadd.f32 %v130, %v131
    %v133 = vrot.slane %v132, 1
    %v134 = vadd.f32 %v132, %v133
    %135 = vst.msk [vmem:[%s2] sm:$0x1] %vm80, %v134
    // Predicated region
    $region10: #{_lambda_.7} parent=1 // pred_check
      _
    $region11: #{_lambda_.7} parent=1 // pred_check_branch
      %137 = sbr.rel (0) target = $region13
    $region12: #{_lambda_.7} parent=1 // pred_region
      _
    $region13: #{_lambda_.7} parent=1 // pred_fallthru
      _
    // Predicated region
    $region14: #{_lambda_.7} parent=1 // pred_check
      _
    $region15: #{_lambda_.7} parent=1 // pred_check_branch
      %139 = sbr.rel (0) target = $region17
    $region16: #{_lambda_.7} parent=1 // pred_region
      _
    $region17: #{_lambda_.7} parent=1 // pred_fallthru
      _
    // Predicated region
    $region18: #{_lambda_.7} parent=1 // pred_check
      _
    $region19: #{_lambda_.7} parent=1 // pred_check_branch
      %141 = sbr.rel (0) target = $region21
    $region20: #{_lambda_.7} parent=1 // pred_region
      _
    $region21: #{_lambda_.7} parent=1 // pred_fallthru
      _
    // Predicated region
    $region22: #{_lambda_.7} parent=1 // pred_check
      _
    $region23: #{_lambda_.7} parent=1 // pred_check_branch
      %143 = sbr.rel (0) target = $region25
    $region24: #{_lambda_.7} parent=1 // pred_region
      _
    $region25: #{_lambda_.7} parent=1 // pred_fallthru
      _
    %144 = vsyncpa [#allocation3], 1

// kernel: _lambda_.8
$region0: #{_lambda_.8}
  #allocation0 [shape = 'u32[]', space=smem, size = 0x4, offset = 0x4, fixed_abs, tag = 'smem constant byte address 0x4 - core index']
  #allocation1 [shape = 'u32[72,128]{1,0:T(1,128)}', space=vmem, size = 0x9000, scoped, tag = 'internal scratch']
  %s0 = inlined_call_operand.hbm [shape: f32[128,64], index: 0, kind: input, shape index: {}]
  %s1 = inlined_call_operand.vmem [shape: f32[1,64], index: 1, kind: input, shape index: {}]
  %s2 = inlined_call_operand.vmem [shape: f32[1,64], index: 2, kind: input, shape index: {}]
  %s3 = inlined_call_operand.hbm [shape: bf16[64,16], index: 3, kind: input, shape index: {}]
  %s4 = inlined_call_operand.vmem [shape: bf16[128,16], index: 4, kind: output, shape index: {0}]
  %s5 = inlined_call_operand.vmem [shape: f32[1,1,16], index: 5, kind: output, shape index: {1}]
  %s6 = inlined_call_operand.vmem [shape: f32[1,1,16], index: 6, kind: output, shape index: {2}]
  %7 = xla_tuple %s4, %s5, %s6
  %s8 = sld [smem:[#allocation0]]
  $region50: #{_lambda_.8} parent=0
    _
  %s10 = ssub.s32 1, %s8
  %s11 = scalar_select 0, %s10, %s8
  $region1: #{_lambda_.8} parent=0
    #allocation2 [shape = 'u8[65536]{0}', space=vmem, size = 0x10000, scoped, tag = 'input window, operand 0, single buffered']
    #allocation3 [shape = 's32[1]{0}', space=sflag, size = 0x4, scoped, tag = 'scoped memory for _lambda_.8']
    #allocation4 [shape = 'u8[16384]{0}', space=vmem, size = 0x4000, scoped, tag = 'input window, operand 3, single buffered']
    #allocation5 [shape = 's32[1]{0}', space=sflag, size = 0x4, scoped, tag = 'scoped memory for _lambda_.8']
    %12 = vsyncpa [#allocation3], 0
    %13 = vsyncpa [#allocation5], 0
    // Predicated region
    $region2: #{_lambda_.8} parent=1 // pred_check
      _
    $region3: #{_lambda_.8} parent=1 // pred_check_branch
      %15 = sbr.rel (0) target = $region5
    $region4: #{_lambda_.8} parent=1 // pred_region
      %17 = vsyncadd [#allocation3], 0
      %s18 = sshll.u32 %s0, 4
      %s19 = int_to_ptr.hbm [resolvable:$true] %s18
      %s20 = sshll.u32 [#allocation2], 4
      %s21 = int_to_ptr.vmem [resolvable:$true] %s20
      %26 = dma.hbm_to_vmem [thread:$0]  %s19, 2048, %s21, [#allocation3], 128, 128, 8
    $region5: #{_lambda_.8} parent=1 // pred_fallthru
      _
    // Predicated region
    $region6: #{_lambda_.8} parent=1 // pred_check
      _
    $region7: #{_lambda_.8} parent=1 // pred_check_branch
      %28 = sbr.rel (0) target = $region9
    $region8: #{_lambda_.8} parent=1 // pred_region
      _
    $region9: #{_lambda_.8} parent=1 // pred_fallthru
      _
    // Predicated region
    $region10: #{_lambda_.8} parent=1 // pred_check
      _
    $region11: #{_lambda_.8} parent=1 // pred_check_branch
      %30 = sbr.rel (0) target = $region13
    $region12: #{_lambda_.8} parent=1 // pred_region
      _
    $region13: #{_lambda_.8} parent=1 // pred_fallthru
      _
    // Predicated region
    $region14: #{_lambda_.8} parent=1 // pred_check
      _
    $region15: #{_lambda_.8} parent=1 // pred_check_branch
      %32 = sbr.rel (0) target = $region17
    $region16: #{_lambda_.8} parent=1 // pred_region
      %34 = vsyncadd [#allocation5], 0
      %s35 = sshll.u32 %s3, 4
      %s36 = int_to_ptr.hbm [resolvable:$true] %s35
      %s37 = sshll.u32 [#allocation4], 4
      %s38 = int_to_ptr.vmem [resolvable:$true] %s37
      %43 = dma.hbm_to_vmem [thread:$0]  %s36, 512, %s38, [#allocation5], 64, 64, 4
    $region17: #{_lambda_.8} parent=1 // pred_fallthru
      _
    // Predicated region
    $region18: #{_lambda_.8} parent=1 // pred_check
      _
    $region19: #{_lambda_.8} parent=1 // pred_check_branch
      %45 = sbr.rel (0) target = $region21
    $region20: #{_lambda_.8} parent=1 // pred_region
      %47 = dma.done [#allocation3], 2048
    $region21: #{_lambda_.8} parent=1 // pred_fallthru
      _
    // Predicated region
    $region22: #{_lambda_.8} parent=1 // pred_check
      _
    $region23: #{_lambda_.8} parent=1 // pred_check_branch
      %49 = sbr.rel (0) target = $region25
    $region24: #{_lambda_.8} parent=1 // pred_region
      %51 = dma.done [#allocation5], 512
    $region25: #{_lambda_.8} parent=1 // pred_fallthru
      _
    %v53 = vld [vmem:[#allocation2] sm:$0xff]
    %v54 = vld [vmem:[#allocation2 + $0x8] sm:$0xff]
    %v55 = vld [vmem:[#allocation2 + $0x10] sm:$0xff]
    %v56 = vld [vmem:[#allocation2 + $0x18] sm:$0xff]
    %v57 = vld [vmem:[#allocation2 + $0x20] sm:$0xff]
    %v58 = vld [vmem:[#allocation2 + $0x28] sm:$0xff]
    %v59 = vld [vmem:[#allocation2 + $0x30] sm:$0xff]
    %v60 = vld [vmem:[#allocation2 + $0x38] sm:$0xff]
    %v61 = vld [vmem:[#allocation2 + $0x40] sm:$0xff]
    %v62 = vld [vmem:[#allocation2 + $0x48] sm:$0xff]
    %v63 = vld [vmem:[#allocation2 + $0x50] sm:$0xff]
    %v64 = vld [vmem:[#allocation2 + $0x58] sm:$0xff]
    %v65 = vld [vmem:[#allocation2 + $0x60] sm:$0xff]
    %v66 = vld [vmem:[#allocation2 + $0x68] sm:$0xff]
    %v67 = vld [vmem:[#allocation2 + $0x70] sm:$0xff]
    %v68 = vld [vmem:[#allocation2 + $0x78] sm:$0xff]
    %v69 = vld [vmem:[%s1] sm:$0x1]
    %v71 = vperm.slane %v69, 0
    %v73 = vmul.f32 %v53, %v71
    %v74 = vmul.f32 %v54, %v71
    %v75 = vmul.f32 %v55, %v71
    %v76 = vmul.f32 %v56, %v71
    %v77 = vmul.f32 %v57, %v71
    %v78 = vmul.f32 %v58, %v71
    %v79 = vmul.f32 %v59, %v71
    %v80 = vmul.f32 %v60, %v71
    %v81 = vmul.f32 %v61, %v71
    %v82 = vmul.f32 %v62, %v71
    %v83 = vmul.f32 %v63, %v71
    %v84 = vmul.f32 %v64, %v71
    %v85 = vmul.f32 %v65, %v71
    %v86 = vmul.f32 %v66, %v71
    %v87 = vmul.f32 %v67, %v71
    %v88 = vmul.f32 %v68, %v71
    %v89 = vld [vmem:[%s2] sm:$0x1]
    %v91 = vperm.slane %v89, 0
    %v93 = vadd.f32 %v73, %v91
    %v94 = vadd.f32 %v74, %v91
    %v95 = vadd.f32 %v75, %v91
    %v96 = vadd.f32 %v76, %v91
    %v97 = vadd.f32 %v77, %v91
    %v98 = vadd.f32 %v78, %v91
    %v99 = vadd.f32 %v79, %v91
    %v100 = vadd.f32 %v80, %v91
    %v101 = vadd.f32 %v81, %v91
    %v102 = vadd.f32 %v82, %v91
    %v103 = vadd.f32 %v83, %v91
    %v104 = vadd.f32 %v84, %v91
    %v105 = vadd.f32 %v85, %v91
    %v106 = vadd.f32 %v86, %v91
    %v107 = vadd.f32 %v87, %v91
    %v108 = vadd.f32 %v88, %v91
    %v109 = vmax.f32 %v93, 0.0
    %v110 = vmax.f32 %v94, 0.0
    %v111 = vmax.f32 %v95, 0.0
    %v112 = vmax.f32 %v96, 0.0
    %v113 = vmax.f32 %v97, 0.0
    %v114 = vmax.f32 %v98, 0.0
    %v115 = vmax.f32 %v99, 0.0
    %v116 = vmax.f32 %v100, 0.0
    %v117 = vmax.f32 %v101, 0.0
    %v118 = vmax.f32 %v102, 0.0
    %v119 = vmax.f32 %v103, 0.0
    %v120 = vmax.f32 %v104, 0.0
    %v121 = vmax.f32 %v105, 0.0
    %v122 = vmax.f32 %v106, 0.0
    %v123 = vmax.f32 %v107, 0.0
    %v124 = vmax.f32 %v108, 0.0
    %v125 = vpack.c.bf16 %v110, %v109
    %v126 = vpack.c.bf16 %v112, %v111
    %v127 = vpack.c.bf16 %v114, %v113
    %v128 = vpack.c.bf16 %v116, %v115
    %v129 = vpack.c.bf16 %v118, %v117
    %v130 = vpack.c.bf16 %v120, %v119
    %v131 = vpack.c.bf16 %v122, %v121
    %v132 = vpack.c.bf16 %v124, %v123
    %v133 = vld [vmem:[#allocation4] sm:$0xf]
    %v134 = vld [vmem:[#allocation4 + $0x4] sm:$0xf]
    %v135 = vld [vmem:[#allocation4 + $0x8] sm:$0xf]
    %v136 = vld [vmem:[#allocation4 + $0xc] sm:$0xf]
    %v137 = vld [vmem:[#allocation4 + $0x10] sm:$0xf]
    %v138 = vld [vmem:[#allocation4 + $0x14] sm:$0xf]
    %v139 = vld [vmem:[#allocation4 + $0x18] sm:$0xf]
    %v140 = vld [vmem:[#allocation4 + $0x1c] sm:$0xf]
    %v149 = vunpack.c.l.b16 %v133
    %v150 = vunpack.c.l.b16 %v134
    %v151 = vunpack.c.l.b16 %v135
    %v152 = vunpack.c.l.b16 %v136
    %v153 = vunpack.c.l.b16 %v137
    %v154 = vunpack.c.l.b16 %v138
    %v155 = vunpack.c.l.b16 %v139
    %v156 = vunpack.c.l.b16 %v140
    %v157 = vpack.c.b16 %v150, %v149
    %v158 = vpack.c.b16 %v152, %v151
    %v159 = vpack.c.b16 %v154, %v153
    %v160 = vpack.c.b16 %v156, %v155
    %vm165 = vcmask 523264
    %v167 = vsel %vm165, %v125, 0
    %v170 = vsel %vm165, %v126, 0
    %v173 = vsel %vm165, %v127, 0
    %v176 = vsel %vm165, %v128, 0
    %v179 = vsel %vm165, %v129, 0
    %v182 = vsel %vm165, %v130, 0
    %v185 = vsel %vm165, %v131, 0
    %v188 = vsel %vm165, %v132, 0
    %190 = vmatpush.bf16.msra.mxu0 0
    %191 = vmatpush.bf16.msra.mxu0 0
    %192 = vmatpush.bf16.msra.mxu0 0
    %193 = vmatpush.bf16.msra.mxu0 0
    %194 = vmatpush.bf16.msra.mxu0 %v160
    %195 = vmatpush.bf16.msra.mxu0 %v159
    %196 = vmatpush.bf16.msra.mxu0 %v158
    %197 = vmatpush.bf16.msra.mxu0 %v157
    %198 = vmatmul.bf16.gmra.mxu0 %v167
    %v199 = vpop.f32.mrf.mxu0
    %v200 = vadd.f32 0.0, %v199
    %v201 = vpop.f32.mrf.mxu0
    %v202 = vadd.f32 0.0, %v201
    %203 = vmatmul.bf16.gmra.mxu0 %v170
    %v204 = vpop.f32.mrf.mxu0
    %v205 = vadd.f32 0.0, %v204
    %v206 = vpop.f32.mrf.mxu0
    %v207 = vadd.f32 0.0, %v206
    %208 = vmatmul.bf16.gmra.mxu0 %v173
    %v209 = vpop.f32.mrf.mxu0
    %v210 = vadd.f32 0.0, %v209
    %v211 = vpop.f32.mrf.mxu0
    %v212 = vadd.f32 0.0, %v211
    %213 = vmatmul.bf16.gmra.mxu0 %v176
    %v214 = vpop.f32.mrf.mxu0
    %v215 = vadd.f32 0.0, %v214
    %v216 = vpop.f32.mrf.mxu0
    %v217 = vadd.f32 0.0, %v216
    %218 = vmatmul.bf16.gmra.mxu0 %v179
    %v219 = vpop.f32.mrf.mxu0
    %v220 = vadd.f32 0.0, %v219
    %v221 = vpop.f32.mrf.mxu0
    %v222 = vadd.f32 0.0, %v221
    %223 = vmatmul.bf16.gmra.mxu0 %v182
    %v224 = vpop.f32.mrf.mxu0
    %v225 = vadd.f32 0.0, %v224
    %v226 = vpop.f32.mrf.mxu0
    %v227 = vadd.f32 0.0, %v226
    %228 = vmatmul.bf16.gmra.mxu0 %v185
    %v229 = vpop.f32.mrf.mxu0
    %v230 = vadd.f32 0.0, %v229
    %v231 = vpop.f32.mrf.mxu0
    %v232 = vadd.f32 0.0, %v231
    %233 = vmatmul.bf16.gmra.mxu0 %v188
    %v234 = vpop.f32.mrf.mxu0
    %v235 = vadd.f32 0.0, %v234
    %v236 = vpop.f32.mrf.mxu0
    %v237 = vadd.f32 0.0, %v236
    %238 = vdwg.mxu0
    %v239 = vpack.c.bf16 %v200, %v200
    %v240 = vpack.c.bf16 %v202, %v202
    %v241 = vpack.c.bf16 %v205, %v205
    %v242 = vpack.c.bf16 %v207, %v207
    %v243 = vpack.c.bf16 %v210, %v210
    %v244 = vpack.c.bf16 %v212, %v212
    %v245 = vpack.c.bf16 %v215, %v215
    %v246 = vpack.c.bf16 %v217, %v217
    %v247 = vpack.c.bf16 %v220, %v220
    %v248 = vpack.c.bf16 %v222, %v222
    %v249 = vpack.c.bf16 %v225, %v225
    %v250 = vpack.c.bf16 %v227, %v227
    %v251 = vpack.c.bf16 %v230, %v230
    %v252 = vpack.c.bf16 %v232, %v232
    %v253 = vpack.c.bf16 %v235, %v235
    %v254 = vpack.c.bf16 %v237, %v237
    %vm255 = vcmask 125952
    %256 = vst.msk [vmem:[%s4] sm:$0xf] %vm255, %v239
    %257 = vst.msk [vmem:[%s4 + $0x4] sm:$0xf] %vm255, %v240
    %258 = vst.msk [vmem:[%s4 + $0x8] sm:$0xf] %vm255, %v241
    %259 = vst.msk [vmem:[%s4 + $0xc] sm:$0xf] %vm255, %v242
    %260 = vst.msk [vmem:[%s4 + $0x10] sm:$0xf] %vm255, %v243
    %261 = vst.msk [vmem:[%s4 + $0x14] sm:$0xf] %vm255, %v244
    %262 = vst.msk [vmem:[%s4 + $0x18] sm:$0xf] %vm255, %v245
    %263 = vst.msk [vmem:[%s4 + $0x1c] sm:$0xf] %vm255, %v246
    %264 = vst.msk [vmem:[%s4 + $0x20] sm:$0xf] %vm255, %v247
    %265 = vst.msk [vmem:[%s4 + $0x24] sm:$0xf] %vm255, %v248
    %266 = vst.msk [vmem:[%s4 + $0x28] sm:$0xf] %vm255, %v249
    %267 = vst.msk [vmem:[%s4 + $0x2c] sm:$0xf] %vm255, %v250
    %268 = vst.msk [vmem:[%s4 + $0x30] sm:$0xf] %vm255, %v251
    %269 = vst.msk [vmem:[%s4 + $0x34] sm:$0xf] %vm255, %v252
    %270 = vst.msk [vmem:[%s4 + $0x38] sm:$0xf] %vm255, %v253
    %271 = vst.msk [vmem:[%s4 + $0x3c] sm:$0xf] %vm255, %v254
    %vm272 = vcmask 130048
    %v273 = vsel %vm272, %v200, 0.0
    %v274 = vsel %vm272, %v202, 0.0
    %v275 = vadd.f32 %v273, %v274
    %v276 = vsel %vm272, %v205, 0.0
    %v277 = vadd.f32 %v275, %v276
    %v278 = vsel %vm272, %v207, 0.0
    %v279 = vadd.f32 %v277, %v278
    %v280 = vsel %vm272, %v210, 0.0
    %v281 = vadd.f32 %v279, %v280
    %v282 = vsel %vm272, %v212, 0.0
    %v283 = vadd.f32 %v281, %v282
    %v284 = vsel %vm272, %v215, 0.0
    %v285 = vadd.f32 %v283, %v284
    %v286 = vsel %vm272, %v217, 0.0
    %v287 = vadd.f32 %v285, %v286
    %v288 = vsel %vm272, %v220, 0.0
    %v289 = vadd.f32 %v287, %v288
    %v290 = vsel %vm272, %v222, 0.0
    %v291 = vadd.f32 %v289, %v290
    %v292 = vsel %vm272, %v225, 0.0
    %v293 = vadd.f32 %v291, %v292
    %v294 = vsel %vm272, %v227, 0.0
    %v295 = vadd.f32 %v293, %v294
    %v296 = vsel %vm272, %v230, 0.0
    %v297 = vadd.f32 %v295, %v296
    %v298 = vsel %vm272, %v232, 0.0
    %v299 = vadd.f32 %v297, %v298
    %v300 = vsel %vm272, %v235, 0.0
    %v301 = vadd.f32 %v299, %v300
    %v302 = vsel %vm272, %v237, 0.0
    %v303 = vadd.f32 %v301, %v302
    %v304 = vrot.slane %v303, 4
    %v305 = vadd.f32 %v303, %v304
    %v306 = vrot.slane %v305, 2
    %v307 = vadd.f32 %v305, %v306
    %v308 = vrot.slane %v307, 1
    %v309 = vadd.f32 %v307, %v308
    %vm310 = vcmask 122880
    %311 = vst.msk [vmem:[%s5] sm:$0x1] %vm310, %v309
    %v312 = vmul.f32 %v200, %v200
    %v313 = vmul.f32 %v202, %v202
    %v314 = vmul.f32 %v205, %v205
    %v315 = vmul.f32 %v207, %v207
    %v316 = vmul.f32 %v210, %v210
    %v317 = vmul.f32 %v212, %v212
    %v318 = vmul.f32 %v215, %v215
    %v319 = vmul.f32 %v217, %v217
    %v320 = vmul.f32 %v220, %v220
    %v321 = vmul.f32 %v222, %v222
    %v322 = vmul.f32 %v225, %v225
    %v323 = vmul.f32 %v227, %v227
    %v324 = vmul.f32 %v230, %v230
    %v325 = vmul.f32 %v232, %v232
    %v326 = vmul.f32 %v235, %v235
    %v327 = vmul.f32 %v237, %v237
    %v328 = vsel %vm272, %v312, 0.0
    %v329 = vsel %vm272, %v313, 0.0
    %v330 = vadd.f32 %v328, %v329
    %v331 = vsel %vm272, %v314, 0.0
    %v332 = vadd.f32 %v330, %v331
    %v333 = vsel %vm272, %v315, 0.0
    %v334 = vadd.f32 %v332, %v333
    %v335 = vsel %vm272, %v316, 0.0
    %v336 = vadd.f32 %v334, %v335
    %v337 = vsel %vm272, %v317, 0.0
    %v338 = vadd.f32 %v336, %v337
    %v339 = vsel %vm272, %v318, 0.0
    %v340 = vadd.f32 %v338, %v339
    %v341 = vsel %vm272, %v319, 0.0
    %v342 = vadd.f32 %v340, %v341
    %v343 = vsel %vm272, %v320, 0.0
    %v344 = vadd.f32 %v342, %v343
    %v345 = vsel %vm272, %v321, 0.0
    %v346 = vadd.f32 %v344, %v345
    %v347 = vsel %vm272, %v322, 0.0
    %v348 = vadd.f32 %v346, %v347
    %v349 = vsel %vm272, %v323, 0.0
    %v350 = vadd.f32 %v348, %v349
    %v351 = vsel %vm272, %v324, 0.0
    %v352 = vadd.f32 %v350, %v351
    %v353 = vsel %vm272, %v325, 0.0
    %v354 = vadd.f32 %v352, %v353
    %v355 = vsel %vm272, %v326, 0.0
    %v356 = vadd.f32 %v354, %v355
    %v357 = vsel %vm272, %v327, 0.0
    %v358 = vadd.f32 %v356, %v357
    %v359 = vrot.slane %v358, 4
    %v360 = vadd.f32 %v358, %v359
    %v361 = vrot.slane %v360, 2
    %v362 = vadd.f32 %v360, %v361
    %v363 = vrot.slane %v362, 1
    %v364 = vadd.f32 %v362, %v363
    %365 = vst.msk [vmem:[%s6] sm:$0x1] %vm310, %v364
    // Predicated region
    $region26: #{_lambda_.8} parent=1 // pred_check
      _
    $region27: #{_lambda_.8} parent=1 // pred_check_branch
      %367 = sbr.rel (0) target = $region29
    $region28: #{_lambda_.8} parent=1 // pred_region
      _
    $region29: #{_lambda_.8} parent=1 // pred_fallthru
      _
    // Predicated region
    $region30: #{_lambda_.8} parent=1 // pred_check
      _
    $region31: #{_lambda_.8} parent=1 // pred_check_branch
      %369 = sbr.rel (0) target = $region33
    $region32: #{_lambda_.8} parent=1 // pred_region
      _
    $region33: #{_lambda_.8} parent=1 // pred_fallthru
      _
    // Predicated region
    $region34: #{_lambda_.8} parent=1 // pred_check
      _
    $region35: #{_lambda_.8} parent=1 // pred_check_branch
      %371 = sbr.rel (0) target = $region37
    $region36: #{_lambda_.8} parent=1 // pred_region
      _
    $region37: #{_lambda_.8} parent=1 // pred_fallthru
      _
    // Predicated region
    $region38: #{_lambda_.8} parent=1 // pred_check
      _
    $region39: #{_lambda_.8} parent=1 // pred_check_branch
      %373 = sbr.rel (0) target = $region41
    $region40: #{_lambda_.8} parent=1 // pred_region
      _
    $region41: #{_lambda_.8} parent=1 // pred_fallthru
      _
    // Predicated region
    $region42: #{_lambda_.8} parent=1 // pred_check
      _
    $region43: #{_lambda_.8} parent=1 // pred_check_branch
      %375 = sbr.rel (0) target = $region45
    $region44: #{_lambda_.8} parent=1 // pred_region
      _
    $region45: #{_lambda_.8} parent=1 // pred_fallthru
      _
    // Predicated region
    $region46: #{_lambda_.8} parent=1 // pred_check
      _
    $region47: #{_lambda_.8} parent=1 // pred_check_branch
      %377 = sbr.rel (0) target = $region49
    $region48: #{_lambda_.8} parent=1 // pred_region
      _
    $region49: #{_lambda_.8} parent=1 // pred_fallthru
      _
    %378 = vsyncpa [#allocation3], 1
    %379 = vsyncpa [#allocation5], 1

// kernel: _lambda_.10
$region0: #{_lambda_.10}
  #allocation0 [shape = 'u32[]', space=smem, size = 0x4, offset = 0x4, fixed_abs, tag = 'smem constant byte address 0x4 - core index']
  #allocation1 [shape = 'u32[72,128]{1,0:T(1,128)}', space=vmem, size = 0x9000, scoped, tag = 'internal scratch']
  %s0 = inlined_call_operand.vmem [shape: bf16[128,16], index: 0, kind: input, shape index: {}]
  %s1 = inlined_call_operand.vmem [shape: f32[1,16], index: 1, kind: input, shape index: {}]
  %s2 = inlined_call_operand.vmem [shape: f32[1,16], index: 2, kind: input, shape index: {}]
  %s3 = inlined_call_operand.vmem [shape: bf16[16,64], index: 3, kind: input, shape index: {}]
  %s4 = inlined_call_operand.hbm [shape: f32[128,64], index: 4, kind: input, shape index: {}]
  %s5 = inlined_call_operand.vmem [shape: f32[128,64], index: 5, kind: output, shape index: {0}]
  %s6 = inlined_call_operand.vmem [shape: f32[1,1,64], index: 6, kind: output, shape index: {1}]
  %s7 = inlined_call_operand.vmem [shape: f32[1,1,64], index: 7, kind: output, shape index: {2}]
  %8 = xla_tuple %s5, %s6, %s7
  %s9 = sld [smem:[#allocation0]]
  $region50: #{_lambda_.10} parent=0
    _
  %s11 = ssub.s32 1, %s9
  %s12 = scalar_select 0, %s11, %s9
  $region1: #{_lambda_.10} parent=0
    #allocation2 [shape = 'u8[65536]{0}', space=vmem, size = 0x10000, scoped, tag = 'input window, operand 4, single buffered']
    #allocation3 [shape = 's32[1]{0}', space=sflag, size = 0x4, scoped, tag = 'scoped memory for _lambda_.10']
    %13 = vsyncpa [#allocation3], 0
    // Predicated region
    $region2: #{_lambda_.10} parent=1 // pred_check
      _
    $region3: #{_lambda_.10} parent=1 // pred_check_branch
      %15 = sbr.rel (0) target = $region5
    $region4: #{_lambda_.10} parent=1 // pred_region
      _
    $region5: #{_lambda_.10} parent=1 // pred_fallthru
      _
    // Predicated region
    $region6: #{_lambda_.10} parent=1 // pred_check
      _
    $region7: #{_lambda_.10} parent=1 // pred_check_branch
      %17 = sbr.rel (0) target = $region9
    $region8: #{_lambda_.10} parent=1 // pred_region
      _
    $region9: #{_lambda_.10} parent=1 // pred_fallthru
      _
    // Predicated region
    $region10: #{_lambda_.10} parent=1 // pred_check
      _
    $region11: #{_lambda_.10} parent=1 // pred_check_branch
      %19 = sbr.rel (0) target = $region13
    $region12: #{_lambda_.10} parent=1 // pred_region
      _
    $region13: #{_lambda_.10} parent=1 // pred_fallthru
      _
    // Predicated region
    $region14: #{_lambda_.10} parent=1 // pred_check
      _
    $region15: #{_lambda_.10} parent=1 // pred_check_branch
      %21 = sbr.rel (0) target = $region17
    $region16: #{_lambda_.10} parent=1 // pred_region
      _
    $region17: #{_lambda_.10} parent=1 // pred_fallthru
      _
    // Predicated region
    $region18: #{_lambda_.10} parent=1 // pred_check
      _
    $region19: #{_lambda_.10} parent=1 // pred_check_branch
      %23 = sbr.rel (0) target = $region21
    $region20: #{_lambda_.10} parent=1 // pred_region
      %25 = vsyncadd [#allocation3], 0
      %s26 = sshll.u32 %s4, 4
      %s27 = int_to_ptr.hbm [resolvable:$true] %s26
      %s28 = sshll.u32 [#allocation2], 4
      %s29 = int_to_ptr.vmem [resolvable:$true] %s28
      %34 = dma.hbm_to_vmem [thread:$0]  %s27, 2048, %s29, [#allocation3], 128, 128, 8
    $region21: #{_lambda_.10} parent=1 // pred_fallthru
      _
    // Predicated region
    $region22: #{_lambda_.10} parent=1 // pred_check
      _
    $region23: #{_lambda_.10} parent=1 // pred_check_branch
      %36 = sbr.rel (0) target = $region25
    $region24: #{_lambda_.10} parent=1 // pred_region
      %38 = dma.done [#allocation3], 2048
    $region25: #{_lambda_.10} parent=1 // pred_fallthru
      _
    %v40 = vld [vmem:[%s0] sm:$0xf]
    %v41 = vld [vmem:[%s0 + $0x4] sm:$0xf]
    %v42 = vld [vmem:[%s0 + $0x8] sm:$0xf]
    %v43 = vld [vmem:[%s0 + $0xc] sm:$0xf]
    %v44 = vld [vmem:[%s0 + $0x10] sm:$0xf]
    %v45 = vld [vmem:[%s0 + $0x14] sm:$0xf]
    %v46 = vld [vmem:[%s0 + $0x18] sm:$0xf]
    %v47 = vld [vmem:[%s0 + $0x1c] sm:$0xf]
    %v48 = vld [vmem:[%s0 + $0x20] sm:$0xf]
    %v49 = vld [vmem:[%s0 + $0x24] sm:$0xf]
    %v50 = vld [vmem:[%s0 + $0x28] sm:$0xf]
    %v51 = vld [vmem:[%s0 + $0x2c] sm:$0xf]
    %v52 = vld [vmem:[%s0 + $0x30] sm:$0xf]
    %v53 = vld [vmem:[%s0 + $0x34] sm:$0xf]
    %v54 = vld [vmem:[%s0 + $0x38] sm:$0xf]
    %v55 = vld [vmem:[%s0 + $0x3c] sm:$0xf]
    %v56 = vunpack.c.l.bf16 %v40
    %v57 = vunpack.c.l.bf16 %v41
    %v58 = vunpack.c.l.bf16 %v42
    %v59 = vunpack.c.l.bf16 %v43
    %v60 = vunpack.c.l.bf16 %v44
    %v61 = vunpack.c.l.bf16 %v45
    %v62 = vunpack.c.l.bf16 %v46
    %v63 = vunpack.c.l.bf16 %v47
    %v64 = vunpack.c.l.bf16 %v48
    %v65 = vunpack.c.l.bf16 %v49
    %v66 = vunpack.c.l.bf16 %v50
    %v67 = vunpack.c.l.bf16 %v51
    %v68 = vunpack.c.l.bf16 %v52
    %v69 = vunpack.c.l.bf16 %v53
    %v70 = vunpack.c.l.bf16 %v54
    %v71 = vunpack.c.l.bf16 %v55
    %v72 = vld [vmem:[%s1] sm:$0x1]
    %v74 = vperm.slane %v72, 0
    %v76 = vmul.f32 %v56, %v74
    %v77 = vmul.f32 %v57, %v74
    %v78 = vmul.f32 %v58, %v74
    %v79 = vmul.f32 %v59, %v74
    %v80 = vmul.f32 %v60, %v74
    %v81 = vmul.f32 %v61, %v74
    %v82 = vmul.f32 %v62, %v74
    %v83 = vmul.f32 %v63, %v74
    %v84 = vmul.f32 %v64, %v74
    %v85 = vmul.f32 %v65, %v74
    %v86 = vmul.f32 %v66, %v74
    %v87 = vmul.f32 %v67, %v74
    %v88 = vmul.f32 %v68, %v74
    %v89 = vmul.f32 %v69, %v74
    %v90 = vmul.f32 %v70, %v74
    %v91 = vmul.f32 %v71, %v74
    %v92 = vld [vmem:[%s2] sm:$0x1]
    %v94 = vperm.slane %v92, 0
    %v96 = vadd.f32 %v76, %v94
    %v97 = vadd.f32 %v77, %v94
    %v98 = vadd.f32 %v78, %v94
    %v99 = vadd.f32 %v79, %v94
    %v100 = vadd.f32 %v80, %v94
    %v101 = vadd.f32 %v81, %v94
    %v102 = vadd.f32 %v82, %v94
    %v103 = vadd.f32 %v83, %v94
    %v104 = vadd.f32 %v84, %v94
    %v105 = vadd.f32 %v85, %v94
    %v106 = vadd.f32 %v86, %v94
    %v107 = vadd.f32 %v87, %v94
    %v108 = vadd.f32 %v88, %v94
    %v109 = vadd.f32 %v89, %v94
    %v110 = vadd.f32 %v90, %v94
    %v111 = vadd.f32 %v91, %v94
    %v112 = vmax.f32 %v96, 0.0
    %v113 = vmax.f32 %v97, 0.0
    %v114 = vmax.f32 %v98, 0.0
    %v115 = vmax.f32 %v99, 0.0
    %v116 = vmax.f32 %v100, 0.0
    %v117 = vmax.f32 %v101, 0.0
    %v118 = vmax.f32 %v102, 0.0
    %v119 = vmax.f32 %v103, 0.0
    %v120 = vmax.f32 %v104, 0.0
    %v121 = vmax.f32 %v105, 0.0
    %v122 = vmax.f32 %v106, 0.0
    %v123 = vmax.f32 %v107, 0.0
    %v124 = vmax.f32 %v108, 0.0
    %v125 = vmax.f32 %v109, 0.0
    %v126 = vmax.f32 %v110, 0.0
    %v127 = vmax.f32 %v111, 0.0
    %v128 = vpack.c.bf16 %v113, %v112
    %v129 = vpack.c.bf16 %v115, %v114
    %v130 = vpack.c.bf16 %v117, %v116
    %v131 = vpack.c.bf16 %v119, %v118
    %v132 = vpack.c.bf16 %v121, %v120
    %v133 = vpack.c.bf16 %v123, %v122
    %v134 = vpack.c.bf16 %v125, %v124
    %v135 = vpack.c.bf16 %v127, %v126
    %v136 = vld [vmem:[%s3] sm:$0xf]
    %v137 = vld [vmem:[%s3 + $0x4] sm:$0xf]
    %v138 = vld [vmem:[#allocation2] sm:$0xff]
    %v139 = vld [vmem:[#allocation2 + $0x8] sm:$0xff]
    %v140 = vld [vmem:[#allocation2 + $0x10] sm:$0xff]
    %v141 = vld [vmem:[#allocation2 + $0x18] sm:$0xff]
    %v142 = vld [vmem:[#allocation2 + $0x20] sm:$0xff]
    %v143 = vld [vmem:[#allocation2 + $0x28] sm:$0xff]
    %v144 = vld [vmem:[#allocation2 + $0x30] sm:$0xff]
    %v145 = vld [vmem:[#allocation2 + $0x38] sm:$0xff]
    %v146 = vld [vmem:[#allocation2 + $0x40] sm:$0xff]
    %v147 = vld [vmem:[#allocation2 + $0x48] sm:$0xff]
    %v148 = vld [vmem:[#allocation2 + $0x50] sm:$0xff]
    %v149 = vld [vmem:[#allocation2 + $0x58] sm:$0xff]
    %v150 = vld [vmem:[#allocation2 + $0x60] sm:$0xff]
    %v151 = vld [vmem:[#allocation2 + $0x68] sm:$0xff]
    %v152 = vld [vmem:[#allocation2 + $0x70] sm:$0xff]
    %v153 = vld [vmem:[#allocation2 + $0x78] sm:$0xff]
    %v156 = vunpack.c.l.b16 %v136
    %v157 = vunpack.c.l.b16 %v137
    %v158 = vpack.c.b16 %v157, %v156
    %vm160 = vcmask 130048
    %v162 = vsel %vm160, %v128, 0
    %v165 = vsel %vm160, %v129, 0
    %v168 = vsel %vm160, %v130, 0
    %v171 = vsel %vm160, %v131, 0
    %v174 = vsel %vm160, %v132, 0
    %v177 = vsel %vm160, %v133, 0
    %v180 = vsel %vm160, %v134, 0
    %v183 = vsel %vm160, %v135, 0
    %185 = vmatpush.bf16.msra.mxu0 0
    %186 = vmatpush.bf16.msra.mxu0 0
    %187 = vmatpush.bf16.msra.mxu0 0
    %188 = vmatpush.bf16.msra.mxu0 0
    %189 = vmatpush.bf16.msra.mxu0 0
    %190 = vmatpush.bf16.msra.mxu0 0
    %191 = vmatpush.bf16.msra.mxu0 0
    %192 = vmatpush.bf16.msra.mxu0 %v158
    %193 = vmatmul.bf16.gmra.mxu0 %v162
    %v194 = vpop.f32.mrf.mxu0
    %v195 = vadd.f32 %v138, %v194
    %v196 = vpop.f32.mrf.mxu0
    %v197 = vadd.f32 %v139, %v196
    %198 = vmatmul.bf16.gmra.mxu0 %v165
    %v199 = vpop.f32.mrf.mxu0
    %v200 = vadd.f32 %v140, %v199
    %v201 = vpop.f32.mrf.mxu0
    %v202 = vadd.f32 %v141, %v201
    %203 = vmatmul.bf16.gmra.mxu0 %v168
    %v204 = vpop.f32.mrf.mxu0
    %v205 = vadd.f32 %v142, %v204
    %v206 = vpop.f32.mrf.mxu0
    %v207 = vadd.f32 %v143, %v206
    %208 = vmatmul.bf16.gmra.mxu0 %v171
    %v209 = vpop.f32.mrf.mxu0
    %v210 = vadd.f32 %v144, %v209
    %v211 = vpop.f32.mrf.mxu0
    %v212 = vadd.f32 %v145, %v211
    %213 = vmatmul.bf16.gmra.mxu0 %v174
    %v214 = vpop.f32.mrf.mxu0
    %v215 = vadd.f32 %v146, %v214
    %v216 = vpop.f32.mrf.mxu0
    %v217 = vadd.f32 %v147, %v216
    %218 = vmatmul.bf16.gmra.mxu0 %v177
    %v219 = vpop.f32.mrf.mxu0
    %v220 = vadd.f32 %v148, %v219
    %v221 = vpop.f32.mrf.mxu0
    %v222 = vadd.f32 %v149, %v221
    %223 = vmatmul.bf16.gmra.mxu0 %v180
    %v224 = vpop.f32.mrf.mxu0
    %v225 = vadd.f32 %v150, %v224
    %v226 = vpop.f32.mrf.mxu0
    %v227 = vadd.f32 %v151, %v226
    %228 = vmatmul.bf16.gmra.mxu0 %v183
    %v229 = vpop.f32.mrf.mxu0
    %v230 = vadd.f32 %v152, %v229
    %v231 = vpop.f32.mrf.mxu0
    %v232 = vadd.f32 %v153, %v231
    %233 = vdwg.mxu0
    %vm234 = vcmask 523264
    %235 = vst.msk [vmem:[%s5] sm:$0xff] %vm234, %v195
    %236 = vst.msk [vmem:[%s5 + $0x8] sm:$0xff] %vm234, %v197
    %237 = vst.msk [vmem:[%s5 + $0x10] sm:$0xff] %vm234, %v200
    %238 = vst.msk [vmem:[%s5 + $0x18] sm:$0xff] %vm234, %v202
    %239 = vst.msk [vmem:[%s5 + $0x20] sm:$0xff] %vm234, %v205
    %240 = vst.msk [vmem:[%s5 + $0x28] sm:$0xff] %vm234, %v207
    %241 = vst.msk [vmem:[%s5 + $0x30] sm:$0xff] %vm234, %v210
    %242 = vst.msk [vmem:[%s5 + $0x38] sm:$0xff] %vm234, %v212
    %243 = vst.msk [vmem:[%s5 + $0x40] sm:$0xff] %vm234, %v215
    %244 = vst.msk [vmem:[%s5 + $0x48] sm:$0xff] %vm234, %v217
    %245 = vst.msk [vmem:[%s5 + $0x50] sm:$0xff] %vm234, %v220
    %246 = vst.msk [vmem:[%s5 + $0x58] sm:$0xff] %vm234, %v222
    %247 = vst.msk [vmem:[%s5 + $0x60] sm:$0xff] %vm234, %v225
    %248 = vst.msk [vmem:[%s5 + $0x68] sm:$0xff] %vm234, %v227
    %249 = vst.msk [vmem:[%s5 + $0x70] sm:$0xff] %vm234, %v230
    %250 = vst.msk [vmem:[%s5 + $0x78] sm:$0xff] %vm234, %v232
    %v251 = vsel %vm234, %v195, 0.0
    %v252 = vsel %vm234, %v197, 0.0
    %v253 = vadd.f32 %v251, %v252
    %v254 = vsel %vm234, %v200, 0.0
    %v255 = vadd.f32 %v253, %v254
    %v256 = vsel %vm234, %v202, 0.0
    %v257 = vadd.f32 %v255, %v256
    %v258 = vsel %vm234, %v205, 0.0
    %v259 = vadd.f32 %v257, %v258
    %v260 = vsel %vm234, %v207, 0.0
    %v261 = vadd.f32 %v259, %v260
    %v262 = vsel %vm234, %v210, 0.0
    %v263 = vadd.f32 %v261, %v262
    %v264 = vsel %vm234, %v212, 0.0
    %v265 = vadd.f32 %v263, %v264
    %v266 = vsel %vm234, %v215, 0.0
    %v267 = vadd.f32 %v265, %v266
    %v268 = vsel %vm234, %v217, 0.0
    %v269 = vadd.f32 %v267, %v268
    %v270 = vsel %vm234, %v220, 0.0
    %v271 = vadd.f32 %v269, %v270
    %v272 = vsel %vm234, %v222, 0.0
    %v273 = vadd.f32 %v271, %v272
    %v274 = vsel %vm234, %v225, 0.0
    %v275 = vadd.f32 %v273, %v274
    %v276 = vsel %vm234, %v227, 0.0
    %v277 = vadd.f32 %v275, %v276
    %v278 = vsel %vm234, %v230, 0.0
    %v279 = vadd.f32 %v277, %v278
    %v280 = vsel %vm234, %v232, 0.0
    %v281 = vadd.f32 %v279, %v280
    %v282 = vrot.slane %v281, 4
    %v283 = vadd.f32 %v281, %v282
    %v284 = vrot.slane %v283, 2
    %v285 = vadd.f32 %v283, %v284
    %v286 = vrot.slane %v285, 1
    %v287 = vadd.f32 %v285, %v286
    %vm288 = vcmask 516096
    %289 = vst.msk [vmem:[%s6] sm:$0x1] %vm288, %v287
    %v290 = vmul.f32 %v195, %v195
    %v291 = vmul.f32 %v197, %v197
    %v292 = vmul.f32 %v200, %v200
    %v293 = vmul.f32 %v202, %v202
    %v294 = vmul.f32 %v205, %v205
    %v295 = vmul.f32 %v207, %v207
    %v296 = vmul.f32 %v210, %v210
    %v297 = vmul.f32 %v212, %v212
    %v298 = vmul.f32 %v215, %v215
    %v299 = vmul.f32 %v217, %v217
    %v300 = vmul.f32 %v220, %v220
    %v301 = vmul.f32 %v222, %v222
    %v302 = vmul.f32 %v225, %v225
    %v303 = vmul.f32 %v227, %v227
    %v304 = vmul.f32 %v230, %v230
    %v305 = vmul.f32 %v232, %v232
    %v306 = vsel %vm234, %v290, 0.0
    %v307 = vsel %vm234, %v291, 0.0
    %v308 = vadd.f32 %v306, %v307
    %v309 = vsel %vm234, %v292, 0.0
    %v310 = vadd.f32 %v308, %v309
    %v311 = vsel %vm234, %v293, 0.0
    %v312 = vadd.f32 %v310, %v311
    %v313 = vsel %vm234, %v294, 0.0
    %v314 = vadd.f32 %v312, %v313
    %v315 = vsel %vm234, %v295, 0.0
    %v316 = vadd.f32 %v314, %v315
    %v317 = vsel %vm234, %v296, 0.0
    %v318 = vadd.f32 %v316, %v317
    %v319 = vsel %vm234, %v297, 0.0
    %v320 = vadd.f32 %v318, %v319
    %v321 = vsel %vm234, %v298, 0.0
    %v322 = vadd.f32 %v320, %v321
    %v323 = vsel %vm234, %v299, 0.0
    %v324 = vadd.f32 %v322, %v323
    %v325 = vsel %vm234, %v300, 0.0
    %v326 = vadd.f32 %v324, %v325
    %v327 = vsel %vm234, %v301, 0.0
    %v328 = vadd.f32 %v326, %v327
    %v329 = vsel %vm234, %v302, 0.0
    %v330 = vadd.f32 %v328, %v329
    %v331 = vsel %vm234, %v303, 0.0
    %v332 = vadd.f32 %v330, %v331
    %v333 = vsel %vm234, %v304, 0.0
    %v334 = vadd.f32 %v332, %v333
    %v335 = vsel %vm234, %v305, 0.0
    %v336 = vadd.f32 %v334, %v335
    %v337 = vrot.slane %v336, 4
    %v338 = vadd.f32 %v336, %v337
    %v339 = vrot.slane %v338, 2
    %v340 = vadd.f32 %v338, %v339
    %v341 = vrot.slane %v340, 1
    %v342 = vadd.f32 %v340, %v341
    %343 = vst.msk [vmem:[%s7] sm:$0x1] %vm288, %v342
    // Predicated region
    $region26: #{_lambda_.10} parent=1 // pred_check
      _
    $region27: #{_lambda_.10} parent=1 // pred_check_branch
      %345 = sbr.rel (0) target = $region29
    $region28: #{_lambda_.10} parent=1 // pred_region
      _
    $region29: #{_lambda_.10} parent=1 // pred_fallthru
      _
    // Predicated region
    $region30: #{_lambda_.10} parent=1 // pred_check
      _
    $region31: #{_lambda_.10} parent=1 // pred_check_branch
      %347 = sbr.rel (0) target = $region33
    $region32: #{_lambda_.10} parent=1 // pred_region
      _
    $region33: #{_lambda_.10} parent=1 // pred_fallthru
      _
    // Predicated region
    $region34: #{_lambda_.10} parent=1 // pred_check
      _
    $region35: #{_lambda_.10} parent=1 // pred_check_branch
      %349 = sbr.rel (0) target = $region37
    $region36: #{_lambda_.10} parent=1 // pred_region
      _
    $region37: #{_lambda_.10} parent=1 // pred_fallthru
      _
    // Predicated region
    $region38: #{_lambda_.10} parent=1 // pred_check
      _
    $region39: #{_lambda_.10} parent=1 // pred_check_branch
      %351 = sbr.rel (0) target = $region41
    $region40: #{_lambda_.10} parent=1 // pred_region
      _
    $region41: #{_lambda_.10} parent=1 // pred_fallthru
      _
    // Predicated region
    $region42: #{_lambda_.10} parent=1 // pred_check
      _
    $region43: #{_lambda_.10} parent=1 // pred_check_branch
      %353 = sbr.rel (0) target = $region45
    $region44: #{_lambda_.10} parent=1 // pred_region
      _
    $region45: #{_lambda_.10} parent=1 // pred_fallthru
      _
    // Predicated region
    $region46: #{_lambda_.10} parent=1 // pred_check
      _
    $region47: #{_lambda_.10} parent=1 // pred_check_branch
      %355 = sbr.rel (0) target = $region49
    $region48: #{_lambda_.10} parent=1 // pred_region
      _
    $region49: #{_lambda_.10} parent=1 // pred_fallthru
      _
    %356 = vsyncpa [#allocation3], 1

// kernel: _lambda_.11
$region0: #{_lambda_.11}
  #allocation0 [shape = 'u32[]', space=smem, size = 0x4, offset = 0x4, fixed_abs, tag = 'smem constant byte address 0x4 - core index']
  #allocation1 [shape = 'u32[72,128]{1,0:T(1,128)}', space=vmem, size = 0x9000, scoped, tag = 'internal scratch']
  %s0 = inlined_call_operand.vmem [shape: f32[128,64], index: 0, kind: input, shape index: {}]
  %s1 = inlined_call_operand.vmem [shape: f32[1,64], index: 1, kind: input, shape index: {}]
  %s2 = inlined_call_operand.vmem [shape: f32[1,64], index: 2, kind: input, shape index: {}]
  %s3 = inlined_call_operand.hbm [shape: bf16[64,16], index: 3, kind: input, shape index: {}]
  %s4 = inlined_call_operand.vmem [shape: bf16[128,16], index: 4, kind: output, shape index: {0}]
  %s5 = inlined_call_operand.vmem [shape: f32[1,1,16], index: 5, kind: output, shape index: {1}]
  %s6 = inlined_call_operand.vmem [shape: f32[1,1,16], index: 6, kind: output, shape index: {2}]
  %7 = xla_tuple %s4, %s5, %s6
  %s8 = sld [smem:[#allocation0]]
  $region46: #{_lambda_.11} parent=0
    _
  %s10 = ssub.s32 1, %s8
  %s11 = scalar_select 0, %s10, %s8
  $region1: #{_lambda_.11} parent=0
    #allocation2 [shape = 'u8[16384]{0}', space=vmem, size = 0x4000, scoped, tag = 'input window, operand 3, single buffered']
    #allocation3 [shape = 's32[1]{0}', space=sflag, size = 0x4, scoped, tag = 'scoped memory for _lambda_.11']
    %12 = vsyncpa [#allocation3], 0
    // Predicated region
    $region2: #{_lambda_.11} parent=1 // pred_check
      _
    $region3: #{_lambda_.11} parent=1 // pred_check_branch
      %14 = sbr.rel (0) target = $region5
    $region4: #{_lambda_.11} parent=1 // pred_region
      _
    $region5: #{_lambda_.11} parent=1 // pred_fallthru
      _
    // Predicated region
    $region6: #{_lambda_.11} parent=1 // pred_check
      _
    $region7: #{_lambda_.11} parent=1 // pred_check_branch
      %16 = sbr.rel (0) target = $region9
    $region8: #{_lambda_.11} parent=1 // pred_region
      _
    $region9: #{_lambda_.11} parent=1 // pred_fallthru
      _
    // Predicated region
    $region10: #{_lambda_.11} parent=1 // pred_check
      _
    $region11: #{_lambda_.11} parent=1 // pred_check_branch
      %18 = sbr.rel (0) target = $region13
    $region12: #{_lambda_.11} parent=1 // pred_region
      _
    $region13: #{_lambda_.11} parent=1 // pred_fallthru
      _
    // Predicated region
    $region14: #{_lambda_.11} parent=1 // pred_check
      _
    $region15: #{_lambda_.11} parent=1 // pred_check_branch
      %20 = sbr.rel (0) target = $region17
    $region16: #{_lambda_.11} parent=1 // pred_region
      %22 = vsyncadd [#allocation3], 0
      %s23 = sshll.u32 %s3, 4
      %s24 = int_to_ptr.hbm [resolvable:$true] %s23
      %s25 = sshll.u32 [#allocation2], 4
      %s26 = int_to_ptr.vmem [resolvable:$true] %s25
      %31 = dma.hbm_to_vmem [thread:$0]  %s24, 512, %s26, [#allocation3], 64, 64, 4
    $region17: #{_lambda_.11} parent=1 // pred_fallthru
      _
    // Predicated region
    $region18: #{_lambda_.11} parent=1 // pred_check
      _
    $region19: #{_lambda_.11} parent=1 // pred_check_branch
      %33 = sbr.rel (0) target = $region21
    $region20: #{_lambda_.11} parent=1 // pred_region
      %35 = dma.done [#allocation3], 512
    $region21: #{_lambda_.11} parent=1 // pred_fallthru
      _
    %v37 = vld [vmem:[%s0] sm:$0xff]
    %v38 = vld [vmem:[%s0 + $0x8] sm:$0xff]
    %v39 = vld [vmem:[%s0 + $0x10] sm:$0xff]
    %v40 = vld [vmem:[%s0 + $0x18] sm:$0xff]
    %v41 = vld [vmem:[%s0 + $0x20] sm:$0xff]
    %v42 = vld [vmem:[%s0 + $0x28] sm:$0xff]
    %v43 = vld [vmem:[%s0 + $0x30] sm:$0xff]
    %v44 = vld [vmem:[%s0 + $0x38] sm:$0xff]
    %v45 = vld [vmem:[%s0 + $0x40] sm:$0xff]
    %v46 = vld [vmem:[%s0 + $0x48] sm:$0xff]
    %v47 = vld [vmem:[%s0 + $0x50] sm:$0xff]
    %v48 = vld [vmem:[%s0 + $0x58] sm:$0xff]
    %v49 = vld [vmem:[%s0 + $0x60] sm:$0xff]
    %v50 = vld [vmem:[%s0 + $0x68] sm:$0xff]
    %v51 = vld [vmem:[%s0 + $0x70] sm:$0xff]
    %v52 = vld [vmem:[%s0 + $0x78] sm:$0xff]
    %v53 = vld [vmem:[%s1] sm:$0x1]
    %v55 = vperm.slane %v53, 0
    %v57 = vmul.f32 %v37, %v55
    %v58 = vmul.f32 %v38, %v55
    %v59 = vmul.f32 %v39, %v55
    %v60 = vmul.f32 %v40, %v55
    %v61 = vmul.f32 %v41, %v55
    %v62 = vmul.f32 %v42, %v55
    %v63 = vmul.f32 %v43, %v55
    %v64 = vmul.f32 %v44, %v55
    %v65 = vmul.f32 %v45, %v55
    %v66 = vmul.f32 %v46, %v55
    %v67 = vmul.f32 %v47, %v55
    %v68 = vmul.f32 %v48, %v55
    %v69 = vmul.f32 %v49, %v55
    %v70 = vmul.f32 %v50, %v55
    %v71 = vmul.f32 %v51, %v55
    %v72 = vmul.f32 %v52, %v55
    %v73 = vld [vmem:[%s2] sm:$0x1]
    %v75 = vperm.slane %v73, 0
    %v77 = vadd.f32 %v57, %v75
    %v78 = vadd.f32 %v58, %v75
    %v79 = vadd.f32 %v59, %v75
    %v80 = vadd.f32 %v60, %v75
    %v81 = vadd.f32 %v61, %v75
    %v82 = vadd.f32 %v62, %v75
    %v83 = vadd.f32 %v63, %v75
    %v84 = vadd.f32 %v64, %v75
    %v85 = vadd.f32 %v65, %v75
    %v86 = vadd.f32 %v66, %v75
    %v87 = vadd.f32 %v67, %v75
    %v88 = vadd.f32 %v68, %v75
    %v89 = vadd.f32 %v69, %v75
    %v90 = vadd.f32 %v70, %v75
    %v91 = vadd.f32 %v71, %v75
    %v92 = vadd.f32 %v72, %v75
    %v93 = vmax.f32 %v77, 0.0
    %v94 = vmax.f32 %v78, 0.0
    %v95 = vmax.f32 %v79, 0.0
    %v96 = vmax.f32 %v80, 0.0
    %v97 = vmax.f32 %v81, 0.0
    %v98 = vmax.f32 %v82, 0.0
    %v99 = vmax.f32 %v83, 0.0
    %v100 = vmax.f32 %v84, 0.0
    %v101 = vmax.f32 %v85, 0.0
    %v102 = vmax.f32 %v86, 0.0
    %v103 = vmax.f32 %v87, 0.0
    %v104 = vmax.f32 %v88, 0.0
    %v105 = vmax.f32 %v89, 0.0
    %v106 = vmax.f32 %v90, 0.0
    %v107 = vmax.f32 %v91, 0.0
    %v108 = vmax.f32 %v92, 0.0
    %v109 = vpack.c.bf16 %v94, %v93
    %v110 = vpack.c.bf16 %v96, %v95
    %v111 = vpack.c.bf16 %v98, %v97
    %v112 = vpack.c.bf16 %v100, %v99
    %v113 = vpack.c.bf16 %v102, %v101
    %v114 = vpack.c.bf16 %v104, %v103
    %v115 = vpack.c.bf16 %v106, %v105
    %v116 = vpack.c.bf16 %v108, %v107
    %v117 = vld [vmem:[#allocation2] sm:$0xf]
    %v118 = vld [vmem:[#allocation2 + $0x4] sm:$0xf]
    %v119 = vld [vmem:[#allocation2 + $0x8] sm:$0xf]
    %v120 = vld [vmem:[#allocation2 + $0xc] sm:$0xf]
    %v121 = vld [vmem:[#allocation2 + $0x10] sm:$0xf]
    %v122 = vld [vmem:[#allocation2 + $0x14] sm:$0xf]
    %v123 = vld [vmem:[#allocation2 + $0x18] sm:$0xf]
    %v124 = vld [vmem:[#allocation2 + $0x1c] sm:$0xf]
    %v133 = vunpack.c.l.b16 %v117
    %v134 = vunpack.c.l.b16 %v118
    %v135 = vunpack.c.l.b16 %v119
    %v136 = vunpack.c.l.b16 %v120
    %v137 = vunpack.c.l.b16 %v121
    %v138 = vunpack.c.l.b16 %v122
    %v139 = vunpack.c.l.b16 %v123
    %v140 = vunpack.c.l.b16 %v124
    %v141 = vpack.c.b16 %v134, %v133
    %v142 = vpack.c.b16 %v136, %v135
    %v143 = vpack.c.b16 %v138, %v137
    %v144 = vpack.c.b16 %v140, %v139
    %vm149 = vcmask 523264
    %v151 = vsel %vm149, %v109, 0
    %v154 = vsel %vm149, %v110, 0
    %v157 = vsel %vm149, %v111, 0
    %v160 = vsel %vm149, %v112, 0
    %v163 = vsel %vm149, %v113, 0
    %v166 = vsel %vm149, %v114, 0
    %v169 = vsel %vm149, %v115, 0
    %v172 = vsel %vm149, %v116, 0
    %174 = vmatpush.bf16.msra.mxu0 0
    %175 = vmatpush.bf16.msra.mxu0 0
    %176 = vmatpush.bf16.msra.mxu0 0
    %177 = vmatpush.bf16.msra.mxu0 0
    %178 = vmatpush.bf16.msra.mxu0 %v144
    %179 = vmatpush.bf16.msra.mxu0 %v143
    %180 = vmatpush.bf16.msra.mxu0 %v142
    %181 = vmatpush.bf16.msra.mxu0 %v141
    %182 = vmatmul.bf16.gmra.mxu0 %v151
    %v183 = vpop.f32.mrf.mxu0
    %v184 = vadd.f32 0.0, %v183
    %v185 = vpop.f32.mrf.mxu0
    %v186 = vadd.f32 0.0, %v185
    %187 = vmatmul.bf16.gmra.mxu0 %v154
    %v188 = vpop.f32.mrf.mxu0
    %v189 = vadd.f32 0.0, %v188
    %v190 = vpop.f32.mrf.mxu0
    %v191 = vadd.f32 0.0, %v190
    %192 = vmatmul.bf16.gmra.mxu0 %v157
    %v193 = vpop.f32.mrf.mxu0
    %v194 = vadd.f32 0.0, %v193
    %v195 = vpop.f32.mrf.mxu0
    %v196 = vadd.f32 0.0, %v195
    %197 = vmatmul.bf16.gmra.mxu0 %v160
    %v198 = vpop.f32.mrf.mxu0
    %v199 = vadd.f32 0.0, %v198
    %v200 = vpop.f32.mrf.mxu0
    %v201 = vadd.f32 0.0, %v200
    %202 = vmatmul.bf16.gmra.mxu0 %v163
    %v203 = vpop.f32.mrf.mxu0
    %v204 = vadd.f32 0.0, %v203
    %v205 = vpop.f32.mrf.mxu0
    %v206 = vadd.f32 0.0, %v205
    %207 = vmatmul.bf16.gmra.mxu0 %v166
    %v208 = vpop.f32.mrf.mxu0
    %v209 = vadd.f32 0.0, %v208
    %v210 = vpop.f32.mrf.mxu0
    %v211 = vadd.f32 0.0, %v210
    %212 = vmatmul.bf16.gmra.mxu0 %v169
    %v213 = vpop.f32.mrf.mxu0
    %v214 = vadd.f32 0.0, %v213
    %v215 = vpop.f32.mrf.mxu0
    %v216 = vadd.f32 0.0, %v215
    %217 = vmatmul.bf16.gmra.mxu0 %v172
    %v218 = vpop.f32.mrf.mxu0
    %v219 = vadd.f32 0.0, %v218
    %v220 = vpop.f32.mrf.mxu0
    %v221 = vadd.f32 0.0, %v220
    %222 = vdwg.mxu0
    %v223 = vpack.c.bf16 %v184, %v184
    %v224 = vpack.c.bf16 %v186, %v186
    %v225 = vpack.c.bf16 %v189, %v189
    %v226 = vpack.c.bf16 %v191, %v191
    %v227 = vpack.c.bf16 %v194, %v194
    %v228 = vpack.c.bf16 %v196, %v196
    %v229 = vpack.c.bf16 %v199, %v199
    %v230 = vpack.c.bf16 %v201, %v201
    %v231 = vpack.c.bf16 %v204, %v204
    %v232 = vpack.c.bf16 %v206, %v206
    %v233 = vpack.c.bf16 %v209, %v209
    %v234 = vpack.c.bf16 %v211, %v211
    %v235 = vpack.c.bf16 %v214, %v214
    %v236 = vpack.c.bf16 %v216, %v216
    %v237 = vpack.c.bf16 %v219, %v219
    %v238 = vpack.c.bf16 %v221, %v221
    %vm239 = vcmask 125952
    %240 = vst.msk [vmem:[%s4] sm:$0xf] %vm239, %v223
    %241 = vst.msk [vmem:[%s4 + $0x4] sm:$0xf] %vm239, %v224
    %242 = vst.msk [vmem:[%s4 + $0x8] sm:$0xf] %vm239, %v225
    %243 = vst.msk [vmem:[%s4 + $0xc] sm:$0xf] %vm239, %v226
    %244 = vst.msk [vmem:[%s4 + $0x10] sm:$0xf] %vm239, %v227
    %245 = vst.msk [vmem:[%s4 + $0x14] sm:$0xf] %vm239, %v228
    %246 = vst.msk [vmem:[%s4 + $0x18] sm:$0xf] %vm239, %v229
    %247 = vst.msk [vmem:[%s4 + $0x1c] sm:$0xf] %vm239, %v230
    %248 = vst.msk [vmem:[%s4 + $0x20] sm:$0xf] %vm239, %v231
    %249 = vst.msk [vmem:[%s4 + $0x24] sm:$0xf] %vm239, %v232
    %250 = vst.msk [vmem:[%s4 + $0x28] sm:$0xf] %vm239, %v233
    %251 = vst.msk [vmem:[%s4 + $0x2c] sm:$0xf] %vm239, %v234
    %252 = vst.msk [vmem:[%s4 + $0x30] sm:$0xf] %vm239, %v235
    %253 = vst.msk [vmem:[%s4 + $0x34] sm:$0xf] %vm239, %v236
    %254 = vst.msk [vmem:[%s4 + $0x38] sm:$0xf] %vm239, %v237
    %255 = vst.msk [vmem:[%s4 + $0x3c] sm:$0xf] %vm239, %v238
    %vm256 = vcmask 130048
    %v257 = vsel %vm256, %v184, 0.0
    %v258 = vsel %vm256, %v186, 0.0
    %v259 = vadd.f32 %v257, %v258
    %v260 = vsel %vm256, %v189, 0.0
    %v261 = vadd.f32 %v259, %v260
    %v262 = vsel %vm256, %v191, 0.0
    %v263 = vadd.f32 %v261, %v262
    %v264 = vsel %vm256, %v194, 0.0
    %v265 = vadd.f32 %v263, %v264
    %v266 = vsel %vm256, %v196, 0.0
    %v267 = vadd.f32 %v265, %v266
    %v268 = vsel %vm256, %v199, 0.0
    %v269 = vadd.f32 %v267, %v268
    %v270 = vsel %vm256, %v201, 0.0
    %v271 = vadd.f32 %v269, %v270
    %v272 = vsel %vm256, %v204, 0.0
    %v273 = vadd.f32 %v271, %v272
    %v274 = vsel %vm256, %v206, 0.0
    %v275 = vadd.f32 %v273, %v274
    %v276 = vsel %vm256, %v209, 0.0
    %v277 = vadd.f32 %v275, %v276
    %v278 = vsel %vm256, %v211, 0.0
    %v279 = vadd.f32 %v277, %v278
    %v280 = vsel %vm256, %v214, 0.0
    %v281 = vadd.f32 %v279, %v280
    %v282 = vsel %vm256, %v216, 0.0
    %v283 = vadd.f32 %v281, %v282
    %v284 = vsel %vm256, %v219, 0.0
    %v285 = vadd.f32 %v283, %v284
    %v286 = vsel %vm256, %v221, 0.0
    %v287 = vadd.f32 %v285, %v286
    %v288 = vrot.slane %v287, 4
    %v289 = vadd.f32 %v287, %v288
    %v290 = vrot.slane %v289, 2
    %v291 = vadd.f32 %v289, %v290
    %v292 = vrot.slane %v291, 1
    %v293 = vadd.f32 %v291, %v292
    %vm294 = vcmask 122880
    %295 = vst.msk [vmem:[%s5] sm:$0x1] %vm294, %v293
    %v296 = vmul.f32 %v184, %v184
    %v297 = vmul.f32 %v186, %v186
    %v298 = vmul.f32 %v189, %v189
    %v299 = vmul.f32 %v191, %v191
    %v300 = vmul.f32 %v194, %v194
    %v301 = vmul.f32 %v196, %v196
    %v302 = vmul.f32 %v199, %v199
    %v303 = vmul.f32 %v201, %v201
    %v304 = vmul.f32 %v204, %v204
    %v305 = vmul.f32 %v206, %v206
    %v306 = vmul.f32 %v209, %v209
    %v307 = vmul.f32 %v211, %v211
    %v308 = vmul.f32 %v214, %v214
    %v309 = vmul.f32 %v216, %v216
    %v310 = vmul.f32 %v219, %v219
    %v311 = vmul.f32 %v221, %v221
    %v312 = vsel %vm256, %v296, 0.0
    %v313 = vsel %vm256, %v297, 0.0
    %v314 = vadd.f32 %v312, %v313
    %v315 = vsel %vm256, %v298, 0.0
    %v316 = vadd.f32 %v314, %v315
    %v317 = vsel %vm256, %v299, 0.0
    %v318 = vadd.f32 %v316, %v317
    %v319 = vsel %vm256, %v300, 0.0
    %v320 = vadd.f32 %v318, %v319
    %v321 = vsel %vm256, %v301, 0.0
    %v322 = vadd.f32 %v320, %v321
    %v323 = vsel %vm256, %v302, 0.0
    %v324 = vadd.f32 %v322, %v323
    %v325 = vsel %vm256, %v303, 0.0
    %v326 = vadd.f32 %v324, %v325
    %v327 = vsel %vm256, %v304, 0.0
    %v328 = vadd.f32 %v326, %v327
    %v329 = vsel %vm256, %v305, 0.0
    %v330 = vadd.f32 %v328, %v329
    %v331 = vsel %vm256, %v306, 0.0
    %v332 = vadd.f32 %v330, %v331
    %v333 = vsel %vm256, %v307, 0.0
    %v334 = vadd.f32 %v332, %v333
    %v335 = vsel %vm256, %v308, 0.0
    %v336 = vadd.f32 %v334, %v335
    %v337 = vsel %vm256, %v309, 0.0
    %v338 = vadd.f32 %v336, %v337
    %v339 = vsel %vm256, %v310, 0.0
    %v340 = vadd.f32 %v338, %v339
    %v341 = vsel %vm256, %v311, 0.0
    %v342 = vadd.f32 %v340, %v341
    %v343 = vrot.slane %v342, 4
    %v344 = vadd.f32 %v342, %v343
    %v345 = vrot.slane %v344, 2
    %v346 = vadd.f32 %v344, %v345
    %v347 = vrot.slane %v346, 1
    %v348 = vadd.f32 %v346, %v347
    %349 = vst.msk [vmem:[%s6] sm:$0x1] %vm294, %v348
    // Predicated region
    $region22: #{_lambda_.11} parent=1 // pred_check
      _
    $region23: #{_lambda_.11} parent=1 // pred_check_branch
      %351 = sbr.rel (0) target = $region25
    $region24: #{_lambda_.11} parent=1 // pred_region
      _
    $region25: #{_lambda_.11} parent=1 // pred_fallthru
      _
    // Predicated region
    $region26: #{_lambda_.11} parent=1 // pred_check
      _
    $region27: #{_lambda_.11} parent=1 // pred_check_branch
      %353 = sbr.rel (0) target = $region29
    $region28: #{_lambda_.11} parent=1 // pred_region
      _
    $region29: #{_lambda_.11} parent=1 // pred_fallthru
      _
    // Predicated region
    $region30: #{_lambda_.11} parent=1 // pred_check
      _
    $region31: #{_lambda_.11} parent=1 // pred_check_branch
      %355 = sbr.rel (0) target = $region33
    $region32: #{_lambda_.11} parent=1 // pred_region
      _
    $region33: #{_lambda_.11} parent=1 // pred_fallthru
      _
    // Predicated region
    $region34: #{_lambda_.11} parent=1 // pred_check
      _
    $region35: #{_lambda_.11} parent=1 // pred_check_branch
      %357 = sbr.rel (0) target = $region37
    $region36: #{_lambda_.11} parent=1 // pred_region
      _
    $region37: #{_lambda_.11} parent=1 // pred_fallthru
      _
    // Predicated region
    $region38: #{_lambda_.11} parent=1 // pred_check
      _
    $region39: #{_lambda_.11} parent=1 // pred_check_branch
      %359 = sbr.rel (0) target = $region41
    $region40: #{_lambda_.11} parent=1 // pred_region
      _
    $region41: #{_lambda_.11} parent=1 // pred_fallthru
      _
    // Predicated region
    $region42: #{_lambda_.11} parent=1 // pred_check
      _
    $region43: #{_lambda_.11} parent=1 // pred_check_branch
      %361 = sbr.rel (0) target = $region45
    $region44: #{_lambda_.11} parent=1 // pred_region
      _
    $region45: #{_lambda_.11} parent=1 // pred_fallthru
      _
    %362 = vsyncpa [#allocation3], 1

// kernel: _lambda_.13
$region0: #{_lambda_.13}
  #allocation0 [shape = 'u32[]', space=smem, size = 0x4, offset = 0x4, fixed_abs, tag = 'smem constant byte address 0x4 - core index']
  #allocation1 [shape = 'u32[72,128]{1,0:T(1,128)}', space=vmem, size = 0x9000, scoped, tag = 'internal scratch']
  %s0 = inlined_call_operand.vmem [shape: bf16[128,16], index: 0, kind: input, shape index: {}]
  %s1 = inlined_call_operand.vmem [shape: f32[1,16], index: 1, kind: input, shape index: {}]
  %s2 = inlined_call_operand.vmem [shape: f32[1,16], index: 2, kind: input, shape index: {}]
  %s3 = inlined_call_operand.vmem [shape: bf16[16,64], index: 3, kind: input, shape index: {}]
  %s4 = inlined_call_operand.vmem [shape: f32[128,64], index: 4, kind: input, shape index: {}]
  %s5 = inlined_call_operand.hbm [shape: f32[128,64], index: 5, kind: output, shape index: {0}]
  %s6 = inlined_call_operand.hbm [shape: f32[1,1,64], index: 6, kind: output, shape index: {1}]
  %s7 = inlined_call_operand.hbm [shape: f32[1,1,64], index: 7, kind: output, shape index: {2}]
  %8 = xla_tuple %s5, %s6, %s7
  %s9 = sld [smem:[#allocation0]]
  $region46: #{_lambda_.13} parent=0
    _
  %s11 = ssub.s32 1, %s9
  %s12 = scalar_select 0, %s11, %s9
  $region1: #{_lambda_.13} parent=0
    #allocation2 [shape = 'u8[65536]{0}', space=vmem, size = 0x10000, scoped, tag = 'output window, operand 0, single buffered']
    #allocation3 [shape = 's32[1]{0}', space=sflag, size = 0x4, scoped, tag = 'scoped memory for _lambda_.13']
    #allocation4 [shape = 'u8[512]{0}', space=vmem, size = 0x400, scoped, tag = 'output window, operand 1, single buffered']
    #allocation5 [shape = 's32[1]{0}', space=sflag, size = 0x4, scoped, tag = 'scoped memory for _lambda_.13']
    #allocation6 [shape = 'u8[512]{0}', space=vmem, size = 0x400, scoped, tag = 'output window, operand 2, single buffered']
    %13 = vsyncpa [#allocation3], 0
    %14 = vsyncpa [#allocation5], 0
    // Predicated region
    $region2: #{_lambda_.13} parent=1 // pred_check
      _
    $region3: #{_lambda_.13} parent=1 // pred_check_branch
      %16 = sbr.rel (0) target = $region5
    $region4: #{_lambda_.13} parent=1 // pred_region
      _
    $region5: #{_lambda_.13} parent=1 // pred_fallthru
      _
    // Predicated region
    $region6: #{_lambda_.13} parent=1 // pred_check
      _
    $region7: #{_lambda_.13} parent=1 // pred_check_branch
      %18 = sbr.rel (0) target = $region9
    $region8: #{_lambda_.13} parent=1 // pred_region
      _
    $region9: #{_lambda_.13} parent=1 // pred_fallthru
      _
    // Predicated region
    $region10: #{_lambda_.13} parent=1 // pred_check
      _
    $region11: #{_lambda_.13} parent=1 // pred_check_branch
      %20 = sbr.rel (0) target = $region13
    $region12: #{_lambda_.13} parent=1 // pred_region
      _
    $region13: #{_lambda_.13} parent=1 // pred_fallthru
      _
    // Predicated region
    $region14: #{_lambda_.13} parent=1 // pred_check
      _
    $region15: #{_lambda_.13} parent=1 // pred_check_branch
      %22 = sbr.rel (0) target = $region17
    $region16: #{_lambda_.13} parent=1 // pred_region
      _
    $region17: #{_lambda_.13} parent=1 // pred_fallthru
      _
    // Predicated region
    $region18: #{_lambda_.13} parent=1 // pred_check
      _
    $region19: #{_lambda_.13} parent=1 // pred_check_branch
      %24 = sbr.rel (0) target = $region21
    $region20: #{_lambda_.13} parent=1 // pred_region
      _
    $region21: #{_lambda_.13} parent=1 // pred_fallthru
      _
    %v26 = vld [vmem:[%s0] sm:$0xf]
    %v27 = vld [vmem:[%s0 + $0x4] sm:$0xf]
    %v28 = vld [vmem:[%s0 + $0x8] sm:$0xf]
    %v29 = vld [vmem:[%s0 + $0xc] sm:$0xf]
    %v30 = vld [vmem:[%s0 + $0x10] sm:$0xf]
    %v31 = vld [vmem:[%s0 + $0x14] sm:$0xf]
    %v32 = vld [vmem:[%s0 + $0x18] sm:$0xf]
    %v33 = vld [vmem:[%s0 + $0x1c] sm:$0xf]
    %v34 = vld [vmem:[%s0 + $0x20] sm:$0xf]
    %v35 = vld [vmem:[%s0 + $0x24] sm:$0xf]
    %v36 = vld [vmem:[%s0 + $0x28] sm:$0xf]
    %v37 = vld [vmem:[%s0 + $0x2c] sm:$0xf]
    %v38 = vld [vmem:[%s0 + $0x30] sm:$0xf]
    %v39 = vld [vmem:[%s0 + $0x34] sm:$0xf]
    %v40 = vld [vmem:[%s0 + $0x38] sm:$0xf]
    %v41 = vld [vmem:[%s0 + $0x3c] sm:$0xf]
    %v42 = vunpack.c.l.bf16 %v26
    %v43 = vunpack.c.l.bf16 %v27
    %v44 = vunpack.c.l.bf16 %v28
    %v45 = vunpack.c.l.bf16 %v29
    %v46 = vunpack.c.l.bf16 %v30
    %v47 = vunpack.c.l.bf16 %v31
    %v48 = vunpack.c.l.bf16 %v32
    %v49 = vunpack.c.l.bf16 %v33
    %v50 = vunpack.c.l.bf16 %v34
    %v51 = vunpack.c.l.bf16 %v35
    %v52 = vunpack.c.l.bf16 %v36
    %v53 = vunpack.c.l.bf16 %v37
    %v54 = vunpack.c.l.bf16 %v38
    %v55 = vunpack.c.l.bf16 %v39
    %v56 = vunpack.c.l.bf16 %v40
    %v57 = vunpack.c.l.bf16 %v41
    %v58 = vld [vmem:[%s1] sm:$0x1]
    %v60 = vperm.slane %v58, 0
    %v62 = vmul.f32 %v42, %v60
    %v63 = vmul.f32 %v43, %v60
    %v64 = vmul.f32 %v44, %v60
    %v65 = vmul.f32 %v45, %v60
    %v66 = vmul.f32 %v46, %v60
    %v67 = vmul.f32 %v47, %v60
    %v68 = vmul.f32 %v48, %v60
    %v69 = vmul.f32 %v49, %v60
    %v70 = vmul.f32 %v50, %v60
    %v71 = vmul.f32 %v51, %v60
    %v72 = vmul.f32 %v52, %v60
    %v73 = vmul.f32 %v53, %v60
    %v74 = vmul.f32 %v54, %v60
    %v75 = vmul.f32 %v55, %v60
    %v76 = vmul.f32 %v56, %v60
    %v77 = vmul.f32 %v57, %v60
    %v78 = vld [vmem:[%s2] sm:$0x1]
    %v80 = vperm.slane %v78, 0
    %v82 = vadd.f32 %v62, %v80
    %v83 = vadd.f32 %v63, %v80
    %v84 = vadd.f32 %v64, %v80
    %v85 = vadd.f32 %v65, %v80
    %v86 = vadd.f32 %v66, %v80
    %v87 = vadd.f32 %v67, %v80
    %v88 = vadd.f32 %v68, %v80
    %v89 = vadd.f32 %v69, %v80
    %v90 = vadd.f32 %v70, %v80
    %v91 = vadd.f32 %v71, %v80
    %v92 = vadd.f32 %v72, %v80
    %v93 = vadd.f32 %v73, %v80
    %v94 = vadd.f32 %v74, %v80
    %v95 = vadd.f32 %v75, %v80
    %v96 = vadd.f32 %v76, %v80
    %v97 = vadd.f32 %v77, %v80
    %v98 = vmax.f32 %v82, 0.0
    %v99 = vmax.f32 %v83, 0.0
    %v100 = vmax.f32 %v84, 0.0
    %v101 = vmax.f32 %v85, 0.0
    %v102 = vmax.f32 %v86, 0.0
    %v103 = vmax.f32 %v87, 0.0
    %v104 = vmax.f32 %v88, 0.0
    %v105 = vmax.f32 %v89, 0.0
    %v106 = vmax.f32 %v90, 0.0
    %v107 = vmax.f32 %v91, 0.0
    %v108 = vmax.f32 %v92, 0.0
    %v109 = vmax.f32 %v93, 0.0
    %v110 = vmax.f32 %v94, 0.0
    %v111 = vmax.f32 %v95, 0.0
    %v112 = vmax.f32 %v96, 0.0
    %v113 = vmax.f32 %v97, 0.0
    %v114 = vpack.c.bf16 %v99, %v98
    %v115 = vpack.c.bf16 %v101, %v100
    %v116 = vpack.c.bf16 %v103, %v102
    %v117 = vpack.c.bf16 %v105, %v104
    %v118 = vpack.c.bf16 %v107, %v106
    %v119 = vpack.c.bf16 %v109, %v108
    %v120 = vpack.c.bf16 %v111, %v110
    %v121 = vpack.c.bf16 %v113, %v112
    %v122 = vld [vmem:[%s3] sm:$0xf]
    %v123 = vld [vmem:[%s3 + $0x4] sm:$0xf]
    %v124 = vld [vmem:[%s4] sm:$0xff]
    %v125 = vld [vmem:[%s4 + $0x8] sm:$0xff]
    %v126 = vld [vmem:[%s4 + $0x10] sm:$0xff]
    %v127 = vld [vmem:[%s4 + $0x18] sm:$0xff]
    %v128 = vld [vmem:[%s4 + $0x20] sm:$0xff]
    %v129 = vld [vmem:[%s4 + $0x28] sm:$0xff]
    %v130 = vld [vmem:[%s4 + $0x30] sm:$0xff]
    %v131 = vld [vmem:[%s4 + $0x38] sm:$0xff]
    %v132 = vld [vmem:[%s4 + $0x40] sm:$0xff]
    %v133 = vld [vmem:[%s4 + $0x48] sm:$0xff]
    %v134 = vld [vmem:[%s4 + $0x50] sm:$0xff]
    %v135 = vld [vmem:[%s4 + $0x58] sm:$0xff]
    %v136 = vld [vmem:[%s4 + $0x60] sm:$0xff]
    %v137 = vld [vmem:[%s4 + $0x68] sm:$0xff]
    %v138 = vld [vmem:[%s4 + $0x70] sm:$0xff]
    %v139 = vld [vmem:[%s4 + $0x78] sm:$0xff]
    %v142 = vunpack.c.l.b16 %v122
    %v143 = vunpack.c.l.b16 %v123
    %v144 = vpack.c.b16 %v143, %v142
    %vm146 = vcmask 130048
    %v148 = vsel %vm146, %v114, 0
    %v151 = vsel %vm146, %v115, 0
    %v154 = vsel %vm146, %v116, 0
    %v157 = vsel %vm146, %v117, 0
    %v160 = vsel %vm146, %v118, 0
    %v163 = vsel %vm146, %v119, 0
    %v166 = vsel %vm146, %v120, 0
    %v169 = vsel %vm146, %v121, 0
    %171 = vmatpush.bf16.msra.mxu0 0
    %172 = vmatpush.bf16.msra.mxu0 0
    %173 = vmatpush.bf16.msra.mxu0 0
    %174 = vmatpush.bf16.msra.mxu0 0
    %175 = vmatpush.bf16.msra.mxu0 0
    %176 = vmatpush.bf16.msra.mxu0 0
    %177 = vmatpush.bf16.msra.mxu0 0
    %178 = vmatpush.bf16.msra.mxu0 %v144
    %179 = vmatmul.bf16.gmra.mxu0 %v148
    %v180 = vpop.f32.mrf.mxu0
    %v181 = vadd.f32 %v124, %v180
    %v182 = vpop.f32.mrf.mxu0
    %v183 = vadd.f32 %v125, %v182
    %184 = vmatmul.bf16.gmra.mxu0 %v151
    %v185 = vpop.f32.mrf.mxu0
    %v186 = vadd.f32 %v126, %v185
    %v187 = vpop.f32.mrf.mxu0
    %v188 = vadd.f32 %v127, %v187
    %189 = vmatmul.bf16.gmra.mxu0 %v154
    %v190 = vpop.f32.mrf.mxu0
    %v191 = vadd.f32 %v128, %v190
    %v192 = vpop.f32.mrf.mxu0
    %v193 = vadd.f32 %v129, %v192
    %194 = vmatmul.bf16.gmra.mxu0 %v157
    %v195 = vpop.f32.mrf.mxu0
    %v196 = vadd.f32 %v130, %v195
    %v197 = vpop.f32.mrf.mxu0
    %v198 = vadd.f32 %v131, %v197
    %199 = vmatmul.bf16.gmra.mxu0 %v160
    %v200 = vpop.f32.mrf.mxu0
    %v201 = vadd.f32 %v132, %v200
    %v202 = vpop.f32.mrf.mxu0
    %v203 = vadd.f32 %v133, %v202
    %204 = vmatmul.bf16.gmra.mxu0 %v163
    %v205 = vpop.f32.mrf.mxu0
    %v206 = vadd.f32 %v134, %v205
    %v207 = vpop.f32.mrf.mxu0
    %v208 = vadd.f32 %v135, %v207
    %209 = vmatmul.bf16.gmra.mxu0 %v166
    %v210 = vpop.f32.mrf.mxu0
    %v211 = vadd.f32 %v136, %v210
    %v212 = vpop.f32.mrf.mxu0
    %v213 = vadd.f32 %v137, %v212
    %214 = vmatmul.bf16.gmra.mxu0 %v169
    %v215 = vpop.f32.mrf.mxu0
    %v216 = vadd.f32 %v138, %v215
    %v217 = vpop.f32.mrf.mxu0
    %v218 = vadd.f32 %v139, %v217
    %219 = vdwg.mxu0
    %vm220 = vcmask 523264
    %221 = vst.msk [vmem:[#allocation2] sm:$0xff] %vm220, %v181
    %222 = vst.msk [vmem:[#allocation2 + $0x8] sm:$0xff] %vm220, %v183
    %223 = vst.msk [vmem:[#allocation2 + $0x10] sm:$0xff] %vm220, %v186
    %224 = vst.msk [vmem:[#allocation2 + $0x18] sm:$0xff] %vm220, %v188
    %225 = vst.msk [vmem:[#allocation2 + $0x20] sm:$0xff] %vm220, %v191
    %226 = vst.msk [vmem:[#allocation2 + $0x28] sm:$0xff] %vm220, %v193
    %227 = vst.msk [vmem:[#allocation2 + $0x30] sm:$0xff] %vm220, %v196
    %228 = vst.msk [vmem:[#allocation2 + $0x38] sm:$0xff] %vm220, %v198
    %229 = vst.msk [vmem:[#allocation2 + $0x40] sm:$0xff] %vm220, %v201
    %230 = vst.msk [vmem:[#allocation2 + $0x48] sm:$0xff] %vm220, %v203
    %231 = vst.msk [vmem:[#allocation2 + $0x50] sm:$0xff] %vm220, %v206
    %232 = vst.msk [vmem:[#allocation2 + $0x58] sm:$0xff] %vm220, %v208
    %233 = vst.msk [vmem:[#allocation2 + $0x60] sm:$0xff] %vm220, %v211
    %234 = vst.msk [vmem:[#allocation2 + $0x68] sm:$0xff] %vm220, %v213
    %235 = vst.msk [vmem:[#allocation2 + $0x70] sm:$0xff] %vm220, %v216
    %236 = vst.msk [vmem:[#allocation2 + $0x78] sm:$0xff] %vm220, %v218
    %v237 = vsel %vm220, %v181, 0.0
    %v238 = vsel %vm220, %v183, 0.0
    %v239 = vadd.f32 %v237, %v238
    %v240 = vsel %vm220, %v186, 0.0
    %v241 = vadd.f32 %v239, %v240
    %v242 = vsel %vm220, %v188, 0.0
    %v243 = vadd.f32 %v241, %v242
    %v244 = vsel %vm220, %v191, 0.0
    %v245 = vadd.f32 %v243, %v244
    %v246 = vsel %vm220, %v193, 0.0
    %v247 = vadd.f32 %v245, %v246
    %v248 = vsel %vm220, %v196, 0.0
    %v249 = vadd.f32 %v247, %v248
    %v250 = vsel %vm220, %v198, 0.0
    %v251 = vadd.f32 %v249, %v250
    %v252 = vsel %vm220, %v201, 0.0
    %v253 = vadd.f32 %v251, %v252
    %v254 = vsel %vm220, %v203, 0.0
    %v255 = vadd.f32 %v253, %v254
    %v256 = vsel %vm220, %v206, 0.0
    %v257 = vadd.f32 %v255, %v256
    %v258 = vsel %vm220, %v208, 0.0
    %v259 = vadd.f32 %v257, %v258
    %v260 = vsel %vm220, %v211, 0.0
    %v261 = vadd.f32 %v259, %v260
    %v262 = vsel %vm220, %v213, 0.0
    %v263 = vadd.f32 %v261, %v262
    %v264 = vsel %vm220, %v216, 0.0
    %v265 = vadd.f32 %v263, %v264
    %v266 = vsel %vm220, %v218, 0.0
    %v267 = vadd.f32 %v265, %v266
    %v268 = vrot.slane %v267, 4
    %v269 = vadd.f32 %v267, %v268
    %v270 = vrot.slane %v269, 2
    %v271 = vadd.f32 %v269, %v270
    %v272 = vrot.slane %v271, 1
    %v273 = vadd.f32 %v271, %v272
    %vm274 = vcmask 516096
    %275 = vst.msk [vmem:[#allocation4] sm:$0x1] %vm274, %v273
    %v276 = vmul.f32 %v181, %v181
    %v277 = vmul.f32 %v183, %v183
    %v278 = vmul.f32 %v186, %v186
    %v279 = vmul.f32 %v188, %v188
    %v280 = vmul.f32 %v191, %v191
    %v281 = vmul.f32 %v193, %v193
    %v282 = vmul.f32 %v196, %v196
    %v283 = vmul.f32 %v198, %v198
    %v284 = vmul.f32 %v201, %v201
    %v285 = vmul.f32 %v203, %v203
    %v286 = vmul.f32 %v206, %v206
    %v287 = vmul.f32 %v208, %v208
    %v288 = vmul.f32 %v211, %v211
    %v289 = vmul.f32 %v213, %v213
    %v290 = vmul.f32 %v216, %v216
    %v291 = vmul.f32 %v218, %v218
    %v292 = vsel %vm220, %v276, 0.0
    %v293 = vsel %vm220, %v277, 0.0
    %v294 = vadd.f32 %v292, %v293
    %v295 = vsel %vm220, %v278, 0.0
    %v296 = vadd.f32 %v294, %v295
    %v297 = vsel %vm220, %v279, 0.0
    %v298 = vadd.f32 %v296, %v297
    %v299 = vsel %vm220, %v280, 0.0
    %v300 = vadd.f32 %v298, %v299
    %v301 = vsel %vm220, %v281, 0.0
    %v302 = vadd.f32 %v300, %v301
    %v303 = vsel %vm220, %v282, 0.0
    %v304 = vadd.f32 %v302, %v303
    %v305 = vsel %vm220, %v283, 0.0
    %v306 = vadd.f32 %v304, %v305
    %v307 = vsel %vm220, %v284, 0.0
    %v308 = vadd.f32 %v306, %v307
    %v309 = vsel %vm220, %v285, 0.0
    %v310 = vadd.f32 %v308, %v309
    %v311 = vsel %vm220, %v286, 0.0
    %v312 = vadd.f32 %v310, %v311
    %v313 = vsel %vm220, %v287, 0.0
    %v314 = vadd.f32 %v312, %v313
    %v315 = vsel %vm220, %v288, 0.0
    %v316 = vadd.f32 %v314, %v315
    %v317 = vsel %vm220, %v289, 0.0
    %v318 = vadd.f32 %v316, %v317
    %v319 = vsel %vm220, %v290, 0.0
    %v320 = vadd.f32 %v318, %v319
    %v321 = vsel %vm220, %v291, 0.0
    %v322 = vadd.f32 %v320, %v321
    %v323 = vrot.slane %v322, 4
    %v324 = vadd.f32 %v322, %v323
    %v325 = vrot.slane %v324, 2
    %v326 = vadd.f32 %v324, %v325
    %v327 = vrot.slane %v326, 1
    %v328 = vadd.f32 %v326, %v327
    %329 = vst.msk [vmem:[#allocation6] sm:$0x1] %vm274, %v328
    // Predicated region
    $region22: #{_lambda_.13} parent=1 // pred_check
      _
    $region23: #{_lambda_.13} parent=1 // pred_check_branch
      %331 = sbr.rel (0) target = $region25
    $region24: #{_lambda_.13} parent=1 // pred_region
      %333 = vsyncadd [#allocation3], 0
      %s334 = sshll.u32 [#allocation2], 4
      %s335 = int_to_ptr.vmem [resolvable:$true] %s334
      %s336 = sshll.u32 %s5, 4
      %s337 = int_to_ptr.hbm [resolvable:$true] %s336
      %342 = dma.vmem_to_hbm [thread:$0]  %s335, 2048, %s337, [#allocation3], 128, 128, 8
    $region25: #{_lambda_.13} parent=1 // pred_fallthru
      _
    // Predicated region
    $region26: #{_lambda_.13} parent=1 // pred_check
      _
    $region27: #{_lambda_.13} parent=1 // pred_check_branch
      %344 = sbr.rel (0) target = $region29
    $region28: #{_lambda_.13} parent=1 // pred_region
      %346 = vsyncadd [#allocation5], 0
      %s348 = sshll.u32 [#allocation4], 4
      %s349 = int_to_ptr.vmem [resolvable:$true] %s348
      %s350 = sshll.u32 %s6, 4
      %s351 = int_to_ptr.hbm [resolvable:$true] %s350
      %353 = dma.vmem_to_hbm [thread:$0]  %s349, 16, %s351, [#allocation5]
    $region29: #{_lambda_.13} parent=1 // pred_fallthru
      _
    // Predicated region
    $region30: #{_lambda_.13} parent=1 // pred_check
      _
    $region31: #{_lambda_.13} parent=1 // pred_check_branch
      %355 = sbr.rel (0) target = $region33
    $region32: #{_lambda_.13} parent=1 // pred_region
      %357 = vsyncadd [#allocation5], 0
      %s359 = sshll.u32 [#allocation6], 4
      %s360 = int_to_ptr.vmem [resolvable:$true] %s359
      %s361 = sshll.u32 %s7, 4
      %s362 = int_to_ptr.hbm [resolvable:$true] %s361
      %364 = dma.vmem_to_hbm [thread:$0]  %s360, 16, %s362, [#allocation5]
    $region33: #{_lambda_.13} parent=1 // pred_fallthru
      _
    // Predicated region
    $region34: #{_lambda_.13} parent=1 // pred_check
      _
    $region35: #{_lambda_.13} parent=1 // pred_check_branch
      %366 = sbr.rel (0) target = $region37
    $region36: #{_lambda_.13} parent=1 // pred_region
      %368 = dma.done [#allocation3], 2048
    $region37: #{_lambda_.13} parent=1 // pred_fallthru
      _
    // Predicated region
    $region38: #{_lambda_.13} parent=1 // pred_check
      _
    $region39: #{_lambda_.13} parent=1 // pred_check_branch
      %370 = sbr.rel (0) target = $region41
    $region40: #{_lambda_.13} parent=1 // pred_region
      %372 = dma.done [#allocation5], 16
    $region41: #{_lambda_.13} parent=1 // pred_fallthru
      _
    // Predicated region
    $region42: #{_lambda_.13} parent=1 // pred_check
      _
    $region43: #{_lambda_.13} parent=1 // pred_check_branch
      %374 = sbr.rel (0) target = $region45
    $region44: #{_lambda_.13} parent=1 // pred_region
      %376 = dma.done [#allocation5], 16
    $region45: #{_lambda_.13} parent=1 // pred_fallthru
      _
    %377 = vsyncpa [#allocation3], 1
    %378 = vsyncpa [#allocation5], 1

// kernel: _lambda_.9
$region0: #{_lambda_.9}
  #allocation0 [shape = 'u32[]', space=smem, size = 0x4, offset = 0x4, fixed_abs, tag = 'smem constant byte address 0x4 - core index']
  #allocation1 [shape = 'u32[72,128]{1,0:T(1,128)}', space=vmem, size = 0x9000, scoped, tag = 'internal scratch']
  #allocation2 [shape = 'bf16[2,10,10,16]{3,2,1,0:T(8,128)(2,1)}', space=vmem, size = 0x14000, scoped, tag = 'scratch operand']
  #allocation3 [shape = 'bf16[128,144]{1,0:T(8,128)(2,1)}', space=vmem, size = 0x10000, scoped, tag = 'scratch operand']
  %s0 = inlined_call_operand.vmem [shape: bf16[2,8,8,16], index: 0, kind: input, shape index: {}]
  %s1 = inlined_call_operand.vmem [shape: f32[1,16], index: 1, kind: input, shape index: {}]
  %s2 = inlined_call_operand.vmem [shape: f32[1,16], index: 2, kind: input, shape index: {}]
  %s3 = inlined_call_operand.hbm [shape: bf16[144,16], index: 3, kind: input, shape index: {}]
  %s4 = inlined_call_operand.vmem [shape: bf16[128,16], index: 4, kind: output, shape index: {0}]
  %s5 = inlined_call_operand.vmem [shape: f32[1,1,16], index: 5, kind: output, shape index: {1}]
  %s6 = inlined_call_operand.vmem [shape: f32[1,1,16], index: 6, kind: output, shape index: {2}]
  %7 = xla_tuple %s4, %s5, %s6
  %s8 = sld [smem:[#allocation0]]
  $region46: #{_lambda_.9} parent=0
    _
  %s10 = ssub.s32 1, %s8
  %s11 = scalar_select 0, %s10, %s8
  $region1: #{_lambda_.9} parent=0
    #allocation4 [shape = 'u8[36864]{0}', space=vmem, size = 0x9000, scoped, tag = 'input window, operand 3, single buffered']
    #allocation5 [shape = 's32[1]{0}', space=sflag, size = 0x4, scoped, tag = 'scoped memory for _lambda_.9']
    %12 = vsyncpa [#allocation5], 0
    // Predicated region
    $region2: #{_lambda_.9} parent=1 // pred_check
      _
    $region3: #{_lambda_.9} parent=1 // pred_check_branch
      %14 = sbr.rel (0) target = $region5
    $region4: #{_lambda_.9} parent=1 // pred_region
      _
    $region5: #{_lambda_.9} parent=1 // pred_fallthru
      _
    // Predicated region
    $region6: #{_lambda_.9} parent=1 // pred_check
      _
    $region7: #{_lambda_.9} parent=1 // pred_check_branch
      %16 = sbr.rel (0) target = $region9
    $region8: #{_lambda_.9} parent=1 // pred_region
      _
    $region9: #{_lambda_.9} parent=1 // pred_fallthru
      _
    // Predicated region
    $region10: #{_lambda_.9} parent=1 // pred_check
      _
    $region11: #{_lambda_.9} parent=1 // pred_check_branch
      %18 = sbr.rel (0) target = $region13
    $region12: #{_lambda_.9} parent=1 // pred_region
      _
    $region13: #{_lambda_.9} parent=1 // pred_fallthru
      _
    // Predicated region
    $region14: #{_lambda_.9} parent=1 // pred_check
      _
    $region15: #{_lambda_.9} parent=1 // pred_check_branch
      %20 = sbr.rel (0) target = $region17
    $region16: #{_lambda_.9} parent=1 // pred_region
      %22 = vsyncadd [#allocation5], 0
      %s23 = sshll.u32 %s3, 4
      %s24 = int_to_ptr.hbm [resolvable:$true] %s23
      %s25 = sshll.u32 [#allocation4], 4
      %s26 = int_to_ptr.vmem [resolvable:$true] %s25
      %31 = dma.hbm_to_vmem [thread:$0]  %s24, 1152, %s26, [#allocation5], 64, 64, 4
    $region17: #{_lambda_.9} parent=1 // pred_fallthru
      _
    // Predicated region
    $region18: #{_lambda_.9} parent=1 // pred_check
      _
    $region19: #{_lambda_.9} parent=1 // pred_check_branch
      %33 = sbr.rel (0) target = $region21
    $region20: #{_lambda_.9} parent=1 // pred_region
      %35 = dma.done [#allocation5], 1152
    $region21: #{_lambda_.9} parent=1 // pred_fallthru
      _
    %vm37 = vcmask 125952
    %38 = vst.msk [vmem:[#allocation2] sm:$0xf] %vm37, 0
    %vm39 = vcmask 122880
    %40 = vst.msk [vmem:[#allocation2 + $0x4] sm:$0x1] %vm39, 0
    %41 = vst.msk [vmem:[#allocation2 + $0x50] sm:$0xf] %vm37, 0
    %42 = vst.msk [vmem:[#allocation2 + $0x54] sm:$0x1] %vm39, 0
    %s43 = scalar_lea.vmem [#allocation2], 72
    %44 = vst.msk [vmem:[%s43] sm:$0xf] %vm37, 0
    %45 = vst.msk [vmem:[%s43 + $0x4] sm:$0x1] %vm39, 0
    %46 = vst.msk [vmem:[%s43 + $0x50] sm:$0xf] %vm37, 0
    %47 = vst.msk [vmem:[%s43 + $0x54] sm:$0x1] %vm39, 0
    %vm48 = vcmask 122880
    %vm49 = vsmask.f32 256
    %vm50 = vmand %vm48, %vm49
    %v51 = vld [vmem:[#allocation2] sm:$0x1]
    %v52 = vsel %vm50, 0, %v51
    %53 = vst [vmem:[#allocation2] sm:$0x1] %v52
    %v54 = vld [vmem:[#allocation2 + $0x8] sm:$0x1]
    %v55 = vsel %vm50, 0, %v54
    %56 = vst [vmem:[#allocation2 + $0x8] sm:$0x1] %v55
    %v57 = vld [vmem:[#allocation2 + $0x10] sm:$0x1]
    %v58 = vsel %vm50, 0, %v57
    %59 = vst [vmem:[#allocation2 + $0x10] sm:$0x1] %v58
    %v60 = vld [vmem:[#allocation2 + $0x18] sm:$0x1]
    %v61 = vsel %vm50, 0, %v60
    %62 = vst [vmem:[#allocation2 + $0x18] sm:$0x1] %v61
    %v63 = vld [vmem:[#allocation2 + $0x20] sm:$0x1]
    %v64 = vsel %vm50, 0, %v63
    %65 = vst [vmem:[#allocation2 + $0x20] sm:$0x1] %v64
    %v66 = vld [vmem:[#allocation2 + $0x28] sm:$0x1]
    %v67 = vsel %vm50, 0, %v66
    %68 = vst [vmem:[#allocation2 + $0x28] sm:$0x1] %v67
    %v69 = vld [vmem:[#allocation2 + $0x30] sm:$0x1]
    %v70 = vsel %vm50, 0, %v69
    %71 = vst [vmem:[#allocation2 + $0x30] sm:$0x1] %v70
    %v72 = vld [vmem:[#allocation2 + $0x38] sm:$0x1]
    %v73 = vsel %vm50, 0, %v72
    %74 = vst [vmem:[#allocation2 + $0x38] sm:$0x1] %v73
    %v75 = vld [vmem:[#allocation2 + $0x40] sm:$0x1]
    %v76 = vsel %vm50, 0, %v75
    %77 = vst [vmem:[#allocation2 + $0x40] sm:$0x1] %v76
    %v78 = vld [vmem:[#allocation2 + $0x48] sm:$0x1]
    %v79 = vsel %vm50, 0, %v78
    %80 = vst [vmem:[#allocation2 + $0x48] sm:$0x1] %v79
    %v81 = vld [vmem:[#allocation2 + $0x50] sm:$0x1]
    %v82 = vsel %vm50, 0, %v81
    %83 = vst [vmem:[#allocation2 + $0x50] sm:$0x1] %v82
    %v84 = vld [vmem:[#allocation2 + $0x58] sm:$0x1]
    %v85 = vsel %vm50, 0, %v84
    %86 = vst [vmem:[#allocation2 + $0x58] sm:$0x1] %v85
    %v87 = vld [vmem:[#allocation2 + $0x60] sm:$0x1]
    %v88 = vsel %vm50, 0, %v87
    %89 = vst [vmem:[#allocation2 + $0x60] sm:$0x1] %v88
    %v90 = vld [vmem:[#allocation2 + $0x68] sm:$0x1]
    %v91 = vsel %vm50, 0, %v90
    %92 = vst [vmem:[#allocation2 + $0x68] sm:$0x1] %v91
    %v93 = vld [vmem:[#allocation2 + $0x70] sm:$0x1]
    %v94 = vsel %vm50, 0, %v93
    %95 = vst [vmem:[#allocation2 + $0x70] sm:$0x1] %v94
    %v96 = vld [vmem:[#allocation2 + $0x78] sm:$0x1]
    %v97 = vsel %vm50, 0, %v96
    %98 = vst [vmem:[#allocation2 + $0x78] sm:$0x1] %v97
    %v99 = vld [vmem:[#allocation2 + $0x80] sm:$0x1]
    %v100 = vsel %vm50, 0, %v99
    %101 = vst [vmem:[#allocation2 + $0x80] sm:$0x1] %v100
    %v102 = vld [vmem:[#allocation2 + $0x88] sm:$0x1]
    %v103 = vsel %vm50, 0, %v102
    %104 = vst [vmem:[#allocation2 + $0x88] sm:$0x1] %v103
    %v105 = vld [vmem:[#allocation2 + $0x90] sm:$0x1]
    %v106 = vsel %vm50, 0, %v105
    %107 = vst [vmem:[#allocation2 + $0x90] sm:$0x1] %v106
    %v108 = vld [vmem:[#allocation2 + $0x98] sm:$0x1]
    %v109 = vsel %vm50, 0, %v108
    %110 = vst [vmem:[#allocation2 + $0x98] sm:$0x1] %v109
    %vm111 = vsmask.f32 7938
    %vm112 = vmand %vm48, %vm111
    %v113 = vld [vmem:[#allocation2 + $0x4] sm:$0x1]
    %v114 = vsel %vm112, 0, %v113
    %115 = vst [vmem:[#allocation2 + $0x4] sm:$0x1] %v114
    %v116 = vld [vmem:[#allocation2 + $0xc] sm:$0x1]
    %v117 = vsel %vm112, 0, %v116
    %118 = vst [vmem:[#allocation2 + $0xc] sm:$0x1] %v117
    %v119 = vld [vmem:[#allocation2 + $0x14] sm:$0x1]
    %v120 = vsel %vm112, 0, %v119
    %121 = vst [vmem:[#allocation2 + $0x14] sm:$0x1] %v120
    %v122 = vld [vmem:[#allocation2 + $0x1c] sm:$0x1]
    %v123 = vsel %vm112, 0, %v122
    %124 = vst [vmem:[#allocation2 + $0x1c] sm:$0x1] %v123
    %v125 = vld [vmem:[#allocation2 + $0x24] sm:$0x1]
    %v126 = vsel %vm112, 0, %v125
    %127 = vst [vmem:[#allocation2 + $0x24] sm:$0x1] %v126
    %v128 = vld [vmem:[#allocation2 + $0x2c] sm:$0x1]
    %v129 = vsel %vm112, 0, %v128
    %130 = vst [vmem:[#allocation2 + $0x2c] sm:$0x1] %v129
    %v131 = vld [vmem:[#allocation2 + $0x34] sm:$0x1]
    %v132 = vsel %vm112, 0, %v131
    %133 = vst [vmem:[#allocation2 + $0x34] sm:$0x1] %v132
    %v134 = vld [vmem:[#allocation2 + $0x3c] sm:$0x1]
    %v135 = vsel %vm112, 0, %v134
    %136 = vst [vmem:[#allocation2 + $0x3c] sm:$0x1] %v135
    %v137 = vld [vmem:[#allocation2 + $0x44] sm:$0x1]
    %v138 = vsel %vm112, 0, %v137
    %139 = vst [vmem:[#allocation2 + $0x44] sm:$0x1] %v138
    %v140 = vld [vmem:[#allocation2 + $0x4c] sm:$0x1]
    %v141 = vsel %vm112, 0, %v140
    %142 = vst [vmem:[#allocation2 + $0x4c] sm:$0x1] %v141
    %v143 = vld [vmem:[#allocation2 + $0x54] sm:$0x1]
    %v144 = vsel %vm112, 0, %v143
    %145 = vst [vmem:[#allocation2 + $0x54] sm:$0x1] %v144
    %v146 = vld [vmem:[#allocation2 + $0x5c] sm:$0x1]
    %v147 = vsel %vm112, 0, %v146
    %148 = vst [vmem:[#allocation2 + $0x5c] sm:$0x1] %v147
    %v149 = vld [vmem:[#allocation2 + $0x64] sm:$0x1]
    %v150 = vsel %vm112, 0, %v149
    %151 = vst [vmem:[#allocation2 + $0x64] sm:$0x1] %v150
    %v152 = vld [vmem:[#allocation2 + $0x6c] sm:$0x1]
    %v153 = vsel %vm112, 0, %v152
    %154 = vst [vmem:[#allocation2 + $0x6c] sm:$0x1] %v153
    %v155 = vld [vmem:[#allocation2 + $0x74] sm:$0x1]
    %v156 = vsel %vm112, 0, %v155
    %157 = vst [vmem:[#allocation2 + $0x74] sm:$0x1] %v156
    %v158 = vld [vmem:[#allocation2 + $0x7c] sm:$0x1]
    %v159 = vsel %vm112, 0, %v158
    %160 = vst [vmem:[#allocation2 + $0x7c] sm:$0x1] %v159
    %v161 = vld [vmem:[#allocation2 + $0x84] sm:$0x1]
    %v162 = vsel %vm112, 0, %v161
    %163 = vst [vmem:[#allocation2 + $0x84] sm:$0x1] %v162
    %v164 = vld [vmem:[#allocation2 + $0x8c] sm:$0x1]
    %v165 = vsel %vm112, 0, %v164
    %166 = vst [vmem:[#allocation2 + $0x8c] sm:$0x1] %v165
    %v167 = vld [vmem:[#allocation2 + $0x94] sm:$0x1]
    %v168 = vsel %vm112, 0, %v167
    %169 = vst [vmem:[#allocation2 + $0x94] sm:$0x1] %v168
    %v170 = vld [vmem:[#allocation2 + $0x9c] sm:$0x1]
    %v171 = vsel %vm112, 0, %v170
    %172 = vst [vmem:[#allocation2 + $0x9c] sm:$0x1] %v171
    %v173 = vld [vmem:[%s1] sm:$0x1]
    %v174 = vld [vmem:[%s2] sm:$0x1]
    %v175 = vld [vmem:[%s0] sm:$0xf]
    %v176 = vld [vmem:[%s0 + $0x4] sm:$0xf]
    %v177 = vld [vmem:[%s0 + $0x8] sm:$0xf]
    %v178 = vld [vmem:[%s0 + $0xc] sm:$0xf]
    %v179 = vld [vmem:[%s0 + $0x10] sm:$0xf]
    %v180 = vld [vmem:[%s0 + $0x14] sm:$0xf]
    %v181 = vld [vmem:[%s0 + $0x18] sm:$0xf]
    %v182 = vld [vmem:[%s0 + $0x1c] sm:$0xf]
    %v183 = vld [vmem:[%s0 + $0x20] sm:$0xf]
    %v184 = vld [vmem:[%s0 + $0x24] sm:$0xf]
    %v185 = vld [vmem:[%s0 + $0x28] sm:$0xf]
    %v186 = vld [vmem:[%s0 + $0x2c] sm:$0xf]
    %v187 = vld [vmem:[%s0 + $0x30] sm:$0xf]
    %v188 = vld [vmem:[%s0 + $0x34] sm:$0xf]
    %v189 = vld [vmem:[%s0 + $0x38] sm:$0xf]
    %v190 = vld [vmem:[%s0 + $0x3c] sm:$0xf]
    %v191 = vunpack.c.l.bf16 %v175
    %v192 = vunpack.c.l.bf16 %v176
    %v193 = vunpack.c.l.bf16 %v177
    %v194 = vunpack.c.l.bf16 %v178
    %v195 = vunpack.c.l.bf16 %v179
    %v196 = vunpack.c.l.bf16 %v180
    %v197 = vunpack.c.l.bf16 %v181
    %v198 = vunpack.c.l.bf16 %v182
    %v199 = vunpack.c.l.bf16 %v183
    %v200 = vunpack.c.l.bf16 %v184
    %v201 = vunpack.c.l.bf16 %v185
    %v202 = vunpack.c.l.bf16 %v186
    %v203 = vunpack.c.l.bf16 %v187
    %v204 = vunpack.c.l.bf16 %v188
    %v205 = vunpack.c.l.bf16 %v189
    %v206 = vunpack.c.l.bf16 %v190
    %v208 = vperm.slane %v173, 0
    %v210 = vmul.f32 %v191, %v208
    %v211 = vmul.f32 %v192, %v208
    %v212 = vmul.f32 %v193, %v208
    %v213 = vmul.f32 %v194, %v208
    %v214 = vmul.f32 %v195, %v208
    %v215 = vmul.f32 %v196, %v208
    %v216 = vmul.f32 %v197, %v208
    %v217 = vmul.f32 %v198, %v208
    %v218 = vmul.f32 %v199, %v208
    %v219 = vmul.f32 %v200, %v208
    %v220 = vmul.f32 %v201, %v208
    %v221 = vmul.f32 %v202, %v208
    %v222 = vmul.f32 %v203, %v208
    %v223 = vmul.f32 %v204, %v208
    %v224 = vmul.f32 %v205, %v208
    %v225 = vmul.f32 %v206, %v208
    %v227 = vperm.slane %v174, 0
    %v229 = vadd.f32 %v210, %v227
    %v230 = vadd.f32 %v211, %v227
    %v231 = vadd.f32 %v212, %v227
    %v232 = vadd.f32 %v213, %v227
    %v233 = vadd.f32 %v214, %v227
    %v234 = vadd.f32 %v215, %v227
    %v235 = vadd.f32 %v216, %v227
    %v236 = vadd.f32 %v217, %v227
    %v237 = vadd.f32 %v218, %v227
    %v238 = vadd.f32 %v219, %v227
    %v239 = vadd.f32 %v220, %v227
    %v240 = vadd.f32 %v221, %v227
    %v241 = vadd.f32 %v222, %v227
    %v242 = vadd.f32 %v223, %v227
    %v243 = vadd.f32 %v224, %v227
    %v244 = vadd.f32 %v225, %v227
    %v245 = vmax.f32 %v229, 0.0
    %v246 = vmax.f32 %v230, 0.0
    %v247 = vmax.f32 %v231, 0.0
    %v248 = vmax.f32 %v232, 0.0
    %v249 = vmax.f32 %v233, 0.0
    %v250 = vmax.f32 %v234, 0.0
    %v251 = vmax.f32 %v235, 0.0
    %v252 = vmax.f32 %v236, 0.0
    %v253 = vmax.f32 %v237, 0.0
    %v254 = vmax.f32 %v238, 0.0
    %v255 = vmax.f32 %v239, 0.0
    %v256 = vmax.f32 %v240, 0.0
    %v257 = vmax.f32 %v241, 0.0
    %v258 = vmax.f32 %v242, 0.0
    %v259 = vmax.f32 %v243, 0.0
    %v260 = vmax.f32 %v244, 0.0
    %v261 = vpack.c.bf16 %v245, %v245
    %v262 = vpack.c.bf16 %v246, %v246
    %v263 = vpack.c.bf16 %v247, %v247
    %v264 = vpack.c.bf16 %v248, %v248
    %v265 = vpack.c.bf16 %v249, %v249
    %v266 = vpack.c.bf16 %v250, %v250
    %v267 = vpack.c.bf16 %v251, %v251
    %v268 = vpack.c.bf16 %v252, %v252
    %v269 = vpack.c.bf16 %v253, %v253
    %v270 = vpack.c.bf16 %v254, %v254
    %v271 = vpack.c.bf16 %v255, %v255
    %v272 = vpack.c.bf16 %v256, %v256
    %v273 = vpack.c.bf16 %v257, %v257
    %v274 = vpack.c.bf16 %v258, %v258
    %v275 = vpack.c.bf16 %v259, %v259
    %v276 = vpack.c.bf16 %v260, %v260
    %v278 = vshrl.u32 %v261, 16
    %v280 = vrot.slane %v278, 7
    %v281 = vshll.u32 %v261, 16
    %v283 = vor.u32 %v280, %v281
    %v284 = vrot.slane %v280, 4
    %v286 = vshrl.u32 %v262, 16
    %v288 = vrot.slane %v286, 7
    %v289 = vshll.u32 %v262, 16
    %v291 = vor.u32 %v288, %v289
    %v292 = vrot.slane %v288, 4
    %v294 = vshrl.u32 %v263, 16
    %v296 = vrot.slane %v294, 7
    %v297 = vshll.u32 %v263, 16
    %v299 = vor.u32 %v296, %v297
    %v300 = vrot.slane %v296, 4
    %v302 = vshrl.u32 %v264, 16
    %v304 = vrot.slane %v302, 7
    %v305 = vshll.u32 %v264, 16
    %v307 = vor.u32 %v304, %v305
    %v308 = vrot.slane %v304, 4
    %v310 = vshrl.u32 %v265, 16
    %v312 = vrot.slane %v310, 7
    %v313 = vshll.u32 %v265, 16
    %v315 = vor.u32 %v312, %v313
    %v316 = vrot.slane %v312, 4
    %v318 = vshrl.u32 %v266, 16
    %v320 = vrot.slane %v318, 7
    %v321 = vshll.u32 %v266, 16
    %v323 = vor.u32 %v320, %v321
    %v324 = vrot.slane %v320, 4
    %v326 = vshrl.u32 %v267, 16
    %v328 = vrot.slane %v326, 7
    %v329 = vshll.u32 %v267, 16
    %v331 = vor.u32 %v328, %v329
    %v332 = vrot.slane %v328, 4
    %v334 = vshrl.u32 %v268, 16
    %v336 = vrot.slane %v334, 7
    %v337 = vshll.u32 %v268, 16
    %v339 = vor.u32 %v336, %v337
    %v340 = vrot.slane %v336, 4
    %v342 = vshrl.u32 %v269, 16
    %v344 = vrot.slane %v342, 7
    %v345 = vshll.u32 %v269, 16
    %v347 = vor.u32 %v344, %v345
    %v348 = vrot.slane %v344, 4
    %v350 = vshrl.u32 %v270, 16
    %v352 = vrot.slane %v350, 7
    %v353 = vshll.u32 %v270, 16
    %v355 = vor.u32 %v352, %v353
    %v356 = vrot.slane %v352, 4
    %v358 = vshrl.u32 %v271, 16
    %v360 = vrot.slane %v358, 7
    %v361 = vshll.u32 %v271, 16
    %v363 = vor.u32 %v360, %v361
    %v364 = vrot.slane %v360, 4
    %v366 = vshrl.u32 %v272, 16
    %v368 = vrot.slane %v366, 7
    %v369 = vshll.u32 %v272, 16
    %v371 = vor.u32 %v368, %v369
    %v372 = vrot.slane %v368, 4
    %v374 = vshrl.u32 %v273, 16
    %v376 = vrot.slane %v374, 7
    %v377 = vshll.u32 %v273, 16
    %v379 = vor.u32 %v376, %v377
    %v380 = vrot.slane %v376, 4
    %v382 = vshrl.u32 %v274, 16
    %v384 = vrot.slane %v382, 7
    %v385 = vshll.u32 %v274, 16
    %v387 = vor.u32 %v384, %v385
    %v388 = vrot.slane %v384, 4
    %v390 = vshrl.u32 %v275, 16
    %v392 = vrot.slane %v390, 7
    %v393 = vshll.u32 %v275, 16
    %v395 = vor.u32 %v392, %v393
    %v396 = vrot.slane %v392, 4
    %v398 = vshrl.u32 %v276, 16
    %v400 = vrot.slane %v398, 7
    %v401 = vshll.u32 %v276, 16
    %v403 = vor.u32 %v400, %v401
    %v404 = vrot.slane %v400, 4
    %s437 = scalar_lea.vmem [#allocation2], 8
    %vm438 = vcmask 125952
    %vm439 = vmand %vm438, %vm111
    %v440 = vld [vmem:[%s437] sm:$0xf]
    %v441 = vsel %vm439, %v283, %v440
    %442 = vst [vmem:[%s437] sm:$0xf] %v441
    %v443 = vld [vmem:[%s437 + $0x4] sm:$0x1]
    %v444 = vsel %vm50, %v284, %v443
    %445 = vst [vmem:[%s437 + $0x4] sm:$0x1] %v444
    %v446 = vld [vmem:[%s437 + $0x8] sm:$0xf]
    %v447 = vsel %vm439, %v291, %v446
    %448 = vst [vmem:[%s437 + $0x8] sm:$0xf] %v447
    %v449 = vld [vmem:[%s437 + $0xc] sm:$0x1]
    %v450 = vsel %vm50, %v292, %v449
    %451 = vst [vmem:[%s437 + $0xc] sm:$0x1] %v450
    %v452 = vld [vmem:[%s437 + $0x10] sm:$0xf]
    %v453 = vsel %vm439, %v299, %v452
    %454 = vst [vmem:[%s437 + $0x10] sm:$0xf] %v453
    %v455 = vld [vmem:[%s437 + $0x14] sm:$0x1]
    %v456 = vsel %vm50, %v300, %v455
    %457 = vst [vmem:[%s437 + $0x14] sm:$0x1] %v456
    %v458 = vld [vmem:[%s437 + $0x18] sm:$0xf]
    %v459 = vsel %vm439, %v307, %v458
    %460 = vst [vmem:[%s437 + $0x18] sm:$0xf] %v459
    %v461 = vld [vmem:[%s437 + $0x1c] sm:$0x1]
    %v462 = vsel %vm50, %v308, %v461
    %463 = vst [vmem:[%s437 + $0x1c] sm:$0x1] %v462
    %v464 = vld [vmem:[%s437 + $0x20] sm:$0xf]
    %v465 = vsel %vm439, %v315, %v464
    %466 = vst [vmem:[%s437 + $0x20] sm:$0xf] %v465
    %v467 = vld [vmem:[%s437 + $0x24] sm:$0x1]
    %v468 = vsel %vm50, %v316, %v467
    %469 = vst [vmem:[%s437 + $0x24] sm:$0x1] %v468
    %v470 = vld [vmem:[%s437 + $0x28] sm:$0xf]
    %v471 = vsel %vm439, %v323, %v470
    %472 = vst [vmem:[%s437 + $0x28] sm:$0xf] %v471
    %v473 = vld [vmem:[%s437 + $0x2c] sm:$0x1]
    %v474 = vsel %vm50, %v324, %v473
    %475 = vst [vmem:[%s437 + $0x2c] sm:$0x1] %v474
    %v476 = vld [vmem:[%s437 + $0x30] sm:$0xf]
    %v477 = vsel %vm439, %v331, %v476
    %478 = vst [vmem:[%s437 + $0x30] sm:$0xf] %v477
    %v479 = vld [vmem:[%s437 + $0x34] sm:$0x1]
    %v480 = vsel %vm50, %v332, %v479
    %481 = vst [vmem:[%s437 + $0x34] sm:$0x1] %v480
    %v482 = vld [vmem:[%s437 + $0x38] sm:$0xf]
    %v483 = vsel %vm439, %v339, %v482
    %484 = vst [vmem:[%s437 + $0x38] sm:$0xf] %v483
    %v485 = vld [vmem:[%s437 + $0x3c] sm:$0x1]
    %v486 = vsel %vm50, %v340, %v485
    %487 = vst [vmem:[%s437 + $0x3c] sm:$0x1] %v486
    %v488 = vld [vmem:[%s437 + $0x50] sm:$0xf]
    %v489 = vsel %vm439, %v347, %v488
    %490 = vst [vmem:[%s437 + $0x50] sm:$0xf] %v489
    %v491 = vld [vmem:[%s437 + $0x54] sm:$0x1]
    %v492 = vsel %vm50, %v348, %v491
    %493 = vst [vmem:[%s437 + $0x54] sm:$0x1] %v492
    %v494 = vld [vmem:[%s437 + $0x58] sm:$0xf]
    %v495 = vsel %vm439, %v355, %v494
    %496 = vst [vmem:[%s437 + $0x58] sm:$0xf] %v495
    %v497 = vld [vmem:[%s437 + $0x5c] sm:$0x1]
    %v498 = vsel %vm50, %v356, %v497
    %499 = vst [vmem:[%s437 + $0x5c] sm:$0x1] %v498
    %v500 = vld [vmem:[%s437 + $0x60] sm:$0xf]
    %v501 = vsel %vm439, %v363, %v500
    %502 = vst [vmem:[%s437 + $0x60] sm:$0xf] %v501
    %v503 = vld [vmem:[%s437 + $0x64] sm:$0x1]
    %v504 = vsel %vm50, %v364, %v503
    %505 = vst [vmem:[%s437 + $0x64] sm:$0x1] %v504
    %v506 = vld [vmem:[%s437 + $0x68] sm:$0xf]
    %v507 = vsel %vm439, %v371, %v506
    %508 = vst [vmem:[%s437 + $0x68] sm:$0xf] %v507
    %v509 = vld [vmem:[%s437 + $0x6c] sm:$0x1]
    %v510 = vsel %vm50, %v372, %v509
    %511 = vst [vmem:[%s437 + $0x6c] sm:$0x1] %v510
    %v512 = vld [vmem:[%s437 + $0x70] sm:$0xf]
    %v513 = vsel %vm439, %v379, %v512
    %514 = vst [vmem:[%s437 + $0x70] sm:$0xf] %v513
    %v515 = vld [vmem:[%s437 + $0x74] sm:$0x1]
    %v516 = vsel %vm50, %v380, %v515
    %517 = vst [vmem:[%s437 + $0x74] sm:$0x1] %v516
    %v518 = vld [vmem:[%s437 + $0x78] sm:$0xf]
    %v519 = vsel %vm439, %v387, %v518
    %520 = vst [vmem:[%s437 + $0x78] sm:$0xf] %v519
    %v521 = vld [vmem:[%s437 + $0x7c] sm:$0x1]
    %v522 = vsel %vm50, %v388, %v521
    %523 = vst [vmem:[%s437 + $0x7c] sm:$0x1] %v522
    %v524 = vld [vmem:[%s437 + $0x80] sm:$0xf]
    %v525 = vsel %vm439, %v395, %v524
    %526 = vst [vmem:[%s437 + $0x80] sm:$0xf] %v525
    %v527 = vld [vmem:[%s437 + $0x84] sm:$0x1]
    %v528 = vsel %vm50, %v396, %v527
    %529 = vst [vmem:[%s437 + $0x84] sm:$0x1] %v528
    %v530 = vld [vmem:[%s437 + $0x88] sm:$0xf]
    %v531 = vsel %vm439, %v403, %v530
    %532 = vst [vmem:[%s437 + $0x88] sm:$0xf] %v531
    %v533 = vld [vmem:[%s437 + $0x8c] sm:$0x1]
    %v534 = vsel %vm50, %v404, %v533
    %535 = vst [vmem:[%s437 + $0x8c] sm:$0x1] %v534
    %v536 = vld [vmem:[#allocation2] sm:$0xf]
    %v537 = vld [vmem:[#allocation2 + $0x8] sm:$0xf]
    %v538 = vld [vmem:[#allocation2 + $0x10] sm:$0xf]
    %v539 = vld [vmem:[#allocation2 + $0x18] sm:$0xf]
    %v540 = vld [vmem:[#allocation2 + $0x20] sm:$0xf]
    %v541 = vld [vmem:[#allocation2 + $0x28] sm:$0xf]
    %v542 = vld [vmem:[#allocation2 + $0x30] sm:$0xf]
    %v543 = vld [vmem:[#allocation2 + $0x38] sm:$0xf]
    %v544 = vld [vmem:[#allocation2 + $0x50] sm:$0xf]
    %v545 = vld [vmem:[#allocation2 + $0x58] sm:$0xf]
    %v546 = vld [vmem:[#allocation2 + $0x60] sm:$0xf]
    %v547 = vld [vmem:[#allocation2 + $0x68] sm:$0xf]
    %v548 = vld [vmem:[#allocation2 + $0x70] sm:$0xf]
    %v549 = vld [vmem:[#allocation2 + $0x78] sm:$0xf]
    %v550 = vld [vmem:[#allocation2 + $0x80] sm:$0xf]
    %v551 = vld [vmem:[#allocation2 + $0x88] sm:$0xf]
    %552 = vst.msk [vmem:[#allocation3] sm:$0xf] %vm37, %v536
    %553 = vst.msk [vmem:[#allocation3 + $0x8] sm:$0xf] %vm37, %v537
    %554 = vst.msk [vmem:[#allocation3 + $0x10] sm:$0xf] %vm37, %v538
    %555 = vst.msk [vmem:[#allocation3 + $0x18] sm:$0xf] %vm37, %v539
    %556 = vst.msk [vmem:[#allocation3 + $0x20] sm:$0xf] %vm37, %v540
    %557 = vst.msk [vmem:[#allocation3 + $0x28] sm:$0xf] %vm37, %v541
    %558 = vst.msk [vmem:[#allocation3 + $0x30] sm:$0xf] %vm37, %v542
    %559 = vst.msk [vmem:[#allocation3 + $0x38] sm:$0xf] %vm37, %v543
    %560 = vst.msk [vmem:[#allocation3 + $0x40] sm:$0xf] %vm37, %v544
    %561 = vst.msk [vmem:[#allocation3 + $0x48] sm:$0xf] %vm37, %v545
    %562 = vst.msk [vmem:[#allocation3 + $0x50] sm:$0xf] %vm37, %v546
    %563 = vst.msk [vmem:[#allocation3 + $0x58] sm:$0xf] %vm37, %v547
    %564 = vst.msk [vmem:[#allocation3 + $0x60] sm:$0xf] %vm37, %v548
    %565 = vst.msk [vmem:[#allocation3 + $0x68] sm:$0xf] %vm37, %v549
    %566 = vst.msk [vmem:[#allocation3 + $0x70] sm:$0xf] %vm37, %v550
    %567 = vst.msk [vmem:[#allocation3 + $0x78] sm:$0xf] %vm37, %v551
    %v568 = vld [vmem:[#allocation2] sm:$0xf]
    %v569 = vld [vmem:[#allocation2 + $0x4] sm:$0x1]
    %v570 = vld [vmem:[#allocation2 + $0x8] sm:$0xf]
    %v571 = vld [vmem:[#allocation2 + $0xc] sm:$0x1]
    %v572 = vld [vmem:[#allocation2 + $0x10] sm:$0xf]
    %v573 = vld [vmem:[#allocation2 + $0x14] sm:$0x1]
    %v574 = vld [vmem:[#allocation2 + $0x18] sm:$0xf]
    %v575 = vld [vmem:[#allocation2 + $0x1c] sm:$0x1]
    %v576 = vld [vmem:[#allocation2 + $0x20] sm:$0xf]
    %v577 = vld [vmem:[#allocation2 + $0x24] sm:$0x1]
    %v578 = vld [vmem:[#allocation2 + $0x28] sm:$0xf]
    %v579 = vld [vmem:[#allocation2 + $0x2c] sm:$0x1]
    %v580 = vld [vmem:[#allocation2 + $0x30] sm:$0xf]
    %v581 = vld [vmem:[#allocation2 + $0x34] sm:$0x1]
    %v582 = vld [vmem:[#allocation2 + $0x38] sm:$0xf]
    %v583 = vld [vmem:[#allocation2 + $0x3c] sm:$0x1]
    %v584 = vld [vmem:[#allocation2 + $0x50] sm:$0xf]
    %v585 = vld [vmem:[#allocation2 + $0x54] sm:$0x1]
    %v586 = vld [vmem:[#allocation2 + $0x58] sm:$0xf]
    %v587 = vld [vmem:[#allocation2 + $0x5c] sm:$0x1]
    %v588 = vld [vmem:[#allocation2 + $0x60] sm:$0xf]
    %v589 = vld [vmem:[#allocation2 + $0x64] sm:$0x1]
    %v590 = vld [vmem:[#allocation2 + $0x68] sm:$0xf]
    %v591 = vld [vmem:[#allocation2 + $0x6c] sm:$0x1]
    %v592 = vld [vmem:[#allocation2 + $0x70] sm:$0xf]
    %v593 = vld [vmem:[#allocation2 + $0x74] sm:$0x1]
    %v594 = vld [vmem:[#allocation2 + $0x78] sm:$0xf]
    %v595 = vld [vmem:[#allocation2 + $0x7c] sm:$0x1]
    %v596 = vld [vmem:[#allocation2 + $0x80] sm:$0xf]
    %v597 = vld [vmem:[#allocation2 + $0x84] sm:$0x1]
    %v598 = vld [vmem:[#allocation2 + $0x88] sm:$0xf]
    %v599 = vld [vmem:[#allocation2 + $0x8c] sm:$0x1]
    %vm600 = vsmask.f32 3328
    %vm601 = vsmask.f32 7440
    %vm602 = vmor %vm600, %vm601
    %v604 = vshrl.u32 %v568, 16
    %v606 = vrot.slane %v604, 4
    %v607 = vshll.u32 %v568, 16
    %v609 = vrot.slane %v607, 5
    %v610 = vor.u32 %v606, %v609
    %v611 = vrot.slane %v610, 4
    %v613 = vshll.u32 %v569, 16
    %v615 = vrot.slane %v613, 5
    %v616 = vsel %vm602, %v611, %v615
    %v618 = vshrl.u32 %v570, 16
    %v620 = vrot.slane %v618, 4
    %v621 = vshll.u32 %v570, 16
    %v623 = vrot.slane %v621, 5
    %v624 = vor.u32 %v620, %v623
    %v625 = vrot.slane %v624, 4
    %v627 = vshll.u32 %v571, 16
    %v629 = vrot.slane %v627, 5
    %v630 = vsel %vm602, %v625, %v629
    %v632 = vshrl.u32 %v572, 16
    %v634 = vrot.slane %v632, 4
    %v635 = vshll.u32 %v572, 16
    %v637 = vrot.slane %v635, 5
    %v638 = vor.u32 %v634, %v637
    %v639 = vrot.slane %v638, 4
    %v641 = vshll.u32 %v573, 16
    %v643 = vrot.slane %v641, 5
    %v644 = vsel %vm602, %v639, %v643
    %v646 = vshrl.u32 %v574, 16
    %v648 = vrot.slane %v646, 4
    %v649 = vshll.u32 %v574, 16
    %v651 = vrot.slane %v649, 5
    %v652 = vor.u32 %v648, %v651
    %v653 = vrot.slane %v652, 4
    %v655 = vshll.u32 %v575, 16
    %v657 = vrot.slane %v655, 5
    %v658 = vsel %vm602, %v653, %v657
    %v660 = vshrl.u32 %v576, 16
    %v662 = vrot.slane %v660, 4
    %v663 = vshll.u32 %v576, 16
    %v665 = vrot.slane %v663, 5
    %v666 = vor.u32 %v662, %v665
    %v667 = vrot.slane %v666, 4
    %v669 = vshll.u32 %v577, 16
    %v671 = vrot.slane %v669, 5
    %v672 = vsel %vm602, %v667, %v671
    %v674 = vshrl.u32 %v578, 16
    %v676 = vrot.slane %v674, 4
    %v677 = vshll.u32 %v578, 16
    %v679 = vrot.slane %v677, 5
    %v680 = vor.u32 %v676, %v679
    %v681 = vrot.slane %v680, 4
    %v683 = vshll.u32 %v579, 16
    %v685 = vrot.slane %v683, 5
    %v686 = vsel %vm602, %v681, %v685
    %v688 = vshrl.u32 %v580, 16
    %v690 = vrot.slane %v688, 4
    %v691 = vshll.u32 %v580, 16
    %v693 = vrot.slane %v691, 5
    %v694 = vor.u32 %v690, %v693
    %v695 = vrot.slane %v694, 4
    %v697 = vshll.u32 %v581, 16
    %v699 = vrot.slane %v697, 5
    %v700 = vsel %vm602, %v695, %v699
    %v702 = vshrl.u32 %v582, 16
    %v704 = vrot.slane %v702, 4
    %v705 = vshll.u32 %v582, 16
    %v707 = vrot.slane %v705, 5
    %v708 = vor.u32 %v704, %v707
    %v709 = vrot.slane %v708, 4
    %v711 = vshll.u32 %v583, 16
    %v713 = vrot.slane %v711, 5
    %v714 = vsel %vm602, %v709, %v713
    %v716 = vshrl.u32 %v584, 16
    %v718 = vrot.slane %v716, 4
    %v719 = vshll.u32 %v584, 16
    %v721 = vrot.slane %v719, 5
    %v722 = vor.u32 %v718, %v721
    %v723 = vrot.slane %v722, 4
    %v725 = vshll.u32 %v585, 16
    %v727 = vrot.slane %v725, 5
    %v728 = vsel %vm602, %v723, %v727
    %v730 = vshrl.u32 %v586, 16
    %v732 = vrot.slane %v730, 4
    %v733 = vshll.u32 %v586, 16
    %v735 = vrot.slane %v733, 5
    %v736 = vor.u32 %v732, %v735
    %v737 = vrot.slane %v736, 4
    %v739 = vshll.u32 %v587, 16
    %v741 = vrot.slane %v739, 5
    %v742 = vsel %vm602, %v737, %v741
    %v744 = vshrl.u32 %v588, 16
    %v746 = vrot.slane %v744, 4
    %v747 = vshll.u32 %v588, 16
    %v749 = vrot.slane %v747, 5
    %v750 = vor.u32 %v746, %v749
    %v751 = vrot.slane %v750, 4
    %v753 = vshll.u32 %v589, 16
    %v755 = vrot.slane %v753, 5
    %v756 = vsel %vm602, %v751, %v755
    %v758 = vshrl.u32 %v590, 16
    %v760 = vrot.slane %v758, 4
    %v761 = vshll.u32 %v590, 16
    %v763 = vrot.slane %v761, 5
    %v764 = vor.u32 %v760, %v763
    %v765 = vrot.slane %v764, 4
    %v767 = vshll.u32 %v591, 16
    %v769 = vrot.slane %v767, 5
    %v770 = vsel %vm602, %v765, %v769
    %v772 = vshrl.u32 %v592, 16
    %v774 = vrot.slane %v772, 4
    %v775 = vshll.u32 %v592, 16
    %v777 = vrot.slane %v775, 5
    %v778 = vor.u32 %v774, %v777
    %v779 = vrot.slane %v778, 4
    %v781 = vshll.u32 %v593, 16
    %v783 = vrot.slane %v781, 5
    %v784 = vsel %vm602, %v779, %v783
    %v786 = vshrl.u32 %v594, 16
    %v788 = vrot.slane %v786, 4
    %v789 = vshll.u32 %v594, 16
    %v791 = vrot.slane %v789, 5
    %v792 = vor.u32 %v788, %v791
    %v793 = vrot.slane %v792, 4
    %v795 = vshll.u32 %v595, 16
    %v797 = vrot.slane %v795, 5
    %v798 = vsel %vm602, %v793, %v797
    %v800 = vshrl.u32 %v596, 16
    %v802 = vrot.slane %v800, 4
    %v803 = vshll.u32 %v596, 16
    %v805 = vrot.slane %v803, 5
    %v806 = vor.u32 %v802, %v805
    %v807 = vrot.slane %v806, 4
    %v809 = vshll.u32 %v597, 16
    %v811 = vrot.slane %v809, 5
    %v812 = vsel %vm602, %v807, %v811
    %v814 = vshrl.u32 %v598, 16
    %v816 = vrot.slane %v814, 4
    %v817 = vshll.u32 %v598, 16
    %v819 = vrot.slane %v817, 5
    %v820 = vor.u32 %v816, %v819
    %v821 = vrot.slane %v820, 4
    %v823 = vshll.u32 %v599, 16
    %v825 = vrot.slane %v823, 5
    %v826 = vsel %vm602, %v821, %v825
    %827 = vrot.lane.b32.xlu0 %v616, 16
    %v828 = vpop.permute.xlu0 %827
    %829 = vrot.lane.b32.xlu0 %v630, 16
    %v830 = vpop.permute.xlu0 %829
    %831 = vrot.lane.b32.xlu0 %v644, 16
    %v832 = vpop.permute.xlu0 %831
    %833 = vrot.lane.b32.xlu0 %v658, 16
    %v834 = vpop.permute.xlu0 %833
    %835 = vrot.lane.b32.xlu0 %v672, 16
    %v836 = vpop.permute.xlu0 %835
    %837 = vrot.lane.b32.xlu0 %v686, 16
    %v838 = vpop.permute.xlu0 %837
    %839 = vrot.lane.b32.xlu0 %v700, 16
    %v840 = vpop.permute.xlu0 %839
    %841 = vrot.lane.b32.xlu0 %v714, 16
    %v842 = vpop.permute.xlu0 %841
    %843 = vrot.lane.b32.xlu0 %v728, 16
    %v844 = vpop.permute.xlu0 %843
    %845 = vrot.lane.b32.xlu0 %v742, 16
    %v846 = vpop.permute.xlu0 %845
    %847 = vrot.lane.b32.xlu0 %v756, 16
    %v848 = vpop.permute.xlu0 %847
    %849 = vrot.lane.b32.xlu0 %v770, 16
    %v850 = vpop.permute.xlu0 %849
    %851 = vrot.lane.b32.xlu0 %v784, 16
    %v852 = vpop.permute.xlu0 %851
    %853 = vrot.lane.b32.xlu0 %v798, 16
    %v854 = vpop.permute.xlu0 %853
    %855 = vrot.lane.b32.xlu0 %v812, 16
    %v856 = vpop.permute.xlu0 %855
    %857 = vrot.lane.b32.xlu0 %v826, 16
    %v858 = vpop.permute.xlu0 %857
    %vm875 = vcmask 257152
    %876 = vst.msk [vmem:[#allocation3] sm:$0xf] %vm875, %v828
    %877 = vst.msk [vmem:[#allocation3 + $0x8] sm:$0xf] %vm875, %v830
    %878 = vst.msk [vmem:[#allocation3 + $0x10] sm:$0xf] %vm875, %v832
    %879 = vst.msk [vmem:[#allocation3 + $0x18] sm:$0xf] %vm875, %v834
    %880 = vst.msk [vmem:[#allocation3 + $0x20] sm:$0xf] %vm875, %v836
    %881 = vst.msk [vmem:[#allocation3 + $0x28] sm:$0xf] %vm875, %v838
    %882 = vst.msk [vmem:[#allocation3 + $0x30] sm:$0xf] %vm875, %v840
    %883 = vst.msk [vmem:[#allocation3 + $0x38] sm:$0xf] %vm875, %v842
    %884 = vst.msk [vmem:[#allocation3 + $0x40] sm:$0xf] %vm875, %v844
    %885 = vst.msk [vmem:[#allocation3 + $0x48] sm:$0xf] %vm875, %v846
    %886 = vst.msk [vmem:[#allocation3 + $0x50] sm:$0xf] %vm875, %v848
    %887 = vst.msk [vmem:[#allocation3 + $0x58] sm:$0xf] %vm875, %v850
    %888 = vst.msk [vmem:[#allocation3 + $0x60] sm:$0xf] %vm875, %v852
    %889 = vst.msk [vmem:[#allocation3 + $0x68] sm:$0xf] %vm875, %v854
    %890 = vst.msk [vmem:[#allocation3 + $0x70] sm:$0xf] %vm875, %v856
    %891 = vst.msk [vmem:[#allocation3 + $0x78] sm:$0xf] %vm875, %v858
    %v892 = vld [vmem:[#allocation2] sm:$0xe]
    %v893 = vld [vmem:[#allocation2 + $0x4] sm:$0x1]
    %v894 = vld [vmem:[#allocation2 + $0x8] sm:$0xe]
    %v895 = vld [vmem:[#allocation2 + $0xc] sm:$0x1]
    %v896 = vld [vmem:[#allocation2 + $0x10] sm:$0xe]
    %v897 = vld [vmem:[#allocation2 + $0x14] sm:$0x1]
    %v898 = vld [vmem:[#allocation2 + $0x18] sm:$0xe]
    %v899 = vld [vmem:[#allocation2 + $0x1c] sm:$0x1]
    %v900 = vld [vmem:[#allocation2 + $0x20] sm:$0xe]
    %v901 = vld [vmem:[#allocation2 + $0x24] sm:$0x1]
    %v902 = vld [vmem:[#allocation2 + $0x28] sm:$0xe]
    %v903 = vld [vmem:[#allocation2 + $0x2c] sm:$0x1]
    %v904 = vld [vmem:[#allocation2 + $0x30] sm:$0xe]
    %v905 = vld [vmem:[#allocation2 + $0x34] sm:$0x1]
    %v906 = vld [vmem:[#allocation2 + $0x38] sm:$0xe]
    %v907 = vld [vmem:[#allocation2 + $0x3c] sm:$0x1]
    %v908 = vld [vmem:[#allocation2 + $0x50] sm:$0xe]
    %v909 = vld [vmem:[#allocation2 + $0x54] sm:$0x1]
    %v910 = vld [vmem:[#allocation2 + $0x58] sm:$0xe]
    %v911 = vld [vmem:[#allocation2 + $0x5c] sm:$0x1]
    %v912 = vld [vmem:[#allocation2 + $0x60] sm:$0xe]
    %v913 = vld [vmem:[#allocation2 + $0x64] sm:$0x1]
    %v914 = vld [vmem:[#allocation2 + $0x68] sm:$0xe]
    %v915 = vld [vmem:[#allocation2 + $0x6c] sm:$0x1]
    %v916 = vld [vmem:[#allocation2 + $0x70] sm:$0xe]
    %v917 = vld [vmem:[#allocation2 + $0x74] sm:$0x1]
    %v918 = vld [vmem:[#allocation2 + $0x78] sm:$0xe]
    %v919 = vld [vmem:[#allocation2 + $0x7c] sm:$0x1]
    %v920 = vld [vmem:[#allocation2 + $0x80] sm:$0xe]
    %v921 = vld [vmem:[#allocation2 + $0x84] sm:$0x1]
    %v922 = vld [vmem:[#allocation2 + $0x88] sm:$0xe]
    %v923 = vld [vmem:[#allocation2 + $0x8c] sm:$0x1]
    %vm956 = vcmask 1042432
    %vm957 = vcmask 1046532
    %vm958 = vmor %vm956, %vm957
    %v959 = vrot.slane %v892, 5
    %v960 = vrot.slane %v959, 4
    %v961 = vrot.slane %v893, 5
    %v962 = vsel %vm958, %v960, %v961
    %v963 = vrot.slane %v894, 5
    %v964 = vrot.slane %v963, 4
    %v965 = vrot.slane %v895, 5
    %v966 = vsel %vm958, %v964, %v965
    %v967 = vrot.slane %v896, 5
    %v968 = vrot.slane %v967, 4
    %v969 = vrot.slane %v897, 5
    %v970 = vsel %vm958, %v968, %v969
    %v971 = vrot.slane %v898, 5
    %v972 = vrot.slane %v971, 4
    %v973 = vrot.slane %v899, 5
    %v974 = vsel %vm958, %v972, %v973
    %v975 = vrot.slane %v900, 5
    %v976 = vrot.slane %v975, 4
    %v977 = vrot.slane %v901, 5
    %v978 = vsel %vm958, %v976, %v977
    %v979 = vrot.slane %v902, 5
    %v980 = vrot.slane %v979, 4
    %v981 = vrot.slane %v903, 5
    %v982 = vsel %vm958, %v980, %v981
    %v983 = vrot.slane %v904, 5
    %v984 = vrot.slane %v983, 4
    %v985 = vrot.slane %v905, 5
    %v986 = vsel %vm958, %v984, %v985
    %v987 = vrot.slane %v906, 5
    %v988 = vrot.slane %v987, 4
    %v989 = vrot.slane %v907, 5
    %v990 = vsel %vm958, %v988, %v989
    %v991 = vrot.slane %v908, 5
    %v992 = vrot.slane %v991, 4
    %v993 = vrot.slane %v909, 5
    %v994 = vsel %vm958, %v992, %v993
    %v995 = vrot.slane %v910, 5
    %v996 = vrot.slane %v995, 4
    %v997 = vrot.slane %v911, 5
    %v998 = vsel %vm958, %v996, %v997
    %v999 = vrot.slane %v912, 5
    %v1000 = vrot.slane %v999, 4
    %v1001 = vrot.slane %v913, 5
    %v1002 = vsel %vm958, %v1000, %v1001
    %v1003 = vrot.slane %v914, 5
    %v1004 = vrot.slane %v1003, 4
    %v1005 = vrot.slane %v915, 5
    %v1006 = vsel %vm958, %v1004, %v1005
    %v1007 = vrot.slane %v916, 5
    %v1008 = vrot.slane %v1007, 4
    %v1009 = vrot.slane %v917, 5
    %v1010 = vsel %vm958, %v1008, %v1009
    %v1011 = vrot.slane %v918, 5
    %v1012 = vrot.slane %v1011, 4
    %v1013 = vrot.slane %v919, 5
    %v1014 = vsel %vm958, %v1012, %v1013
    %v1015 = vrot.slane %v920, 5
    %v1016 = vrot.slane %v1015, 4
    %v1017 = vrot.slane %v921, 5
    %v1018 = vsel %vm958, %v1016, %v1017
    %v1019 = vrot.slane %v922, 5
    %v1020 = vrot.slane %v1019, 4
    %v1021 = vrot.slane %v923, 5
    %v1022 = vsel %vm958, %v1020, %v1021
    %1023 = vrot.lane.b32.xlu0 %v962, 32
    %v1024 = vpop.permute.xlu0 %1023
    %1025 = vrot.lane.b32.xlu0 %v966, 32
    %v1026 = vpop.permute.xlu0 %1025
    %1027 = vrot.lane.b32.xlu0 %v970, 32
    %v1028 = vpop.permute.xlu0 %1027
    %1029 = vrot.lane.b32.xlu0 %v974, 32
    %v1030 = vpop.permute.xlu0 %1029
    %1031 = vrot.lane.b32.xlu0 %v978, 32
    %v1032 = vpop.permute.xlu0 %1031
    %1033 = vrot.lane.b32.xlu0 %v982, 32
    %v1034 = vpop.permute.xlu0 %1033
    %1035 = vrot.lane.b32.xlu0 %v986, 32
    %v1036 = vpop.permute.xlu0 %1035
    %1037 = vrot.lane.b32.xlu0 %v990, 32
    %v1038 = vpop.permute.xlu0 %1037
    %1039 = vrot.lane.b32.xlu0 %v994, 32
    %v1040 = vpop.permute.xlu0 %1039
    %1041 = vrot.lane.b32.xlu0 %v998, 32
    %v1042 = vpop.permute.xlu0 %1041
    %1043 = vrot.lane.b32.xlu0 %v1002, 32
    %v1044 = vpop.permute.xlu0 %1043
    %1045 = vrot.lane.b32.xlu0 %v1006, 32
    %v1046 = vpop.permute.xlu0 %1045
    %1047 = vrot.lane.b32.xlu0 %v1010, 32
    %v1048 = vpop.permute.xlu0 %1047
    %1049 = vrot.lane.b32.xlu0 %v1014, 32
    %v1050 = vpop.permute.xlu0 %1049
    %1051 = vrot.lane.b32.xlu0 %v1018, 32
    %v1052 = vpop.permute.xlu0 %1051
    %1053 = vrot.lane.b32.xlu0 %v1022, 32
    %v1054 = vpop.permute.xlu0 %1053
    %vm1071 = vcmask 388352
    %1072 = vst.msk [vmem:[#allocation3] sm:$0xf] %vm1071, %v1024
    %1073 = vst.msk [vmem:[#allocation3 + $0x8] sm:$0xf] %vm1071, %v1026
    %1074 = vst.msk [vmem:[#allocation3 + $0x10] sm:$0xf] %vm1071, %v1028
    %1075 = vst.msk [vmem:[#allocation3 + $0x18] sm:$0xf] %vm1071, %v1030
    %1076 = vst.msk [vmem:[#allocation3 + $0x20] sm:$0xf] %vm1071, %v1032
    %1077 = vst.msk [vmem:[#allocation3 + $0x28] sm:$0xf] %vm1071, %v1034
    %1078 = vst.msk [vmem:[#allocation3 + $0x30] sm:$0xf] %vm1071, %v1036
    %1079 = vst.msk [vmem:[#allocation3 + $0x38] sm:$0xf] %vm1071, %v1038
    %1080 = vst.msk [vmem:[#allocation3 + $0x40] sm:$0xf] %vm1071, %v1040
    %1081 = vst.msk [vmem:[#allocation3 + $0x48] sm:$0xf] %vm1071, %v1042
    %1082 = vst.msk [vmem:[#allocation3 + $0x50] sm:$0xf] %vm1071, %v1044
    %1083 = vst.msk [vmem:[#allocation3 + $0x58] sm:$0xf] %vm1071, %v1046
    %1084 = vst.msk [vmem:[#allocation3 + $0x60] sm:$0xf] %vm1071, %v1048
    %1085 = vst.msk [vmem:[#allocation3 + $0x68] sm:$0xf] %vm1071, %v1050
    %1086 = vst.msk [vmem:[#allocation3 + $0x70] sm:$0xf] %vm1071, %v1052
    %1087 = vst.msk [vmem:[#allocation3 + $0x78] sm:$0xf] %vm1071, %v1054
    %v1088 = vld [vmem:[%s437] sm:$0xf]
    %v1089 = vld [vmem:[%s437 + $0x8] sm:$0xf]
    %v1090 = vld [vmem:[%s437 + $0x10] sm:$0xf]
    %v1091 = vld [vmem:[%s437 + $0x18] sm:$0xf]
    %v1092 = vld [vmem:[%s437 + $0x20] sm:$0xf]
    %v1093 = vld [vmem:[%s437 + $0x28] sm:$0xf]
    %v1094 = vld [vmem:[%s437 + $0x30] sm:$0xf]
    %v1095 = vld [vmem:[%s437 + $0x38] sm:$0xf]
    %v1096 = vld [vmem:[%s437 + $0x50] sm:$0xf]
    %v1097 = vld [vmem:[%s437 + $0x58] sm:$0xf]
    %v1098 = vld [vmem:[%s437 + $0x60] sm:$0xf]
    %v1099 = vld [vmem:[%s437 + $0x68] sm:$0xf]
    %v1100 = vld [vmem:[%s437 + $0x70] sm:$0xf]
    %v1101 = vld [vmem:[%s437 + $0x78] sm:$0xf]
    %v1102 = vld [vmem:[%s437 + $0x80] sm:$0xf]
    %v1103 = vld [vmem:[%s437 + $0x88] sm:$0xf]
    %1120 = vrot.lane.b32.xlu0 %v1088, 48
    %v1121 = vpop.permute.xlu0 %1120
    %1122 = vrot.lane.b32.xlu0 %v1089, 48
    %v1123 = vpop.permute.xlu0 %1122
    %1124 = vrot.lane.b32.xlu0 %v1090, 48
    %v1125 = vpop.permute.xlu0 %1124
    %1126 = vrot.lane.b32.xlu0 %v1091, 48
    %v1127 = vpop.permute.xlu0 %1126
    %1128 = vrot.lane.b32.xlu0 %v1092, 48
    %v1129 = vpop.permute.xlu0 %1128
    %1130 = vrot.lane.b32.xlu0 %v1093, 48
    %v1131 = vpop.permute.xlu0 %1130
    %1132 = vrot.lane.b32.xlu0 %v1094, 48
    %v1133 = vpop.permute.xlu0 %1132
    %1134 = vrot.lane.b32.xlu0 %v1095, 48
    %v1135 = vpop.permute.xlu0 %1134
    %1136 = vrot.lane.b32.xlu0 %v1096, 48
    %v1137 = vpop.permute.xlu0 %1136
    %1138 = vrot.lane.b32.xlu0 %v1097, 48
    %v1139 = vpop.permute.xlu0 %1138
    %1140 = vrot.lane.b32.xlu0 %v1098, 48
    %v1141 = vpop.permute.xlu0 %1140
    %1142 = vrot.lane.b32.xlu0 %v1099, 48
    %v1143 = vpop.permute.xlu0 %1142
    %1144 = vrot.lane.b32.xlu0 %v1100, 48
    %v1145 = vpop.permute.xlu0 %1144
    %1146 = vrot.lane.b32.xlu0 %v1101, 48
    %v1147 = vpop.permute.xlu0 %1146
    %1148 = vrot.lane.b32.xlu0 %v1102, 48
    %v1149 = vpop.permute.xlu0 %1148
    %1150 = vrot.lane.b32.xlu0 %v1103, 48
    %v1151 = vpop.permute.xlu0 %1150
    %vm1168 = vcmask 519552
    %1169 = vst.msk [vmem:[#allocation3] sm:$0xf] %vm1168, %v1121
    %1170 = vst.msk [vmem:[#allocation3 + $0x8] sm:$0xf] %vm1168, %v1123
    %1171 = vst.msk [vmem:[#allocation3 + $0x10] sm:$0xf] %vm1168, %v1125
    %1172 = vst.msk [vmem:[#allocation3 + $0x18] sm:$0xf] %vm1168, %v1127
    %1173 = vst.msk [vmem:[#allocation3 + $0x20] sm:$0xf] %vm1168, %v1129
    %1174 = vst.msk [vmem:[#allocation3 + $0x28] sm:$0xf] %vm1168, %v1131
    %1175 = vst.msk [vmem:[#allocation3 + $0x30] sm:$0xf] %vm1168, %v1133
    %1176 = vst.msk [vmem:[#allocation3 + $0x38] sm:$0xf] %vm1168, %v1135
    %1177 = vst.msk [vmem:[#allocation3 + $0x40] sm:$0xf] %vm1168, %v1137
    %1178 = vst.msk [vmem:[#allocation3 + $0x48] sm:$0xf] %vm1168, %v1139
    %1179 = vst.msk [vmem:[#allocation3 + $0x50] sm:$0xf] %vm1168, %v1141
    %1180 = vst.msk [vmem:[#allocation3 + $0x58] sm:$0xf] %vm1168, %v1143
    %1181 = vst.msk [vmem:[#allocation3 + $0x60] sm:$0xf] %vm1168, %v1145
    %1182 = vst.msk [vmem:[#allocation3 + $0x68] sm:$0xf] %vm1168, %v1147
    %1183 = vst.msk [vmem:[#allocation3 + $0x70] sm:$0xf] %vm1168, %v1149
    %1184 = vst.msk [vmem:[#allocation3 + $0x78] sm:$0xf] %vm1168, %v1151
    %v1185 = vld [vmem:[%s437] sm:$0xf]
    %v1186 = vld [vmem:[%s437 + $0x4] sm:$0x1]
    %v1187 = vld [vmem:[%s437 + $0x8] sm:$0xf]
    %v1188 = vld [vmem:[%s437 + $0xc] sm:$0x1]
    %v1189 = vld [vmem:[%s437 + $0x10] sm:$0xf]
    %v1190 = vld [vmem:[%s437 + $0x14] sm:$0x1]
    %v1191 = vld [vmem:[%s437 + $0x18] sm:$0xf]
    %v1192 = vld [vmem:[%s437 + $0x1c] sm:$0x1]
    %v1193 = vld [vmem:[%s437 + $0x20] sm:$0xf]
    %v1194 = vld [vmem:[%s437 + $0x24] sm:$0x1]
    %v1195 = vld [vmem:[%s437 + $0x28] sm:$0xf]
    %v1196 = vld [vmem:[%s437 + $0x2c] sm:$0x1]
    %v1197 = vld [vmem:[%s437 + $0x30] sm:$0xf]
    %v1198 = vld [vmem:[%s437 + $0x34] sm:$0x1]
    %v1199 = vld [vmem:[%s437 + $0x38] sm:$0xf]
    %v1200 = vld [vmem:[%s437 + $0x3c] sm:$0x1]
    %v1201 = vld [vmem:[%s437 + $0x50] sm:$0xf]
    %v1202 = vld [vmem:[%s437 + $0x54] sm:$0x1]
    %v1203 = vld [vmem:[%s437 + $0x58] sm:$0xf]
    %v1204 = vld [vmem:[%s437 + $0x5c] sm:$0x1]
    %v1205 = vld [vmem:[%s437 + $0x60] sm:$0xf]
    %v1206 = vld [vmem:[%s437 + $0x64] sm:$0x1]
    %v1207 = vld [vmem:[%s437 + $0x68] sm:$0xf]
    %v1208 = vld [vmem:[%s437 + $0x6c] sm:$0x1]
    %v1209 = vld [vmem:[%s437 + $0x70] sm:$0xf]
    %v1210 = vld [vmem:[%s437 + $0x74] sm:$0x1]
    %v1211 = vld [vmem:[%s437 + $0x78] sm:$0xf]
    %v1212 = vld [vmem:[%s437 + $0x7c] sm:$0x1]
    %v1213 = vld [vmem:[%s437 + $0x80] sm:$0xf]
    %v1214 = vld [vmem:[%s437 + $0x84] sm:$0x1]
    %v1215 = vld [vmem:[%s437 + $0x88] sm:$0xf]
    %v1216 = vld [vmem:[%s437 + $0x8c] sm:$0x1]
    %v1218 = vshrl.u32 %v1185, 16
    %v1220 = vrot.slane %v1218, 4
    %v1221 = vshll.u32 %v1185, 16
    %v1223 = vrot.slane %v1221, 5
    %v1224 = vor.u32 %v1220, %v1223
    %v1225 = vrot.slane %v1224, 4
    %v1227 = vshll.u32 %v1186, 16
    %v1229 = vrot.slane %v1227, 5
    %v1230 = vsel %vm602, %v1225, %v1229
    %v1232 = vshrl.u32 %v1187, 16
    %v1234 = vrot.slane %v1232, 4
    %v1235 = vshll.u32 %v1187, 16
    %v1237 = vrot.slane %v1235, 5
    %v1238 = vor.u32 %v1234, %v1237
    %v1239 = vrot.slane %v1238, 4
    %v1241 = vshll.u32 %v1188, 16
    %v1243 = vrot.slane %v1241, 5
    %v1244 = vsel %vm602, %v1239, %v1243
    %v1246 = vshrl.u32 %v1189, 16
    %v1248 = vrot.slane %v1246, 4
    %v1249 = vshll.u32 %v1189, 16
    %v1251 = vrot.slane %v1249, 5
    %v1252 = vor.u32 %v1248, %v1251
    %v1253 = vrot.slane %v1252, 4
    %v1255 = vshll.u32 %v1190, 16
    %v1257 = vrot.slane %v1255, 5
    %v1258 = vsel %vm602, %v1253, %v1257
    %v1260 = vshrl.u32 %v1191, 16
    %v1262 = vrot.slane %v1260, 4
    %v1263 = vshll.u32 %v1191, 16
    %v1265 = vrot.slane %v1263, 5
    %v1266 = vor.u32 %v1262, %v1265
    %v1267 = vrot.slane %v1266, 4
    %v1269 = vshll.u32 %v1192, 16
    %v1271 = vrot.slane %v1269, 5
    %v1272 = vsel %vm602, %v1267, %v1271
    %v1274 = vshrl.u32 %v1193, 16
    %v1276 = vrot.slane %v1274, 4
    %v1277 = vshll.u32 %v1193, 16
    %v1279 = vrot.slane %v1277, 5
    %v1280 = vor.u32 %v1276, %v1279
    %v1281 = vrot.slane %v1280, 4
    %v1283 = vshll.u32 %v1194, 16
    %v1285 = vrot.slane %v1283, 5
    %v1286 = vsel %vm602, %v1281, %v1285
    %v1288 = vshrl.u32 %v1195, 16
    %v1290 = vrot.slane %v1288, 4
    %v1291 = vshll.u32 %v1195, 16
    %v1293 = vrot.slane %v1291, 5
    %v1294 = vor.u32 %v1290, %v1293
    %v1295 = vrot.slane %v1294, 4
    %v1297 = vshll.u32 %v1196, 16
    %v1299 = vrot.slane %v1297, 5
    %v1300 = vsel %vm602, %v1295, %v1299
    %v1302 = vshrl.u32 %v1197, 16
    %v1304 = vrot.slane %v1302, 4
    %v1305 = vshll.u32 %v1197, 16
    %v1307 = vrot.slane %v1305, 5
    %v1308 = vor.u32 %v1304, %v1307
    %v1309 = vrot.slane %v1308, 4
    %v1311 = vshll.u32 %v1198, 16
    %v1313 = vrot.slane %v1311, 5
    %v1314 = vsel %vm602, %v1309, %v1313
    %v1316 = vshrl.u32 %v1199, 16
    %v1318 = vrot.slane %v1316, 4
    %v1319 = vshll.u32 %v1199, 16
    %v1321 = vrot.slane %v1319, 5
    %v1322 = vor.u32 %v1318, %v1321
    %v1323 = vrot.slane %v1322, 4
    %v1325 = vshll.u32 %v1200, 16
    %v1327 = vrot.slane %v1325, 5
    %v1328 = vsel %vm602, %v1323, %v1327
    %v1330 = vshrl.u32 %v1201, 16
    %v1332 = vrot.slane %v1330, 4
    %v1333 = vshll.u32 %v1201, 16
    %v1335 = vrot.slane %v1333, 5
    %v1336 = vor.u32 %v1332, %v1335
    %v1337 = vrot.slane %v1336, 4
    %v1339 = vshll.u32 %v1202, 16
    %v1341 = vrot.slane %v1339, 5
    %v1342 = vsel %vm602, %v1337, %v1341
    %v1344 = vshrl.u32 %v1203, 16
    %v1346 = vrot.slane %v1344, 4
    %v1347 = vshll.u32 %v1203, 16
    %v1349 = vrot.slane %v1347, 5
    %v1350 = vor.u32 %v1346, %v1349
    %v1351 = vrot.slane %v1350, 4
    %v1353 = vshll.u32 %v1204, 16
    %v1355 = vrot.slane %v1353, 5
    %v1356 = vsel %vm602, %v1351, %v1355
    %v1358 = vshrl.u32 %v1205, 16
    %v1360 = vrot.slane %v1358, 4
    %v1361 = vshll.u32 %v1205, 16
    %v1363 = vrot.slane %v1361, 5
    %v1364 = vor.u32 %v1360, %v1363
    %v1365 = vrot.slane %v1364, 4
    %v1367 = vshll.u32 %v1206, 16
    %v1369 = vrot.slane %v1367, 5
    %v1370 = vsel %vm602, %v1365, %v1369
    %v1372 = vshrl.u32 %v1207, 16
    %v1374 = vrot.slane %v1372, 4
    %v1375 = vshll.u32 %v1207, 16
    %v1377 = vrot.slane %v1375, 5
    %v1378 = vor.u32 %v1374, %v1377
    %v1379 = vrot.slane %v1378, 4
    %v1381 = vshll.u32 %v1208, 16
    %v1383 = vrot.slane %v1381, 5
    %v1384 = vsel %vm602, %v1379, %v1383
    %v1386 = vshrl.u32 %v1209, 16
    %v1388 = vrot.slane %v1386, 4
    %v1389 = vshll.u32 %v1209, 16
    %v1391 = vrot.slane %v1389, 5
    %v1392 = vor.u32 %v1388, %v1391
    %v1393 = vrot.slane %v1392, 4
    %v1395 = vshll.u32 %v1210, 16
    %v1397 = vrot.slane %v1395, 5
    %v1398 = vsel %vm602, %v1393, %v1397
    %v1400 = vshrl.u32 %v1211, 16
    %v1402 = vrot.slane %v1400, 4
    %v1403 = vshll.u32 %v1211, 16
    %v1405 = vrot.slane %v1403, 5
    %v1406 = vor.u32 %v1402, %v1405
    %v1407 = vrot.slane %v1406, 4
    %v1409 = vshll.u32 %v1212, 16
    %v1411 = vrot.slane %v1409, 5
    %v1412 = vsel %vm602, %v1407, %v1411
    %v1414 = vshrl.u32 %v1213, 16
    %v1416 = vrot.slane %v1414, 4
    %v1417 = vshll.u32 %v1213, 16
    %v1419 = vrot.slane %v1417, 5
    %v1420 = vor.u32 %v1416, %v1419
    %v1421 = vrot.slane %v1420, 4
    %v1423 = vshll.u32 %v1214, 16
    %v1425 = vrot.slane %v1423, 5
    %v1426 = vsel %vm602, %v1421, %v1425
    %v1428 = vshrl.u32 %v1215, 16
    %v1430 = vrot.slane %v1428, 4
    %v1431 = vshll.u32 %v1215, 16
    %v1433 = vrot.slane %v1431, 5
    %v1434 = vor.u32 %v1430, %v1433
    %v1435 = vrot.slane %v1434, 4
    %v1437 = vshll.u32 %v1216, 16
    %v1439 = vrot.slane %v1437, 5
    %v1440 = vsel %vm602, %v1435, %v1439
    %1441 = vrot.lane.b32.xlu0 %v1230, 64
    %v1442 = vpop.permute.xlu0 %1441
    %1443 = vrot.lane.b32.xlu0 %v1244, 64
    %v1444 = vpop.permute.xlu0 %1443
    %1445 = vrot.lane.b32.xlu0 %v1258, 64
    %v1446 = vpop.permute.xlu0 %1445
    %1447 = vrot.lane.b32.xlu0 %v1272, 64
    %v1448 = vpop.permute.xlu0 %1447
    %1449 = vrot.lane.b32.xlu0 %v1286, 64
    %v1450 = vpop.permute.xlu0 %1449
    %1451 = vrot.lane.b32.xlu0 %v1300, 64
    %v1452 = vpop.permute.xlu0 %1451
    %1453 = vrot.lane.b32.xlu0 %v1314, 64
    %v1454 = vpop.permute.xlu0 %1453
    %1455 = vrot.lane.b32.xlu0 %v1328, 64
    %v1456 = vpop.permute.xlu0 %1455
    %1457 = vrot.lane.b32.xlu0 %v1342, 64
    %v1458 = vpop.permute.xlu0 %1457
    %1459 = vrot.lane.b32.xlu0 %v1356, 64
    %v1460 = vpop.permute.xlu0 %1459
    %1461 = vrot.lane.b32.xlu0 %v1370, 64
    %v1462 = vpop.permute.xlu0 %1461
    %1463 = vrot.lane.b32.xlu0 %v1384, 64
    %v1464 = vpop.permute.xlu0 %1463
    %1465 = vrot.lane.b32.xlu0 %v1398, 64
    %v1466 = vpop.permute.xlu0 %1465
    %1467 = vrot.lane.b32.xlu0 %v1412, 64
    %v1468 = vpop.permute.xlu0 %1467
    %1469 = vrot.lane.b32.xlu0 %v1426, 64
    %v1470 = vpop.permute.xlu0 %1469
    %1471 = vrot.lane.b32.xlu0 %v1440, 64
    %v1472 = vpop.permute.xlu0 %1471
    %vm1489 = vcmask 650752
    %1490 = vst.msk [vmem:[#allocation3] sm:$0xf] %vm1489, %v1442
    %1491 = vst.msk [vmem:[#allocation3 + $0x8] sm:$0xf] %vm1489, %v1444
    %1492 = vst.msk [vmem:[#allocation3 + $0x10] sm:$0xf] %vm1489, %v1446
    %1493 = vst.msk [vmem:[#allocation3 + $0x18] sm:$0xf] %vm1489, %v1448
    %1494 = vst.msk [vmem:[#allocation3 + $0x20] sm:$0xf] %vm1489, %v1450
    %1495 = vst.msk [vmem:[#allocation3 + $0x28] sm:$0xf] %vm1489, %v1452
    %1496 = vst.msk [vmem:[#allocation3 + $0x30] sm:$0xf] %vm1489, %v1454
    %1497 = vst.msk [vmem:[#allocation3 + $0x38] sm:$0xf] %vm1489, %v1456
    %1498 = vst.msk [vmem:[#allocation3 + $0x40] sm:$0xf] %vm1489, %v1458
    %1499 = vst.msk [vmem:[#allocation3 + $0x48] sm:$0xf] %vm1489, %v1460
    %1500 = vst.msk [vmem:[#allocation3 + $0x50] sm:$0xf] %vm1489, %v1462
    %1501 = vst.msk [vmem:[#allocation3 + $0x58] sm:$0xf] %vm1489, %v1464
    %1502 = vst.msk [vmem:[#allocation3 + $0x60] sm:$0xf] %vm1489, %v1466
    %1503 = vst.msk [vmem:[#allocation3 + $0x68] sm:$0xf] %vm1489, %v1468
    %1504 = vst.msk [vmem:[#allocation3 + $0x70] sm:$0xf] %vm1489, %v1470
    %1505 = vst.msk [vmem:[#allocation3 + $0x78] sm:$0xf] %vm1489, %v1472
    %v1506 = vld [vmem:[%s437] sm:$0xe]
    %v1507 = vld [vmem:[%s437 + $0x4] sm:$0x1]
    %v1508 = vld [vmem:[%s437 + $0x8] sm:$0xe]
    %v1509 = vld [vmem:[%s437 + $0xc] sm:$0x1]
    %v1510 = vld [vmem:[%s437 + $0x10] sm:$0xe]
    %v1511 = vld [vmem:[%s437 + $0x14] sm:$0x1]
    %v1512 = vld [vmem:[%s437 + $0x18] sm:$0xe]
    %v1513 = vld [vmem:[%s437 + $0x1c] sm:$0x1]
    %v1514 = vld [vmem:[%s437 + $0x20] sm:$0xe]
    %v1515 = vld [vmem:[%s437 + $0x24] sm:$0x1]
    %v1516 = vld [vmem:[%s437 + $0x28] sm:$0xe]
    %v1517 = vld [vmem:[%s437 + $0x2c] sm:$0x1]
    %v1518 = vld [vmem:[%s437 + $0x30] sm:$0xe]
    %v1519 = vld [vmem:[%s437 + $0x34] sm:$0x1]
    %v1520 = vld [vmem:[%s437 + $0x38] sm:$0xe]
    %v1521 = vld [vmem:[%s437 + $0x3c] sm:$0x1]
    %v1522 = vld [vmem:[%s437 + $0x50] sm:$0xe]
    %v1523 = vld [vmem:[%s437 + $0x54] sm:$0x1]
    %v1524 = vld [vmem:[%s437 + $0x58] sm:$0xe]
    %v1525 = vld [vmem:[%s437 + $0x5c] sm:$0x1]
    %v1526 = vld [vmem:[%s437 + $0x60] sm:$0xe]
    %v1527 = vld [vmem:[%s437 + $0x64] sm:$0x1]
    %v1528 = vld [vmem:[%s437 + $0x68] sm:$0xe]
    %v1529 = vld [vmem:[%s437 + $0x6c] sm:$0x1]
    %v1530 = vld [vmem:[%s437 + $0x70] sm:$0xe]
    %v1531 = vld [vmem:[%s437 + $0x74] sm:$0x1]
    %v1532 = vld [vmem:[%s437 + $0x78] sm:$0xe]
    %v1533 = vld [vmem:[%s437 + $0x7c] sm:$0x1]
    %v1534 = vld [vmem:[%s437 + $0x80] sm:$0xe]
    %v1535 = vld [vmem:[%s437 + $0x84] sm:$0x1]
    %v1536 = vld [vmem:[%s437 + $0x88] sm:$0xe]
    %v1537 = vld [vmem:[%s437 + $0x8c] sm:$0x1]
    %v1570 = vrot.slane %v1506, 5
    %v1571 = vrot.slane %v1570, 4
    %v1572 = vrot.slane %v1507, 5
    %v1573 = vsel %vm958, %v1571, %v1572
    %v1574 = vrot.slane %v1508, 5
    %v1575 = vrot.slane %v1574, 4
    %v1576 = vrot.slane %v1509, 5
    %v1577 = vsel %vm958, %v1575, %v1576
    %v1578 = vrot.slane %v1510, 5
    %v1579 = vrot.slane %v1578, 4
    %v1580 = vrot.slane %v1511, 5
    %v1581 = vsel %vm958, %v1579, %v1580
    %v1582 = vrot.slane %v1512, 5
    %v1583 = vrot.slane %v1582, 4
    %v1584 = vrot.slane %v1513, 5
    %v1585 = vsel %vm958, %v1583, %v1584
    %v1586 = vrot.slane %v1514, 5
    %v1587 = vrot.slane %v1586, 4
    %v1588 = vrot.slane %v1515, 5
    %v1589 = vsel %vm958, %v1587, %v1588
    %v1590 = vrot.slane %v1516, 5
    %v1591 = vrot.slane %v1590, 4
    %v1592 = vrot.slane %v1517, 5
    %v1593 = vsel %vm958, %v1591, %v1592
    %v1594 = vrot.slane %v1518, 5
    %v1595 = vrot.slane %v1594, 4
    %v1596 = vrot.slane %v1519, 5
    %v1597 = vsel %vm958, %v1595, %v1596
    %v1598 = vrot.slane %v1520, 5
    %v1599 = vrot.slane %v1598, 4
    %v1600 = vrot.slane %v1521, 5
    %v1601 = vsel %vm958, %v1599, %v1600
    %v1602 = vrot.slane %v1522, 5
    %v1603 = vrot.slane %v1602, 4
    %v1604 = vrot.slane %v1523, 5
    %v1605 = vsel %vm958, %v1603, %v1604
    %v1606 = vrot.slane %v1524, 5
    %v1607 = vrot.slane %v1606, 4
    %v1608 = vrot.slane %v1525, 5
    %v1609 = vsel %vm958, %v1607, %v1608
    %v1610 = vrot.slane %v1526, 5
    %v1611 = vrot.slane %v1610, 4
    %v1612 = vrot.slane %v1527, 5
    %v1613 = vsel %vm958, %v1611, %v1612
    %v1614 = vrot.slane %v1528, 5
    %v1615 = vrot.slane %v1614, 4
    %v1616 = vrot.slane %v1529, 5
    %v1617 = vsel %vm958, %v1615, %v1616
    %v1618 = vrot.slane %v1530, 5
    %v1619 = vrot.slane %v1618, 4
    %v1620 = vrot.slane %v1531, 5
    %v1621 = vsel %vm958, %v1619, %v1620
    %v1622 = vrot.slane %v1532, 5
    %v1623 = vrot.slane %v1622, 4
    %v1624 = vrot.slane %v1533, 5
    %v1625 = vsel %vm958, %v1623, %v1624
    %v1626 = vrot.slane %v1534, 5
    %v1627 = vrot.slane %v1626, 4
    %v1628 = vrot.slane %v1535, 5
    %v1629 = vsel %vm958, %v1627, %v1628
    %v1630 = vrot.slane %v1536, 5
    %v1631 = vrot.slane %v1630, 4
    %v1632 = vrot.slane %v1537, 5
    %v1633 = vsel %vm958, %v1631, %v1632
    %1634 = vrot.lane.b32.xlu0 %v1573, 80
    %v1635 = vpop.permute.xlu0 %1634
    %1636 = vrot.lane.b32.xlu0 %v1577, 80
    %v1637 = vpop.permute.xlu0 %1636
    %1638 = vrot.lane.b32.xlu0 %v1581, 80
    %v1639 = vpop.permute.xlu0 %1638
    %1640 = vrot.lane.b32.xlu0 %v1585, 80
    %v1641 = vpop.permute.xlu0 %1640
    %1642 = vrot.lane.b32.xlu0 %v1589, 80
    %v1643 = vpop.permute.xlu0 %1642
    %1644 = vrot.lane.b32.xlu0 %v1593, 80
    %v1645 = vpop.permute.xlu0 %1644
    %1646 = vrot.lane.b32.xlu0 %v1597, 80
    %v1647 = vpop.permute.xlu0 %1646
    %1648 = vrot.lane.b32.xlu0 %v1601, 80
    %v1649 = vpop.permute.xlu0 %1648
    %1650 = vrot.lane.b32.xlu0 %v1605, 80
    %v1651 = vpop.permute.xlu0 %1650
    %1652 = vrot.lane.b32.xlu0 %v1609, 80
    %v1653 = vpop.permute.xlu0 %1652
    %1654 = vrot.lane.b32.xlu0 %v1613, 80
    %v1655 = vpop.permute.xlu0 %1654
    %1656 = vrot.lane.b32.xlu0 %v1617, 80
    %v1657 = vpop.permute.xlu0 %1656
    %1658 = vrot.lane.b32.xlu0 %v1621, 80
    %v1659 = vpop.permute.xlu0 %1658
    %1660 = vrot.lane.b32.xlu0 %v1625, 80
    %v1661 = vpop.permute.xlu0 %1660
    %1662 = vrot.lane.b32.xlu0 %v1629, 80
    %v1663 = vpop.permute.xlu0 %1662
    %1664 = vrot.lane.b32.xlu0 %v1633, 80
    %v1665 = vpop.permute.xlu0 %1664
    %vm1682 = vcmask 781952
    %1683 = vst.msk [vmem:[#allocation3] sm:$0xf] %vm1682, %v1635
    %1684 = vst.msk [vmem:[#allocation3 + $0x8] sm:$0xf] %vm1682, %v1637
    %1685 = vst.msk [vmem:[#allocation3 + $0x10] sm:$0xf] %vm1682, %v1639
    %1686 = vst.msk [vmem:[#allocation3 + $0x18] sm:$0xf] %vm1682, %v1641
    %1687 = vst.msk [vmem:[#allocation3 + $0x20] sm:$0xf] %vm1682, %v1643
    %1688 = vst.msk [vmem:[#allocation3 + $0x28] sm:$0xf] %vm1682, %v1645
    %1689 = vst.msk [vmem:[#allocation3 + $0x30] sm:$0xf] %vm1682, %v1647
    %1690 = vst.msk [vmem:[#allocation3 + $0x38] sm:$0xf] %vm1682, %v1649
    %1691 = vst.msk [vmem:[#allocation3 + $0x40] sm:$0xf] %vm1682, %v1651
    %1692 = vst.msk [vmem:[#allocation3 + $0x48] sm:$0xf] %vm1682, %v1653
    %1693 = vst.msk [vmem:[#allocation3 + $0x50] sm:$0xf] %vm1682, %v1655
    %1694 = vst.msk [vmem:[#allocation3 + $0x58] sm:$0xf] %vm1682, %v1657
    %1695 = vst.msk [vmem:[#allocation3 + $0x60] sm:$0xf] %vm1682, %v1659
    %1696 = vst.msk [vmem:[#allocation3 + $0x68] sm:$0xf] %vm1682, %v1661
    %1697 = vst.msk [vmem:[#allocation3 + $0x70] sm:$0xf] %vm1682, %v1663
    %1698 = vst.msk [vmem:[#allocation3 + $0x78] sm:$0xf] %vm1682, %v1665
    %s1699 = scalar_lea.vmem [#allocation2], 16
    %v1700 = vld [vmem:[%s1699] sm:$0xf]
    %v1701 = vld [vmem:[%s1699 + $0x8] sm:$0xf]
    %v1702 = vld [vmem:[%s1699 + $0x10] sm:$0xf]
    %v1703 = vld [vmem:[%s1699 + $0x18] sm:$0xf]
    %v1704 = vld [vmem:[%s1699 + $0x20] sm:$0xf]
    %v1705 = vld [vmem:[%s1699 + $0x28] sm:$0xf]
    %v1706 = vld [vmem:[%s1699 + $0x30] sm:$0xf]
    %v1707 = vld [vmem:[%s1699 + $0x38] sm:$0xf]
    %v1708 = vld [vmem:[%s1699 + $0x50] sm:$0xf]
    %v1709 = vld [vmem:[%s1699 + $0x58] sm:$0xf]
    %v1710 = vld [vmem:[%s1699 + $0x60] sm:$0xf]
    %v1711 = vld [vmem:[%s1699 + $0x68] sm:$0xf]
    %v1712 = vld [vmem:[%s1699 + $0x70] sm:$0xf]
    %v1713 = vld [vmem:[%s1699 + $0x78] sm:$0xf]
    %v1714 = vld [vmem:[%s1699 + $0x80] sm:$0xf]
    %v1715 = vld [vmem:[%s1699 + $0x88] sm:$0xf]
    %1732 = vrot.lane.b32.xlu0 %v1700, 96
    %v1733 = vpop.permute.xlu0 %1732
    %1734 = vrot.lane.b32.xlu0 %v1701, 96
    %v1735 = vpop.permute.xlu0 %1734
    %1736 = vrot.lane.b32.xlu0 %v1702, 96
    %v1737 = vpop.permute.xlu0 %1736
    %1738 = vrot.lane.b32.xlu0 %v1703, 96
    %v1739 = vpop.permute.xlu0 %1738
    %1740 = vrot.lane.b32.xlu0 %v1704, 96
    %v1741 = vpop.permute.xlu0 %1740
    %1742 = vrot.lane.b32.xlu0 %v1705, 96
    %v1743 = vpop.permute.xlu0 %1742
    %1744 = vrot.lane.b32.xlu0 %v1706, 96
    %v1745 = vpop.permute.xlu0 %1744
    %1746 = vrot.lane.b32.xlu0 %v1707, 96
    %v1747 = vpop.permute.xlu0 %1746
    %1748 = vrot.lane.b32.xlu0 %v1708, 96
    %v1749 = vpop.permute.xlu0 %1748
    %1750 = vrot.lane.b32.xlu0 %v1709, 96
    %v1751 = vpop.permute.xlu0 %1750
    %1752 = vrot.lane.b32.xlu0 %v1710, 96
    %v1753 = vpop.permute.xlu0 %1752
    %1754 = vrot.lane.b32.xlu0 %v1711, 96
    %v1755 = vpop.permute.xlu0 %1754
    %1756 = vrot.lane.b32.xlu0 %v1712, 96
    %v1757 = vpop.permute.xlu0 %1756
    %1758 = vrot.lane.b32.xlu0 %v1713, 96
    %v1759 = vpop.permute.xlu0 %1758
    %1760 = vrot.lane.b32.xlu0 %v1714, 96
    %v1761 = vpop.permute.xlu0 %1760
    %1762 = vrot.lane.b32.xlu0 %v1715, 96
    %v1763 = vpop.permute.xlu0 %1762
    %vm1780 = vcmask 913152
    %1781 = vst.msk [vmem:[#allocation3] sm:$0xf] %vm1780, %v1733
    %1782 = vst.msk [vmem:[#allocation3 + $0x8] sm:$0xf] %vm1780, %v1735
    %1783 = vst.msk [vmem:[#allocation3 + $0x10] sm:$0xf] %vm1780, %v1737
    %1784 = vst.msk [vmem:[#allocation3 + $0x18] sm:$0xf] %vm1780, %v1739
    %1785 = vst.msk [vmem:[#allocation3 + $0x20] sm:$0xf] %vm1780, %v1741
    %1786 = vst.msk [vmem:[#allocation3 + $0x28] sm:$0xf] %vm1780, %v1743
    %1787 = vst.msk [vmem:[#allocation3 + $0x30] sm:$0xf] %vm1780, %v1745
    %1788 = vst.msk [vmem:[#allocation3 + $0x38] sm:$0xf] %vm1780, %v1747
    %1789 = vst.msk [vmem:[#allocation3 + $0x40] sm:$0xf] %vm1780, %v1749
    %1790 = vst.msk [vmem:[#allocation3 + $0x48] sm:$0xf] %vm1780, %v1751
    %1791 = vst.msk [vmem:[#allocation3 + $0x50] sm:$0xf] %vm1780, %v1753
    %1792 = vst.msk [vmem:[#allocation3 + $0x58] sm:$0xf] %vm1780, %v1755
    %1793 = vst.msk [vmem:[#allocation3 + $0x60] sm:$0xf] %vm1780, %v1757
    %1794 = vst.msk [vmem:[#allocation3 + $0x68] sm:$0xf] %vm1780, %v1759
    %1795 = vst.msk [vmem:[#allocation3 + $0x70] sm:$0xf] %vm1780, %v1761
    %1796 = vst.msk [vmem:[#allocation3 + $0x78] sm:$0xf] %vm1780, %v1763
    %v1797 = vld [vmem:[%s1699] sm:$0xf]
    %v1798 = vld [vmem:[%s1699 + $0x4] sm:$0x1]
    %v1799 = vld [vmem:[%s1699 + $0x8] sm:$0xf]
    %v1800 = vld [vmem:[%s1699 + $0xc] sm:$0x1]
    %v1801 = vld [vmem:[%s1699 + $0x10] sm:$0xf]
    %v1802 = vld [vmem:[%s1699 + $0x14] sm:$0x1]
    %v1803 = vld [vmem:[%s1699 + $0x18] sm:$0xf]
    %v1804 = vld [vmem:[%s1699 + $0x1c] sm:$0x1]
    %v1805 = vld [vmem:[%s1699 + $0x20] sm:$0xf]
    %v1806 = vld [vmem:[%s1699 + $0x24] sm:$0x1]
    %v1807 = vld [vmem:[%s1699 + $0x28] sm:$0xf]
    %v1808 = vld [vmem:[%s1699 + $0x2c] sm:$0x1]
    %v1809 = vld [vmem:[%s1699 + $0x30] sm:$0xf]
    %v1810 = vld [vmem:[%s1699 + $0x34] sm:$0x1]
    %v1811 = vld [vmem:[%s1699 + $0x38] sm:$0xf]
    %v1812 = vld [vmem:[%s1699 + $0x3c] sm:$0x1]
    %v1813 = vld [vmem:[%s1699 + $0x50] sm:$0xf]
    %v1814 = vld [vmem:[%s1699 + $0x54] sm:$0x1]
    %v1815 = vld [vmem:[%s1699 + $0x58] sm:$0xf]
    %v1816 = vld [vmem:[%s1699 + $0x5c] sm:$0x1]
    %v1817 = vld [vmem:[%s1699 + $0x60] sm:$0xf]
    %v1818 = vld [vmem:[%s1699 + $0x64] sm:$0x1]
    %v1819 = vld [vmem:[%s1699 + $0x68] sm:$0xf]
    %v1820 = vld [vmem:[%s1699 + $0x6c] sm:$0x1]
    %v1821 = vld [vmem:[%s1699 + $0x70] sm:$0xf]
    %v1822 = vld [vmem:[%s1699 + $0x74] sm:$0x1]
    %v1823 = vld [vmem:[%s1699 + $0x78] sm:$0xf]
    %v1824 = vld [vmem:[%s1699 + $0x7c] sm:$0x1]
    %v1825 = vld [vmem:[%s1699 + $0x80] sm:$0xf]
    %v1826 = vld [vmem:[%s1699 + $0x84] sm:$0x1]
    %v1827 = vld [vmem:[%s1699 + $0x88] sm:$0xf]
    %v1828 = vld [vmem:[%s1699 + $0x8c] sm:$0x1]
    %v1830 = vshrl.u32 %v1797, 16
    %v1832 = vrot.slane %v1830, 4
    %v1833 = vshll.u32 %v1797, 16
    %v1835 = vrot.slane %v1833, 5
    %v1836 = vor.u32 %v1832, %v1835
    %v1837 = vrot.slane %v1836, 4
    %v1839 = vshll.u32 %v1798, 16
    %v1841 = vrot.slane %v1839, 5
    %v1842 = vsel %vm602, %v1837, %v1841
    %v1844 = vshrl.u32 %v1799, 16
    %v1846 = vrot.slane %v1844, 4
    %v1847 = vshll.u32 %v1799, 16
    %v1849 = vrot.slane %v1847, 5
    %v1850 = vor.u32 %v1846, %v1849
    %v1851 = vrot.slane %v1850, 4
    %v1853 = vshll.u32 %v1800, 16
    %v1855 = vrot.slane %v1853, 5
    %v1856 = vsel %vm602, %v1851, %v1855
    %v1858 = vshrl.u32 %v1801, 16
    %v1860 = vrot.slane %v1858, 4
    %v1861 = vshll.u32 %v1801, 16
    %v1863 = vrot.slane %v1861, 5
    %v1864 = vor.u32 %v1860, %v1863
    %v1865 = vrot.slane %v1864, 4
    %v1867 = vshll.u32 %v1802, 16
    %v1869 = vrot.slane %v1867, 5
    %v1870 = vsel %vm602, %v1865, %v1869
    %v1872 = vshrl.u32 %v1803, 16
    %v1874 = vrot.slane %v1872, 4
    %v1875 = vshll.u32 %v1803, 16
    %v1877 = vrot.slane %v1875, 5
    %v1878 = vor.u32 %v1874, %v1877
    %v1879 = vrot.slane %v1878, 4
    %v1881 = vshll.u32 %v1804, 16
    %v1883 = vrot.slane %v1881, 5
    %v1884 = vsel %vm602, %v1879, %v1883
    %v1886 = vshrl.u32 %v1805, 16
    %v1888 = vrot.slane %v1886, 4
    %v1889 = vshll.u32 %v1805, 16
    %v1891 = vrot.slane %v1889, 5
    %v1892 = vor.u32 %v1888, %v1891
    %v1893 = vrot.slane %v1892, 4
    %v1895 = vshll.u32 %v1806, 16
    %v1897 = vrot.slane %v1895, 5
    %v1898 = vsel %vm602, %v1893, %v1897
    %v1900 = vshrl.u32 %v1807, 16
    %v1902 = vrot.slane %v1900, 4
    %v1903 = vshll.u32 %v1807, 16
    %v1905 = vrot.slane %v1903, 5
    %v1906 = vor.u32 %v1902, %v1905
    %v1907 = vrot.slane %v1906, 4
    %v1909 = vshll.u32 %v1808, 16
    %v1911 = vrot.slane %v1909, 5
    %v1912 = vsel %vm602, %v1907, %v1911
    %v1914 = vshrl.u32 %v1809, 16
    %v1916 = vrot.slane %v1914, 4
    %v1917 = vshll.u32 %v1809, 16
    %v1919 = vrot.slane %v1917, 5
    %v1920 = vor.u32 %v1916, %v1919
    %v1921 = vrot.slane %v1920, 4
    %v1923 = vshll.u32 %v1810, 16
    %v1925 = vrot.slane %v1923, 5
    %v1926 = vsel %vm602, %v1921, %v1925
    %v1928 = vshrl.u32 %v1811, 16
    %v1930 = vrot.slane %v1928, 4
    %v1931 = vshll.u32 %v1811, 16
    %v1933 = vrot.slane %v1931, 5
    %v1934 = vor.u32 %v1930, %v1933
    %v1935 = vrot.slane %v1934, 4
    %v1937 = vshll.u32 %v1812, 16
    %v1939 = vrot.slane %v1937, 5
    %v1940 = vsel %vm602, %v1935, %v1939
    %v1942 = vshrl.u32 %v1813, 16
    %v1944 = vrot.slane %v1942, 4
    %v1945 = vshll.u32 %v1813, 16
    %v1947 = vrot.slane %v1945, 5
    %v1948 = vor.u32 %v1944, %v1947
    %v1949 = vrot.slane %v1948, 4
    %v1951 = vshll.u32 %v1814, 16
    %v1953 = vrot.slane %v1951, 5
    %v1954 = vsel %vm602, %v1949, %v1953
    %v1956 = vshrl.u32 %v1815, 16
    %v1958 = vrot.slane %v1956, 4
    %v1959 = vshll.u32 %v1815, 16
    %v1961 = vrot.slane %v1959, 5
    %v1962 = vor.u32 %v1958, %v1961
    %v1963 = vrot.slane %v1962, 4
    %v1965 = vshll.u32 %v1816, 16
    %v1967 = vrot.slane %v1965, 5
    %v1968 = vsel %vm602, %v1963, %v1967
    %v1970 = vshrl.u32 %v1817, 16
    %v1972 = vrot.slane %v1970, 4
    %v1973 = vshll.u32 %v1817, 16
    %v1975 = vrot.slane %v1973, 5
    %v1976 = vor.u32 %v1972, %v1975
    %v1977 = vrot.slane %v1976, 4
    %v1979 = vshll.u32 %v1818, 16
    %v1981 = vrot.slane %v1979, 5
    %v1982 = vsel %vm602, %v1977, %v1981
    %v1984 = vshrl.u32 %v1819, 16
    %v1986 = vrot.slane %v1984, 4
    %v1987 = vshll.u32 %v1819, 16
    %v1989 = vrot.slane %v1987, 5
    %v1990 = vor.u32 %v1986, %v1989
    %v1991 = vrot.slane %v1990, 4
    %v1993 = vshll.u32 %v1820, 16
    %v1995 = vrot.slane %v1993, 5
    %v1996 = vsel %vm602, %v1991, %v1995
    %v1998 = vshrl.u32 %v1821, 16
    %v2000 = vrot.slane %v1998, 4
    %v2001 = vshll.u32 %v1821, 16
    %v2003 = vrot.slane %v2001, 5
    %v2004 = vor.u32 %v2000, %v2003
    %v2005 = vrot.slane %v2004, 4
    %v2007 = vshll.u32 %v1822, 16
    %v2009 = vrot.slane %v2007, 5
    %v2010 = vsel %vm602, %v2005, %v2009
    %v2012 = vshrl.u32 %v1823, 16
    %v2014 = vrot.slane %v2012, 4
    %v2015 = vshll.u32 %v1823, 16
    %v2017 = vrot.slane %v2015, 5
    %v2018 = vor.u32 %v2014, %v2017
    %v2019 = vrot.slane %v2018, 4
    %v2021 = vshll.u32 %v1824, 16
    %v2023 = vrot.slane %v2021, 5
    %v2024 = vsel %vm602, %v2019, %v2023
    %v2026 = vshrl.u32 %v1825, 16
    %v2028 = vrot.slane %v2026, 4
    %v2029 = vshll.u32 %v1825, 16
    %v2031 = vrot.slane %v2029, 5
    %v2032 = vor.u32 %v2028, %v2031
    %v2033 = vrot.slane %v2032, 4
    %v2035 = vshll.u32 %v1826, 16
    %v2037 = vrot.slane %v2035, 5
    %v2038 = vsel %vm602, %v2033, %v2037
    %v2040 = vshrl.u32 %v1827, 16
    %v2042 = vrot.slane %v2040, 4
    %v2043 = vshll.u32 %v1827, 16
    %v2045 = vrot.slane %v2043, 5
    %v2046 = vor.u32 %v2042, %v2045
    %v2047 = vrot.slane %v2046, 4
    %v2049 = vshll.u32 %v1828, 16
    %v2051 = vrot.slane %v2049, 5
    %v2052 = vsel %vm602, %v2047, %v2051
    %2053 = vrot.lane.b32.xlu0 %v1842, 112
    %v2054 = vpop.permute.xlu0 %2053
    %2055 = vrot.lane.b32.xlu0 %v1856, 112
    %v2056 = vpop.permute.xlu0 %2055
    %2057 = vrot.lane.b32.xlu0 %v1870, 112
    %v2058 = vpop.permute.xlu0 %2057
    %2059 = vrot.lane.b32.xlu0 %v1884, 112
    %v2060 = vpop.permute.xlu0 %2059
    %2061 = vrot.lane.b32.xlu0 %v1898, 112
    %v2062 = vpop.permute.xlu0 %2061
    %2063 = vrot.lane.b32.xlu0 %v1912, 112
    %v2064 = vpop.permute.xlu0 %2063
    %2065 = vrot.lane.b32.xlu0 %v1926, 112
    %v2066 = vpop.permute.xlu0 %2065
    %2067 = vrot.lane.b32.xlu0 %v1940, 112
    %v2068 = vpop.permute.xlu0 %2067
    %2069 = vrot.lane.b32.xlu0 %v1954, 112
    %v2070 = vpop.permute.xlu0 %2069
    %2071 = vrot.lane.b32.xlu0 %v1968, 112
    %v2072 = vpop.permute.xlu0 %2071
    %2073 = vrot.lane.b32.xlu0 %v1982, 112
    %v2074 = vpop.permute.xlu0 %2073
    %2075 = vrot.lane.b32.xlu0 %v1996, 112
    %v2076 = vpop.permute.xlu0 %2075
    %2077 = vrot.lane.b32.xlu0 %v2010, 112
    %v2078 = vpop.permute.xlu0 %2077
    %2079 = vrot.lane.b32.xlu0 %v2024, 112
    %v2080 = vpop.permute.xlu0 %2079
    %2081 = vrot.lane.b32.xlu0 %v2038, 112
    %v2082 = vpop.permute.xlu0 %2081
    %2083 = vrot.lane.b32.xlu0 %v2052, 112
    %v2084 = vpop.permute.xlu0 %2083
    %vm2101 = vcmask 1044352
    %2102 = vst.msk [vmem:[#allocation3] sm:$0xf] %vm2101, %v2054
    %2103 = vst.msk [vmem:[#allocation3 + $0x8] sm:$0xf] %vm2101, %v2056
    %2104 = vst.msk [vmem:[#allocation3 + $0x10] sm:$0xf] %vm2101, %v2058
    %2105 = vst.msk [vmem:[#allocation3 + $0x18] sm:$0xf] %vm2101, %v2060
    %2106 = vst.msk [vmem:[#allocation3 + $0x20] sm:$0xf] %vm2101, %v2062
    %2107 = vst.msk [vmem:[#allocation3 + $0x28] sm:$0xf] %vm2101, %v2064
    %2108 = vst.msk [vmem:[#allocation3 + $0x30] sm:$0xf] %vm2101, %v2066
    %2109 = vst.msk [vmem:[#allocation3 + $0x38] sm:$0xf] %vm2101, %v2068
    %2110 = vst.msk [vmem:[#allocation3 + $0x40] sm:$0xf] %vm2101, %v2070
    %2111 = vst.msk [vmem:[#allocation3 + $0x48] sm:$0xf] %vm2101, %v2072
    %2112 = vst.msk [vmem:[#allocation3 + $0x50] sm:$0xf] %vm2101, %v2074
    %2113 = vst.msk [vmem:[#allocation3 + $0x58] sm:$0xf] %vm2101, %v2076
    %2114 = vst.msk [vmem:[#allocation3 + $0x60] sm:$0xf] %vm2101, %v2078
    %2115 = vst.msk [vmem:[#allocation3 + $0x68] sm:$0xf] %vm2101, %v2080
    %2116 = vst.msk [vmem:[#allocation3 + $0x70] sm:$0xf] %vm2101, %v2082
    %2117 = vst.msk [vmem:[#allocation3 + $0x78] sm:$0xf] %vm2101, %v2084
    %v2118 = vld [vmem:[%s1699] sm:$0xe]
    %v2119 = vld [vmem:[%s1699 + $0x4] sm:$0x1]
    %v2120 = vld [vmem:[%s1699 + $0x8] sm:$0xe]
    %v2121 = vld [vmem:[%s1699 + $0xc] sm:$0x1]
    %v2122 = vld [vmem:[%s1699 + $0x10] sm:$0xe]
    %v2123 = vld [vmem:[%s1699 + $0x14] sm:$0x1]
    %v2124 = vld [vmem:[%s1699 + $0x18] sm:$0xe]
    %v2125 = vld [vmem:[%s1699 + $0x1c] sm:$0x1]
    %v2126 = vld [vmem:[%s1699 + $0x20] sm:$0xe]
    %v2127 = vld [vmem:[%s1699 + $0x24] sm:$0x1]
    %v2128 = vld [vmem:[%s1699 + $0x28] sm:$0xe]
    %v2129 = vld [vmem:[%s1699 + $0x2c] sm:$0x1]
    %v2130 = vld [vmem:[%s1699 + $0x30] sm:$0xe]
    %v2131 = vld [vmem:[%s1699 + $0x34] sm:$0x1]
    %v2132 = vld [vmem:[%s1699 + $0x38] sm:$0xe]
    %v2133 = vld [vmem:[%s1699 + $0x3c] sm:$0x1]
    %v2134 = vld [vmem:[%s1699 + $0x50] sm:$0xe]
    %v2135 = vld [vmem:[%s1699 + $0x54] sm:$0x1]
    %v2136 = vld [vmem:[%s1699 + $0x58] sm:$0xe]
    %v2137 = vld [vmem:[%s1699 + $0x5c] sm:$0x1]
    %v2138 = vld [vmem:[%s1699 + $0x60] sm:$0xe]
    %v2139 = vld [vmem:[%s1699 + $0x64] sm:$0x1]
    %v2140 = vld [vmem:[%s1699 + $0x68] sm:$0xe]
    %v2141 = vld [vmem:[%s1699 + $0x6c] sm:$0x1]
    %v2142 = vld [vmem:[%s1699 + $0x70] sm:$0xe]
    %v2143 = vld [vmem:[%s1699 + $0x74] sm:$0x1]
    %v2144 = vld [vmem:[%s1699 + $0x78] sm:$0xe]
    %v2145 = vld [vmem:[%s1699 + $0x7c] sm:$0x1]
    %v2146 = vld [vmem:[%s1699 + $0x80] sm:$0xe]
    %v2147 = vld [vmem:[%s1699 + $0x84] sm:$0x1]
    %v2148 = vld [vmem:[%s1699 + $0x88] sm:$0xe]
    %v2149 = vld [vmem:[%s1699 + $0x8c] sm:$0x1]
    %v2182 = vrot.slane %v2118, 5
    %v2183 = vrot.slane %v2182, 4
    %v2184 = vrot.slane %v2119, 5
    %v2185 = vsel %vm958, %v2183, %v2184
    %v2186 = vrot.slane %v2120, 5
    %v2187 = vrot.slane %v2186, 4
    %v2188 = vrot.slane %v2121, 5
    %v2189 = vsel %vm958, %v2187, %v2188
    %v2190 = vrot.slane %v2122, 5
    %v2191 = vrot.slane %v2190, 4
    %v2192 = vrot.slane %v2123, 5
    %v2193 = vsel %vm958, %v2191, %v2192
    %v2194 = vrot.slane %v2124, 5
    %v2195 = vrot.slane %v2194, 4
    %v2196 = vrot.slane %v2125, 5
    %v2197 = vsel %vm958, %v2195, %v2196
    %v2198 = vrot.slane %v2126, 5
    %v2199 = vrot.slane %v2198, 4
    %v2200 = vrot.slane %v2127, 5
    %v2201 = vsel %vm958, %v2199, %v2200
    %v2202 = vrot.slane %v2128, 5
    %v2203 = vrot.slane %v2202, 4
    %v2204 = vrot.slane %v2129, 5
    %v2205 = vsel %vm958, %v2203, %v2204
    %v2206 = vrot.slane %v2130, 5
    %v2207 = vrot.slane %v2206, 4
    %v2208 = vrot.slane %v2131, 5
    %v2209 = vsel %vm958, %v2207, %v2208
    %v2210 = vrot.slane %v2132, 5
    %v2211 = vrot.slane %v2210, 4
    %v2212 = vrot.slane %v2133, 5
    %v2213 = vsel %vm958, %v2211, %v2212
    %v2214 = vrot.slane %v2134, 5
    %v2215 = vrot.slane %v2214, 4
    %v2216 = vrot.slane %v2135, 5
    %v2217 = vsel %vm958, %v2215, %v2216
    %v2218 = vrot.slane %v2136, 5
    %v2219 = vrot.slane %v2218, 4
    %v2220 = vrot.slane %v2137, 5
    %v2221 = vsel %vm958, %v2219, %v2220
    %v2222 = vrot.slane %v2138, 5
    %v2223 = vrot.slane %v2222, 4
    %v2224 = vrot.slane %v2139, 5
    %v2225 = vsel %vm958, %v2223, %v2224
    %v2226 = vrot.slane %v2140, 5
    %v2227 = vrot.slane %v2226, 4
    %v2228 = vrot.slane %v2141, 5
    %v2229 = vsel %vm958, %v2227, %v2228
    %v2230 = vrot.slane %v2142, 5
    %v2231 = vrot.slane %v2230, 4
    %v2232 = vrot.slane %v2143, 5
    %v2233 = vsel %vm958, %v2231, %v2232
    %v2234 = vrot.slane %v2144, 5
    %v2235 = vrot.slane %v2234, 4
    %v2236 = vrot.slane %v2145, 5
    %v2237 = vsel %vm958, %v2235, %v2236
    %v2238 = vrot.slane %v2146, 5
    %v2239 = vrot.slane %v2238, 4
    %v2240 = vrot.slane %v2147, 5
    %v2241 = vsel %vm958, %v2239, %v2240
    %v2242 = vrot.slane %v2148, 5
    %v2243 = vrot.slane %v2242, 4
    %v2244 = vrot.slane %v2149, 5
    %v2245 = vsel %vm958, %v2243, %v2244
    %2262 = vst.msk [vmem:[#allocation3 + $0x4] sm:$0xf] %vm37, %v2185
    %2263 = vst.msk [vmem:[#allocation3 + $0xc] sm:$0xf] %vm37, %v2189
    %2264 = vst.msk [vmem:[#allocation3 + $0x14] sm:$0xf] %vm37, %v2193
    %2265 = vst.msk [vmem:[#allocation3 + $0x1c] sm:$0xf] %vm37, %v2197
    %2266 = vst.msk [vmem:[#allocation3 + $0x24] sm:$0xf] %vm37, %v2201
    %2267 = vst.msk [vmem:[#allocation3 + $0x2c] sm:$0xf] %vm37, %v2205
    %2268 = vst.msk [vmem:[#allocation3 + $0x34] sm:$0xf] %vm37, %v2209
    %2269 = vst.msk [vmem:[#allocation3 + $0x3c] sm:$0xf] %vm37, %v2213
    %2270 = vst.msk [vmem:[#allocation3 + $0x44] sm:$0xf] %vm37, %v2217
    %2271 = vst.msk [vmem:[#allocation3 + $0x4c] sm:$0xf] %vm37, %v2221
    %2272 = vst.msk [vmem:[#allocation3 + $0x54] sm:$0xf] %vm37, %v2225
    %2273 = vst.msk [vmem:[#allocation3 + $0x5c] sm:$0xf] %vm37, %v2229
    %2274 = vst.msk [vmem:[#allocation3 + $0x64] sm:$0xf] %vm37, %v2233
    %2275 = vst.msk [vmem:[#allocation3 + $0x6c] sm:$0xf] %vm37, %v2237
    %2276 = vst.msk [vmem:[#allocation3 + $0x74] sm:$0xf] %vm37, %v2241
    %2277 = vst.msk [vmem:[#allocation3 + $0x7c] sm:$0xf] %vm37, %v2245
    %v2278 = vld [vmem:[#allocation3] sm:$0xff]
    %v2279 = vld [vmem:[#allocation3 + $0x8] sm:$0xff]
    %v2280 = vld [vmem:[#allocation3 + $0x10] sm:$0xff]
    %v2281 = vld [vmem:[#allocation3 + $0x18] sm:$0xff]
    %v2282 = vld [vmem:[#allocation3 + $0x20] sm:$0xff]
    %v2283 = vld [vmem:[#allocation3 + $0x28] sm:$0xff]
    %v2284 = vld [vmem:[#allocation3 + $0x30] sm:$0xff]
    %v2285 = vld [vmem:[#allocation3 + $0x38] sm:$0xff]
    %v2286 = vld [vmem:[#allocation3 + $0x40] sm:$0xff]
    %v2287 = vld [vmem:[#allocation3 + $0x48] sm:$0xff]
    %v2288 = vld [vmem:[#allocation3 + $0x50] sm:$0xff]
    %v2289 = vld [vmem:[#allocation3 + $0x58] sm:$0xff]
    %v2290 = vld [vmem:[#allocation3 + $0x60] sm:$0xff]
    %v2291 = vld [vmem:[#allocation3 + $0x68] sm:$0xff]
    %v2292 = vld [vmem:[#allocation3 + $0x70] sm:$0xff]
    %v2293 = vld [vmem:[#allocation3 + $0x78] sm:$0xff]
    %v2294 = vld [vmem:[#allocation4] sm:$0xf]
    %v2295 = vld [vmem:[#allocation4 + $0x4] sm:$0xf]
    %v2296 = vld [vmem:[#allocation4 + $0x8] sm:$0xf]
    %v2297 = vld [vmem:[#allocation4 + $0xc] sm:$0xf]
    %v2298 = vld [vmem:[#allocation4 + $0x10] sm:$0xf]
    %v2299 = vld [vmem:[#allocation4 + $0x14] sm:$0xf]
    %v2300 = vld [vmem:[#allocation4 + $0x18] sm:$0xf]
    %v2301 = vld [vmem:[#allocation4 + $0x1c] sm:$0xf]
    %v2302 = vld [vmem:[#allocation4 + $0x20] sm:$0xf]
    %v2303 = vld [vmem:[#allocation4 + $0x24] sm:$0xf]
    %v2304 = vld [vmem:[#allocation4 + $0x28] sm:$0xf]
    %v2305 = vld [vmem:[#allocation4 + $0x2c] sm:$0xf]
    %v2306 = vld [vmem:[#allocation4 + $0x30] sm:$0xf]
    %v2307 = vld [vmem:[#allocation4 + $0x34] sm:$0xf]
    %v2308 = vld [vmem:[#allocation4 + $0x38] sm:$0xf]
    %v2309 = vld [vmem:[#allocation4 + $0x3c] sm:$0xf]
    %v2310 = vld [vmem:[#allocation4 + $0x40] sm:$0xf]
    %v2311 = vld [vmem:[#allocation4 + $0x44] sm:$0xf]
    %v2328 = vunpack.c.l.b16 %v2278
    %v2329 = vunpack.c.h.b16 %v2278
    %v2330 = vunpack.c.l.b16 %v2279
    %v2331 = vunpack.c.h.b16 %v2279
    %v2332 = vunpack.c.l.b16 %v2280
    %v2333 = vunpack.c.h.b16 %v2280
    %v2334 = vunpack.c.l.b16 %v2281
    %v2335 = vunpack.c.h.b16 %v2281
    %v2336 = vunpack.c.l.b16 %v2282
    %v2337 = vunpack.c.h.b16 %v2282
    %v2338 = vunpack.c.l.b16 %v2283
    %v2339 = vunpack.c.h.b16 %v2283
    %v2340 = vunpack.c.l.b16 %v2284
    %v2341 = vunpack.c.h.b16 %v2284
    %v2342 = vunpack.c.l.b16 %v2285
    %v2343 = vunpack.c.h.b16 %v2285
    %v2344 = vunpack.c.l.b16 %v2286
    %v2345 = vunpack.c.h.b16 %v2286
    %v2346 = vunpack.c.l.b16 %v2287
    %v2347 = vunpack.c.h.b16 %v2287
    %v2348 = vunpack.c.l.b16 %v2288
    %v2349 = vunpack.c.h.b16 %v2288
    %v2350 = vunpack.c.l.b16 %v2289
    %v2351 = vunpack.c.h.b16 %v2289
    %v2352 = vunpack.c.l.b16 %v2290
    %v2353 = vunpack.c.h.b16 %v2290
    %v2354 = vunpack.c.l.b16 %v2291
    %v2355 = vunpack.c.h.b16 %v2291
    %v2356 = vunpack.c.l.b16 %v2292
    %v2357 = vunpack.c.h.b16 %v2292
    %v2358 = vunpack.c.l.b16 %v2293
    %v2359 = vunpack.c.h.b16 %v2293
    %v2360 = vpack.c.b16 %v2330, %v2328
    %v2361 = vpack.c.b16 %v2331, %v2329
    %v2362 = vpack.c.b16 %v2334, %v2332
    %v2363 = vpack.c.b16 %v2335, %v2333
    %v2364 = vpack.c.b16 %v2338, %v2336
    %v2365 = vpack.c.b16 %v2339, %v2337
    %v2366 = vpack.c.b16 %v2342, %v2340
    %v2367 = vpack.c.b16 %v2343, %v2341
    %v2368 = vpack.c.b16 %v2346, %v2344
    %v2369 = vpack.c.b16 %v2347, %v2345
    %v2370 = vpack.c.b16 %v2350, %v2348
    %v2371 = vpack.c.b16 %v2351, %v2349
    %v2372 = vpack.c.b16 %v2354, %v2352
    %v2373 = vpack.c.b16 %v2355, %v2353
    %v2374 = vpack.c.b16 %v2358, %v2356
    %v2375 = vpack.c.b16 %v2359, %v2357
    %v2402 = vunpack.c.l.b16 %v2294
    %v2403 = vunpack.c.l.b16 %v2295
    %v2404 = vunpack.c.l.b16 %v2296
    %v2405 = vunpack.c.l.b16 %v2297
    %v2406 = vunpack.c.l.b16 %v2298
    %v2407 = vunpack.c.l.b16 %v2299
    %v2408 = vunpack.c.l.b16 %v2300
    %v2409 = vunpack.c.l.b16 %v2301
    %v2410 = vunpack.c.l.b16 %v2302
    %v2411 = vunpack.c.l.b16 %v2303
    %v2412 = vunpack.c.l.b16 %v2304
    %v2413 = vunpack.c.l.b16 %v2305
    %v2414 = vunpack.c.l.b16 %v2306
    %v2415 = vunpack.c.l.b16 %v2307
    %v2416 = vunpack.c.l.b16 %v2308
    %v2417 = vunpack.c.l.b16 %v2309
    %v2418 = vunpack.c.l.b16 %v2310
    %v2419 = vunpack.c.l.b16 %v2311
    %v2420 = vpack.c.b16 %v2403, %v2402
    %v2421 = vpack.c.b16 %v2405, %v2404
    %v2422 = vpack.c.b16 %v2407, %v2406
    %v2423 = vpack.c.b16 %v2409, %v2408
    %v2424 = vpack.c.b16 %v2411, %v2410
    %v2425 = vpack.c.b16 %v2413, %v2412
    %v2426 = vpack.c.b16 %v2415, %v2414
    %v2427 = vpack.c.b16 %v2417, %v2416
    %v2428 = vpack.c.b16 %v2419, %v2418
    %vm2438 = vcmask 130048
    %v2440 = vsel %vm2438, %v2361, 0
    %v2443 = vsel %vm2438, %v2363, 0
    %v2446 = vsel %vm2438, %v2365, 0
    %v2449 = vsel %vm2438, %v2367, 0
    %v2452 = vsel %vm2438, %v2369, 0
    %v2455 = vsel %vm2438, %v2371, 0
    %v2458 = vsel %vm2438, %v2373, 0
    %v2461 = vsel %vm2438, %v2375, 0
    %2463 = vmatpush.bf16.msra.mxu0 %v2427
    %2464 = vmatpush.bf16.msra.mxu0 %v2426
    %2465 = vmatpush.bf16.msra.mxu0 %v2425
    %2466 = vmatpush.bf16.msra.mxu0 %v2424
    %2467 = vmatpush.bf16.msra.mxu0 %v2423
    %2468 = vmatpush.bf16.msra.mxu0 %v2422
    %2469 = vmatpush.bf16.msra.mxu0 %v2421
    %2470 = vmatpush.bf16.msra.mxu0 %v2420
    %2471 = vmatmul.bf16.gmra.mxu0 %v2360
    %v2472 = vpop.f32.mrf.mxu0
    %v2473 = vadd.f32 0.0, %v2472
    %v2474 = vpop.f32.mrf.mxu0
    %v2475 = vadd.f32 0.0, %v2474
    %2476 = vmatmul.bf16.gmra.mxu0 %v2362
    %v2477 = vpop.f32.mrf.mxu0
    %v2478 = vadd.f32 0.0, %v2477
    %v2479 = vpop.f32.mrf.mxu0
    %v2480 = vadd.f32 0.0, %v2479
    %2481 = vmatmul.bf16.gmra.mxu0 %v2364
    %v2482 = vpop.f32.mrf.mxu0
    %v2483 = vadd.f32 0.0, %v2482
    %v2484 = vpop.f32.mrf.mxu0
    %v2485 = vadd.f32 0.0, %v2484
    %2486 = vmatmul.bf16.gmra.mxu0 %v2366
    %v2487 = vpop.f32.mrf.mxu0
    %v2488 = vadd.f32 0.0, %v2487
    %v2489 = vpop.f32.mrf.mxu0
    %v2490 = vadd.f32 0.0, %v2489
    %2491 = vmatmul.bf16.gmra.mxu0 %v2368
    %v2492 = vpop.f32.mrf.mxu0
    %v2493 = vadd.f32 0.0, %v2492
    %v2494 = vpop.f32.mrf.mxu0
    %v2495 = vadd.f32 0.0, %v2494
    %2496 = vmatmul.bf16.gmra.mxu0 %v2370
    %v2497 = vpop.f32.mrf.mxu0
    %v2498 = vadd.f32 0.0, %v2497
    %v2499 = vpop.f32.mrf.mxu0
    %v2500 = vadd.f32 0.0, %v2499
    %2501 = vmatmul.bf16.gmra.mxu0 %v2372
    %v2502 = vpop.f32.mrf.mxu0
    %v2503 = vadd.f32 0.0, %v2502
    %v2504 = vpop.f32.mrf.mxu0
    %v2505 = vadd.f32 0.0, %v2504
    %2506 = vmatmul.bf16.gmra.mxu0 %v2374
    %v2507 = vpop.f32.mrf.mxu0
    %v2508 = vadd.f32 0.0, %v2507
    %v2509 = vpop.f32.mrf.mxu0
    %v2510 = vadd.f32 0.0, %v2509
    %2511 = vdwg.mxu0
    %2512 = vmatpush.bf16.msra.mxu0 0
    %2513 = vmatpush.bf16.msra.mxu0 0
    %2514 = vmatpush.bf16.msra.mxu0 0
    %2515 = vmatpush.bf16.msra.mxu0 0
    %2516 = vmatpush.bf16.msra.mxu0 0
    %2517 = vmatpush.bf16.msra.mxu0 0
    %2518 = vmatpush.bf16.msra.mxu0 0
    %2519 = vmatpush.bf16.msra.mxu0 %v2428
    %2520 = vmatmul.bf16.gmra.mxu0 %v2440
    %v2521 = vpop.f32.mrf.mxu0
    %v2522 = vadd.f32 %v2473, %v2521
    %v2523 = vpop.f32.mrf.mxu0
    %v2524 = vadd.f32 %v2475, %v2523
    %2525 = vmatmul.bf16.gmra.mxu0 %v2443
    %v2526 = vpop.f32.mrf.mxu0
    %v2527 = vadd.f32 %v2478, %v2526
    %v2528 = vpop.f32.mrf.mxu0
    %v2529 = vadd.f32 %v2480, %v2528
    %2530 = vmatmul.bf16.gmra.mxu0 %v2446
    %v2531 = vpop.f32.mrf.mxu0
    %v2532 = vadd.f32 %v2483, %v2531
    %v2533 = vpop.f32.mrf.mxu0
    %v2534 = vadd.f32 %v2485, %v2533
    %2535 = vmatmul.bf16.gmra.mxu0 %v2449
    %v2536 = vpop.f32.mrf.mxu0
    %v2537 = vadd.f32 %v2488, %v2536
    %v2538 = vpop.f32.mrf.mxu0
    %v2539 = vadd.f32 %v2490, %v2538
    %2540 = vmatmul.bf16.gmra.mxu0 %v2452
    %v2541 = vpop.f32.mrf.mxu0
    %v2542 = vadd.f32 %v2493, %v2541
    %v2543 = vpop.f32.mrf.mxu0
    %v2544 = vadd.f32 %v2495, %v2543
    %2545 = vmatmul.bf16.gmra.mxu0 %v2455
    %v2546 = vpop.f32.mrf.mxu0
    %v2547 = vadd.f32 %v2498, %v2546
    %v2548 = vpop.f32.mrf.mxu0
    %v2549 = vadd.f32 %v2500, %v2548
    %2550 = vmatmul.bf16.gmra.mxu0 %v2458
    %v2551 = vpop.f32.mrf.mxu0
    %v2552 = vadd.f32 %v2503, %v2551
    %v2553 = vpop.f32.mrf.mxu0
    %v2554 = vadd.f32 %v2505, %v2553
    %2555 = vmatmul.bf16.gmra.mxu0 %v2461
    %v2556 = vpop.f32.mrf.mxu0
    %v2557 = vadd.f32 %v2508, %v2556
    %v2558 = vpop.f32.mrf.mxu0
    %v2559 = vadd.f32 %v2510, %v2558
    %2560 = vdwg.mxu0
    %v2561 = vpack.c.bf16 %v2522, %v2522
    %v2562 = vpack.c.bf16 %v2524, %v2524
    %v2563 = vpack.c.bf16 %v2527, %v2527
    %v2564 = vpack.c.bf16 %v2529, %v2529
    %v2565 = vpack.c.bf16 %v2532, %v2532
    %v2566 = vpack.c.bf16 %v2534, %v2534
    %v2567 = vpack.c.bf16 %v2537, %v2537
    %v2568 = vpack.c.bf16 %v2539, %v2539
    %v2569 = vpack.c.bf16 %v2542, %v2542
    %v2570 = vpack.c.bf16 %v2544, %v2544
    %v2571 = vpack.c.bf16 %v2547, %v2547
    %v2572 = vpack.c.bf16 %v2549, %v2549
    %v2573 = vpack.c.bf16 %v2552, %v2552
    %v2574 = vpack.c.bf16 %v2554, %v2554
    %v2575 = vpack.c.bf16 %v2557, %v2557
    %v2576 = vpack.c.bf16 %v2559, %v2559
    %2577 = vst.msk [vmem:[%s4] sm:$0xf] %vm37, %v2561
    %2578 = vst.msk [vmem:[%s4 + $0x4] sm:$0xf] %vm37, %v2562
    %2579 = vst.msk [vmem:[%s4 + $0x8] sm:$0xf] %vm37, %v2563
    %2580 = vst.msk [vmem:[%s4 + $0xc] sm:$0xf] %vm37, %v2564
    %2581 = vst.msk [vmem:[%s4 + $0x10] sm:$0xf] %vm37, %v2565
    %2582 = vst.msk [vmem:[%s4 + $0x14] sm:$0xf] %vm37, %v2566
    %2583 = vst.msk [vmem:[%s4 + $0x18] sm:$0xf] %vm37, %v2567
    %2584 = vst.msk [vmem:[%s4 + $0x1c] sm:$0xf] %vm37, %v2568
    %2585 = vst.msk [vmem:[%s4 + $0x20] sm:$0xf] %vm37, %v2569
    %2586 = vst.msk [vmem:[%s4 + $0x24] sm:$0xf] %vm37, %v2570
    %2587 = vst.msk [vmem:[%s4 + $0x28] sm:$0xf] %vm37, %v2571
    %2588 = vst.msk [vmem:[%s4 + $0x2c] sm:$0xf] %vm37, %v2572
    %2589 = vst.msk [vmem:[%s4 + $0x30] sm:$0xf] %vm37, %v2573
    %2590 = vst.msk [vmem:[%s4 + $0x34] sm:$0xf] %vm37, %v2574
    %2591 = vst.msk [vmem:[%s4 + $0x38] sm:$0xf] %vm37, %v2575
    %2592 = vst.msk [vmem:[%s4 + $0x3c] sm:$0xf] %vm37, %v2576
    %v2593 = vsel %vm2438, %v2522, 0.0
    %v2594 = vsel %vm2438, %v2524, 0.0
    %v2595 = vadd.f32 %v2593, %v2594
    %v2596 = vsel %vm2438, %v2527, 0.0
    %v2597 = vadd.f32 %v2595, %v2596
    %v2598 = vsel %vm2438, %v2529, 0.0
    %v2599 = vadd.f32 %v2597, %v2598
    %v2600 = vsel %vm2438, %v2532, 0.0
    %v2601 = vadd.f32 %v2599, %v2600
    %v2602 = vsel %vm2438, %v2534, 0.0
    %v2603 = vadd.f32 %v2601, %v2602
    %v2604 = vsel %vm2438, %v2537, 0.0
    %v2605 = vadd.f32 %v2603, %v2604
    %v2606 = vsel %vm2438, %v2539, 0.0
    %v2607 = vadd.f32 %v2605, %v2606
    %v2608 = vsel %vm2438, %v2542, 0.0
    %v2609 = vadd.f32 %v2607, %v2608
    %v2610 = vsel %vm2438, %v2544, 0.0
    %v2611 = vadd.f32 %v2609, %v2610
    %v2612 = vsel %vm2438, %v2547, 0.0
    %v2613 = vadd.f32 %v2611, %v2612
    %v2614 = vsel %vm2438, %v2549, 0.0
    %v2615 = vadd.f32 %v2613, %v2614
    %v2616 = vsel %vm2438, %v2552, 0.0
    %v2617 = vadd.f32 %v2615, %v2616
    %v2618 = vsel %vm2438, %v2554, 0.0
    %v2619 = vadd.f32 %v2617, %v2618
    %v2620 = vsel %vm2438, %v2557, 0.0
    %v2621 = vadd.f32 %v2619, %v2620
    %v2622 = vsel %vm2438, %v2559, 0.0
    %v2623 = vadd.f32 %v2621, %v2622
    %v2624 = vrot.slane %v2623, 4
    %v2625 = vadd.f32 %v2623, %v2624
    %v2626 = vrot.slane %v2625, 2
    %v2627 = vadd.f32 %v2625, %v2626
    %v2628 = vrot.slane %v2627, 1
    %v2629 = vadd.f32 %v2627, %v2628
    %2630 = vst.msk [vmem:[%s5] sm:$0x1] %vm39, %v2629
    %v2631 = vmul.f32 %v2522, %v2522
    %v2632 = vmul.f32 %v2524, %v2524
    %v2633 = vmul.f32 %v2527, %v2527
    %v2634 = vmul.f32 %v2529, %v2529
    %v2635 = vmul.f32 %v2532, %v2532
    %v2636 = vmul.f32 %v2534, %v2534
    %v2637 = vmul.f32 %v2537, %v2537
    %v2638 = vmul.f32 %v2539, %v2539
    %v2639 = vmul.f32 %v2542, %v2542
    %v2640 = vmul.f32 %v2544, %v2544
    %v2641 = vmul.f32 %v2547, %v2547
    %v2642 = vmul.f32 %v2549, %v2549
    %v2643 = vmul.f32 %v2552, %v2552
    %v2644 = vmul.f32 %v2554, %v2554
    %v2645 = vmul.f32 %v2557, %v2557
    %v2646 = vmul.f32 %v2559, %v2559
    %v2647 = vsel %vm2438, %v2631, 0.0
    %v2648 = vsel %vm2438, %v2632, 0.0
    %v2649 = vadd.f32 %v2647, %v2648
    %v2650 = vsel %vm2438, %v2633, 0.0
    %v2651 = vadd.f32 %v2649, %v2650
    %v2652 = vsel %vm2438, %v2634, 0.0
    %v2653 = vadd.f32 %v2651, %v2652
    %v2654 = vsel %vm2438, %v2635, 0.0
    %v2655 = vadd.f32 %v2653, %v2654
    %v2656 = vsel %vm2438, %v2636, 0.0
    %v2657 = vadd.f32 %v2655, %v2656
    %v2658 = vsel %vm2438, %v2637, 0.0
    %v2659 = vadd.f32 %v2657, %v2658
    %v2660 = vsel %vm2438, %v2638, 0.0
    %v2661 = vadd.f32 %v2659, %v2660
    %v2662 = vsel %vm2438, %v2639, 0.0
    %v2663 = vadd.f32 %v2661, %v2662
    %v2664 = vsel %vm2438, %v2640, 0.0
    %v2665 = vadd.f32 %v2663, %v2664
    %v2666 = vsel %vm2438, %v2641, 0.0
    %v2667 = vadd.f32 %v2665, %v2666
    %v2668 = vsel %vm2438, %v2642, 0.0
    %v2669 = vadd.f32 %v2667, %v2668
    %v2670 = vsel %vm2438, %v2643, 0.0
    %v2671 = vadd.f32 %v2669, %v2670
    %v2672 = vsel %vm2438, %v2644, 0.0
    %v2673 = vadd.f32 %v2671, %v2672
    %v2674 = vsel %vm2438, %v2645, 0.0
    %v2675 = vadd.f32 %v2673, %v2674
    %v2676 = vsel %vm2438, %v2646, 0.0
    %v2677 = vadd.f32 %v2675, %v2676
    %v2678 = vrot.slane %v2677, 4
    %v2679 = vadd.f32 %v2677, %v2678
    %v2680 = vrot.slane %v2679, 2
    %v2681 = vadd.f32 %v2679, %v2680
    %v2682 = vrot.slane %v2681, 1
    %v2683 = vadd.f32 %v2681, %v2682
    %2684 = vst.msk [vmem:[%s6] sm:$0x1] %vm39, %v2683
    // Predicated region
    $region22: #{_lambda_.9} parent=1 // pred_check
      _
    $region23: #{_lambda_.9} parent=1 // pred_check_branch
      %2686 = sbr.rel (0) target = $region25
    $region24: #{_lambda_.9} parent=1 // pred_region
      _
    $region25: #{_lambda_.9} parent=1 // pred_fallthru
      _
    // Predicated region
    $region26: #{_lambda_.9} parent=1 // pred_check
      _
    $region27: #{_lambda_.9} parent=1 // pred_check_branch
      %2688 = sbr.rel (0) target = $region29
    $region28: #{_lambda_.9} parent=1 // pred_region
      _
    $region29: #{_lambda_.9} parent=1 // pred_fallthru
      _
    // Predicated region
    $region30: #{_lambda_.9} parent=1 // pred_check
      _
    $region31: #{_lambda_.9} parent=1 // pred_check_branch
      %2690 = sbr.rel (0) target = $region33
    $region32: #{_lambda_.9} parent=1 // pred_region
      _
    $region33: #{_lambda_.9} parent=1 // pred_fallthru
      _
    // Predicated region
    $region34: #{_lambda_.9} parent=1 // pred_check
      _
    $region35: #{_lambda_.9} parent=1 // pred_check_branch
      %2692 = sbr.rel (0) target = $region37
    $region36: #{_lambda_.9} parent=1 // pred_region
      _
    $region37: #{_lambda_.9} parent=1 // pred_fallthru
      _
    // Predicated region
    $region38: #{_lambda_.9} parent=1 // pred_check
      _
    $region39: #{_lambda_.9} parent=1 // pred_check_branch
      %2694 = sbr.rel (0) target = $region41
    $region40: #{_lambda_.9} parent=1 // pred_region
      _
    $region41: #{_lambda_.9} parent=1 // pred_fallthru
      _
    // Predicated region
    $region42: #{_lambda_.9} parent=1 // pred_check
      _
    $region43: #{_lambda_.9} parent=1 // pred_check_branch
      %2696 = sbr.rel (0) target = $region45
    $region44: #{_lambda_.9} parent=1 // pred_region
      _
    $region45: #{_lambda_.9} parent=1 // pred_fallthru
      _
    %2697 = vsyncpa [#allocation5], 1

</llo_original>
